<compile_context>
chip_gen: v7x
topology: tpu7x:2x2x1
jax: 0.10.0
libtpu: 0.0.40
codegen_flags: <defaults>
</compile_context>

<pallas_src>
import numpy as np

import jax
import jax.numpy as jnp
from jax.experimental import pallas as pl
from jax.experimental.pallas import tpu as pltpu

T_CHUNK = 8  # recurrence chunk along T (small: chunk loop is fully unrolled)


def _round_up(x, m):
    return ((x + m - 1) // m) * m


def _vmem_capacity_bytes():
    try:
        info = pltpu.get_tpu_info()
        for name in ("vmem_capacity_bytes", "vmem_size_bytes", "vmem_bytes"):
            cap = getattr(info, name, None)
            if cap:
                return int(cap)
    except Exception:
        pass
    return 64 * 1024 * 1024  # conservative fallback (v7x per-core VMEM)


_VMEM_CAP = _vmem_capacity_bytes()
# ~40 MiB scoped on v7x (64 MiB phys), ~80 MiB on v5e/v6e (128 MiB phys).
VMEM_LIMIT = int(min(_VMEM_CAP * 5 // 8, 96 * 1024 * 1024))


def _compiler_params(dim_sem):
    return pltpu.CompilerParams(dimension_semantics=dim_sem,
                                vmem_limit_bytes=VMEM_LIMIT)


def _const_spec(shape):
    zeros = (0,) * len(shape)
    return pl.BlockSpec(shape, lambda i: zeros)


def _pick_row_block(rows, bytes_per_row, resident_bytes, cap=512):
    """Largest row block whose double-buffered tiles fit the VMEM budget,
    rounded to sublanes, and small enough that the grid has >=2 blocks."""
    budget = int(VMEM_LIMIT * 0.6)
    avail = max(budget - resident_bytes, 16 * bytes_per_row)
    rb = max(8, (avail // (2 * max(bytes_per_row, 1))) // 8 * 8)
    rb = min(rb, cap)
    rows8 = _round_up(rows, 8)
    if rows8 > 8:                       # leave work for both v7x TensorCores
        rb = min(rb, _round_up((rows8 + 1) // 2, 8))
    return max(8, min(rb, rows8))


# ----------------------------------------------------------------------------
# Fused child/sibling GRU chunk (shared by encoder / decoder kernels).
# gi_ref holds the already edge-selected input projection (b_ih folded in);
# each step is one (D,H)@(H,6H) bf16 matmul (f32 acc) + gate math in f32.
# ----------------------------------------------------------------------------
def _tree_gru_chunk(gi_ref, e_chunk, h, whh, bhh_c, bhh_s, H,
                    t_base, t_valid, out_ref=None):
    Tc = gi_ref.shape[0]
    for t in range(Tc):                                  # fully unrolled
        gi = gi_ref[t].astype(jnp.float32)               # (D, 3H)
        child = e_chunk[:, t:t + 1] > 0.5                # (D, 1) static lane slice
        gh = jnp.dot(h.astype(jnp.bfloat16), whh,
                     preferred_element_type=jnp.float32)  # (D, 6H)
        gh_sel = (jnp.where(child, gh[:, :3 * H], gh[:, 3 * H:])
                  + jnp.where(child, bhh_c, bhh_s))       # (D, 3H)
        r = jax.nn.sigmoid(gi[:, :H] + gh_sel[:, :H])
        zg = jax.nn.sigmoid(gi[:, H:2 * H] + gh_sel[:, H:2 * H])
        n = jnp.tanh(gi[:, 2 * H:] + r * gh_sel[:, 2 * H:])
        h_new = (1.0 - zg) * n + zg * h
        if t_valid is not None:                           # mask T-padding steps
            h_new = jnp.where(t_base + t < t_valid, h_new, h)
        if out_ref is not None:
            out_ref[t] = h_new.astype(out_ref.dtype)
        h = h_new
    return h


# ----------------------------------------------------------------------------
# Encoder TreeRNN (T-chunked) + fused latent head on the last chunk.
# (curr_out / curr_state in the PyTorch TreeRNN.forward are dead code.)
# ----------------------------------------------------------------------------
def _make_encoder_kernel(T, Tc, D, H, L):
    t_valid = None if T % Tc == 0 else T

    def kernel(gi_ref, edge_ref, init_ref, whh_ref, bhh_ref,
               wml_ref, bml_ref, wl2h_ref, bl2h_ref, eps_ref,
               mean_ref, logv_ref, z_ref, dec_ref, h_scr):
        step = pl.program_id(0)

        @pl.when(step == 0)
        def _():
            h_scr[...] = init_ref[...]

        whh = whh_ref[...]                                    # (H, 6H) bf16
        bhh = bhh_ref[...]                                    # (1, 6H) f32
        bhh_c = jnp.broadcast_to(bhh[:, :3 * H], (D, 3 * H))  # hoisted broadcasts
        bhh_s = jnp.broadcast_to(bhh[:, 3 * H:], (D, 3 * H))
        e_chunk = edge_ref[0]                                 # (D, Tc) f32

        h = _tree_gru_chunk(gi_ref, e_chunk, h_scr[...], whh, bhh_c, bhh_s,
                            H, step * Tc, t_valid)
        h_scr[...] = h

        # Latent head (hidden2mean/hidden2logv/reparam/latent2hidden), fused.
        @pl.when(step == pl.num_programs(0) - 1)
        def _():
            ml = jnp.dot(h.astype(jnp.bfloat16), wml_ref[...],
                         preferred_element_type=jnp.float32) + bml_ref[...]
            mean = ml[:, :L]
            logv = ml[:, L:]
            std = jnp.exp(0.5 * logv)
            z = eps_ref[...] * std + mean
            dec = jnp.dot(z.astype(jnp.bfloat16), wl2h_ref[...],
                          preferred_element_type=jnp.float32) + bl2h_ref[...]
            mean_ref[...] = mean
            logv_ref[...] = logv
            z_ref[...] = z
            dec_ref[...] = dec

    return kernel


def encoder_latent(gi_enc, edges_cd, enc_init, eps, packed, T, Tc):
    Tp, D, _ = gi_enc.shape
    H = enc_init.shape[-1]
    L = eps.shape[-1]
    return pl.pallas_call(
        _make_encoder_kernel(T, Tc, D, H, L),
        grid=(Tp // Tc,),
        in_specs=[
            pl.BlockSpec((Tc, D, 3 * H), lambda i: (i, 0, 0)),   # gi chunk (bf16)
            pl.BlockSpec((1, D, Tc), lambda i: (i, 0, 0)),       # edges chunk
            _const_spec((D, H)),                                 # initial state
            _const_spec((H, 6 * H)), _const_spec((1, 6 * H)),    # W_hh, b_hh
            _const_spec((H, 2 * L)), _const_spec((1, 2 * L)),    # mean|logv head
            _const_spec((L, H)), _const_spec((1, H)),            # latent2hidden
            _const_spec((D, L)),                                 # eps
        ],
        out_specs=(_const_spec((D, L)), _const_spec((D, L)),
                   _const_spec((D, L)), _const_spec((D, H))),
        out_shape=(jax.ShapeDtypeStruct((D, L), jnp.float32),    # mean
                   jax.ShapeDtypeStruct((D, L), jnp.float32),    # logv
                   jax.ShapeDtypeStruct((D, L), jnp.float32),    # z
                   jax.ShapeDtypeStruct((D, H), jnp.float32)),   # decoder init
        scratch_shapes=[pltpu.VMEM((D, H), jnp.float32)],        # carried h
        compiler_params=_compiler_params(("arbitrary",)),
    )(gi_enc, edges_cd, enc_init, packed["enc_whh"], packed["enc_bhh"],
      packed["w_ml"], packed["b_ml"], packed["w_l2h"], packed["b_l2h"], eps)


# ----------------------------------------------------------------------------
# Decoder TreeRNN (T-chunked), per-step outputs written in bf16.
# ----------------------------------------------------------------------------
def _make_decoder_kernel(T, Tc, D, H):
    t_valid = None if T % Tc == 0 else T

    def kernel(gi_ref, edge_ref, init_ref, whh_ref, bhh_ref, out_ref, h_scr):
        step = pl.program_id(0)

        @pl.when(step == 0)
        def _():
            h_scr[...] = init_ref[...]

        whh = whh_ref[...]
        bhh = bhh_ref[...]
        bhh_c = jnp.broadcast_to(bhh[:, :3 * H], (D, 3 * H))
        bhh_s = jnp.broadcast_to(bhh[:, 3 * H:], (D, 3 * H))
        e_chunk = edge_ref[0]

        h_scr[...] = _tree_gru_chunk(gi_ref, e_chunk, h_scr[...], whh,
                                     bhh_c, bhh_s, H, step * Tc, t_valid,
                                     out_ref=out_ref)

    return kernel


def decoder_rnn(gi_dec, edges_cd, dec_init, packed, T, Tc):
    Tp, D, _ = gi_dec.shape
    H = dec_init.shape[-1]
    return pl.pallas_call(
        _make_decoder_kernel(T, Tc, D, H),
        grid=(Tp // Tc,),
        in_specs=[
            pl.BlockSpec((Tc, D, 3 * H), lambda i: (i, 0, 0)),
            pl.BlockSpec((1, D, Tc), lambda i: (i, 0, 0)),
            _const_spec((D, H)),
            _const_spec((H, 6 * H)), _const_spec((1, 6 * H)),
        ],
        out_specs=pl.BlockSpec((Tc, D, H), lambda i: (i, 0, 0)),
        # bf16 outputs: halves HBM writeback and the subsequent vocab read.
        out_shape=jax.ShapeDtypeStruct((Tp, D, H), jnp.bfloat16),
        scratch_shapes=[pltpu.VMEM((D, H), jnp.float32)],
        compiler_params=_compiler_params(("arbitrary",)),
    )(gi_dec, edges_cd, dec_init, packed["dec_whh"], packed["dec_bhh"])


# ----------------------------------------------------------------------------
# Row-blocked dense projection:  (R,U)@(U,C) + b  ->  bf16, "parallel" grid.
# ----------------------------------------------------------------------------
def _dense_bias_kernel(x_ref, w_ref, b_ref, o_ref):
    acc = jnp.dot(x_ref[...].astype(jnp.bfloat16), w_ref[...],
                  preferred_element_type=jnp.float32) + b_ref[...]
    o_ref[...] = acc.astype(o_ref.dtype)


def project_rows(x, w, b, out_dtype=jnp.bfloat16):
    R, U = x.shape
    C = w.shape[-1]
    bytes_per_row = U * np.dtype(x.dtype).itemsize + C * np.dtype(out_dtype).itemsize
    resident = U * C * np.dtype(w.dtype).itemsize + C * np.dtype(b.dtype).itemsize
    rb = _pick_row_block(R, bytes_per_row, resident)
    Rp = _round_up(R, rb)
    if Rp != R:
        x = jnp.pad(x, ((0, Rp - R), (0, 0)))
    out = pl.pallas_call(
        _dense_bias_kernel,
        grid=(Rp // rb,),
        in_specs=[pl.BlockSpec((rb, U), lambda i: (i, 0)),
                  pl.BlockSpec((U, C), lambda i: (0, 0)),
                  pl.BlockSpec((1, C), lambda i: (0, 0))],
        out_specs=pl.BlockSpec((rb, C), lambda i: (i, 0)),
        out_shape=jax.ShapeDtypeStruct((Rp, C), out_dtype),
        compiler_params=_compiler_params(("parallel",)),
    )(x, w, b)
    return out[:R]


# ----------------------------------------------------------------------------
# outputs2vocab + log_softmax over flattened (T*D, H) rows, row-blocked.
# ----------------------------------------------------------------------------
def _vocab_kernel(x_ref, w_ref, b_ref, o_ref):
    logits = jnp.dot(x_ref[...].astype(jnp.bfloat16), w_ref[...],
                     preferred_element_type=jnp.float32) + b_ref[...]
    m = jnp.max(logits, axis=-1, keepdims=True)
    lse = m + jnp.log(jnp.sum(jnp.exp(logits - m), axis=-1, keepdims=True))
    o_ref[...] = (logits - lse).astype(o_ref.dtype)


def vocab_logp(x2d, w_v, b_v, out_dtype=jnp.float32):
    R, H = x2d.shape
    V = w_v.shape[-1]
    bytes_per_row = H * np.dtype(x2d.dtype).itemsize + V * np.dtype(out_dtype).itemsize
    resident = H * V * np.dtype(w_v.dtype).itemsize + V * np.dtype(b_v.dtype).itemsize
    rb = _pick_row_block(R, bytes_per_row, resident)
    Rp = _round_up(R, rb)
    if Rp != R:
        x2d = jnp.pad(x2d, ((0, Rp - R), (0, 0)))
    out = pl.pallas_call(
        _vocab_kernel,
        grid=(Rp // rb,),
        in_specs=[pl.BlockSpec((rb, H), lambda i: (i, 0)),
                  pl.BlockSpec((H, V), lambda i: (0, 0)),
                  pl.BlockSpec((1, V), lambda i: (0, 0))],
        out_specs=pl.BlockSpec((rb, V), lambda i: (i, 0)),
        out_shape=jax.ShapeDtypeStruct((Rp, V), out_dtype),
        compiler_params=_compiler_params(("parallel",)),
    )(x2d, w_v, b_v)
    return out[:R]


# ----------------------------------------------------------------------------
# Parameter init (deterministic, synthetic) and weight packing.
# ----------------------------------------------------------------------------
def init_params(key, vocab_size, units, hidden, latent):
    ks = list(jax.random.split(key, 32))
    k = iter(ks)

    def dense(kk, shape, scale):
        return (scale * jax.random.normal(kk, shape)).astype(jnp.float32)

    def gru_weights(scale=0.2):
        return {
            "wih_c": dense(next(k), (units, 3 * hidden), scale),
            "whh_c": dense(next(k), (hidden, 3 * hidden), scale),
            "bih_c": dense(next(k), (1, 3 * hidden), scale),
            "bhh_c": dense(next(k), (1, 3 * hidden), scale),
            "wih_s": dense(next(k), (units, 3 * hidden), scale),
            "whh_s": dense(next(k), (hidden, 3 * hidden), scale),
            "bih_s": dense(next(k), (1, 3 * hidden), scale),
            "bhh_s": dense(next(k), (1, 3 * hidden), scale),
        }

    return {
        "embedding": dense(next(k), (vocab_size, units), 0.5),
        "encoder": gru_weights(),
        "decoder": gru_weights(),
        "latent": {
            "w_mean": dense(next(k), (hidden, latent), 0.2),
            "b_mean": dense(next(k), (1, latent), 0.1),
            "w_logv": dense(next(k), (hidden, latent), 0.2),
            "b_logv": dense(next(k), (1, latent), 0.1),
            "w_l2h":  dense(next(k), (latent, hidden), 0.2),
            "b_l2h":  dense(next(k), (1, hidden), 0.1),
        },
        "w_vocab": dense(next(k), (hidden, vocab_size), 0.2),
        "b_vocab": dense(next(k), (1, vocab_size), 0.1),
    }


def pack_params(p):
    """Fuse child/sibling + encoder/decoder weights; bf16 for large matrices."""
    def fuse_hh(g):
        return (jnp.concatenate([g["whh_c"], g["whh_s"]], axis=1).astype(jnp.bfloat16),
                jnp.concatenate([g["bhh_c"], g["bhh_s"]], axis=1))

    enc_whh, enc_bhh = fuse_hh(p["encoder"])
    dec_whh, dec_bhh = fuse_hh(p["decoder"])
    w_ih_all = jnp.concatenate(
        [p["encoder"]["wih_c"], p["encoder"]["wih_s"],
         p["decoder"]["wih_c"], p["decoder"]["wih_s"]], axis=1)          # (U, 12H)
    b_ih_all = jnp.concatenate(
        [p["encoder"]["bih_c"], p["encoder"]["bih_s"],
         p["decoder"]["bih_c"], p["decoder"]["bih_s"]], axis=1)          # (1, 12H)
    lat = p["latent"]
    return {
        "embedding": p["embedding"],
        "w_ih_all": w_ih_all.astype(jnp.bfloat16),
        "b_ih_all": b_ih_all,
        "enc_whh": enc_whh, "enc_bhh": enc_bhh,
        "dec_whh": dec_whh, "dec_bhh": dec_bhh,
        "w_ml": jnp.concatenate([lat["w_mean"], lat["w_logv"]], axis=1).astype(jnp.bfloat16),
        "b_ml": jnp.concatenate([lat["b_mean"], lat["b_logv"]], axis=1),
        "w_l2h": lat["w_l2h"].astype(jnp.bfloat16), "b_l2h": lat["b_l2h"],
        "w_vocab": p["w_vocab"].astype(jnp.bfloat16), "b_vocab": p["b_vocab"],
    }


# ----------------------------------------------------------------------------
# Full VRNN forward
# ----------------------------------------------------------------------------
@jax.jit
def vrnn_forward(packed, nodes, edges, noise_key):
    """nodes: (T, D) int32, edges: (T, D) bool.  Returns (logp, mean, logv, z)."""
    T, D = nodes.shape
    H = packed["enc_whh"].shape[0]
    V = packed["w_vocab"].shape[-1]
    L = packed["w_ml"].shape[-1] // 2

    # Fused per-token input projection -> bf16.  With few tokens, project the
    # gathered embeddings directly instead of a full (V, 12H) table.
    if T * D < V:
        x = jnp.take(packed["embedding"], nodes.reshape(-1), axis=0)         # (T*D, U)
        gi_all = project_rows(x, packed["w_ih_all"],
                              packed["b_ih_all"]).reshape(T, D, 12 * H)
    else:
        table = project_rows(packed["embedding"], packed["w_ih_all"],
                             packed["b_ih_all"])                             # (V, 12H)
        gi_all = jnp.take(table, nodes, axis=0)                              # (T, D, 12H)

    # Edge-select child vs sibling gi once, outside the serial recurrence.
    e3 = edges[:, :, None]
    gi_enc = jnp.where(e3, gi_all[..., 0 * H:3 * H], gi_all[..., 3 * H:6 * H])   # (T,D,3H) bf16
    gi_dec = jnp.where(e3, gi_all[..., 6 * H:9 * H], gi_all[..., 9 * H:12 * H])  # (T,D,3H) bf16
    edges_f = edges.astype(jnp.float32)                                          # (T, D)

    # Pad T to a chunk multiple (padded steps are masked inside the kernels),
    # and reshape edges to (n_chunks, D, Tc) so per-step masks are lane slices.
    Tc = T_CHUNK
    Tp = _round_up(T, Tc)
    if Tp != T:
        gi_enc = jnp.pad(gi_enc, ((0, Tp - T), (0, 0), (0, 0)))
        gi_dec = jnp.pad(gi_dec, ((0, Tp - T), (0, 0), (0, 0)))
        edges_f = jnp.pad(edges_f, ((0, Tp - T), (0, 0)))
    edges_cd = jnp.transpose(edges_f.reshape(Tp // Tc, Tc, D), (0, 2, 1))        # (nC, D, Tc)

    k_enc, k_z = jax.random.split(noise_key)
    # enc_initial_state ~ N(0, 0.001), shape [num_layers=1, D, H] -> layer-0 slice
    enc_init = 0.001 * jax.random.normal(k_enc, (D, H), dtype=jnp.float32)
    eps = jax.random.normal(k_z, (D, L), dtype=jnp.float32)

    # Encoder TreeRNN + fused latent head -> mean, logv, z, decoder init state.
    mean, logv, z, dec_init = encoder_latent(gi_enc, edges_cd, enc_init, eps,
                                             packed, T, Tc)

    # Decoder TreeRNN (bf16 per-step outputs), driven by the same nodes/edges.
    dec_outputs = decoder_rnn(gi_dec, edges_cd, dec_init, packed, T, Tc)[:T]     # (T,D,H) bf16

    # outputs2vocab + log_softmax on flattened rows, reshaped back to (T, D, V).
    logp = vocab_logp(dec_outputs.reshape(T * D, H),
                      packed["w_vocab"], packed["b_vocab"]).reshape(T, D, V)
    return logp, mean, logv, z


if __name__ == "__main__":
    # Small config consistent with the module:
    #   T = node steps, D = max_ast_depth, U = H = decoder.units,
    #   V = vocab_size, L = latent_size, num_layers = 1.
    T, D, U, H, V, L = 4, 8, 32, 32, 64, 16
    assert U == H  # embedding_size == hidden_size in VRNN.__init__

    root = jax.random.PRNGKey(0)
    k_params, k_nodes, k_edges, k_noise = jax.random.split(root, 4)

    raw_params = init_params(k_params, vocab_size=V, units=U, hidden=H, latent=L)
    packed = pack_params(raw_params)

    nodes = jax.random.randint(k_nodes, (T, D), 0, V, dtype=jnp.int32)
    edges = jax.random.bernoulli(k_edges, 0.5, (T, D))

    logp, mean, logv, z = vrnn_forward(packed, nodes, edges, k_noise)
    jax.block_until_ready((logp, mean, logv, z))

    assert logp.shape == (T, D, V)
    assert mean.shape == (D, L) and logv.shape == (D, L) and z.shape == (D, L)
    assert bool(jnp.all(jnp.isfinite(logp)))
    # log_softmax rows must sum to ~1 in prob space
    assert bool(jnp.allclose(jnp.sum(jnp.exp(logp), axis=-1), 1.0, atol=1e-4))

    print("KERNEL_OK")
</pallas_src>

<mosaic_0001>
module attributes {stable_mosaic.version = 11 : i64} {
  func.func @_dense_bias_kernel(%arg0: i32, %arg1: memref<16x32xf32, #tpu.memory_space<vmem>>, %arg2: memref<32x384xbf16, #tpu.memory_space<vmem>>, %arg3: memref<1x384xf32, #tpu.memory_space<vmem>>, %arg4: memref<16x384xbf16, #tpu.memory_space<vmem>>) attributes {dimension_semantics = [#tpu.dimension_semantics<parallel>], iteration_bounds = array<i64: 2>, scalar_prefetch = 0 : i64, scratch_operands = 0 : i64, tpu.core_type = #tpu.core_type<tc>, window_params = [{transform_indices = @transform_0, window_bounds = array<i64: 16, 32>}, {pipeline_mode = #tpu.pipeline_mode<synchronous>, transform_indices = @transform_1, window_bounds = array<i64: 32, 384>}, {pipeline_mode = #tpu.pipeline_mode<synchronous>, transform_indices = @transform_2, window_bounds = array<i64: 1, 384>}, {transform_indices = @transform_3, window_bounds = array<i64: 16, 384>}]} {
    %c0 = arith.constant 0 : index
    %c0_0 = arith.constant 0 : index
    %0 = vector.load %arg1[%c0, %c0_0] : memref<16x32xf32, #tpu.memory_space<vmem>>, vector<16x32xf32>
    %1 = arith.truncf %0 : vector<16x32xf32> to vector<16x32xbf16>
    %c0_1 = arith.constant 0 : index
    %c0_2 = arith.constant 0 : index
    %2 = vector.load %arg2[%c0_1, %c0_2] : memref<32x384xbf16, #tpu.memory_space<vmem>>, vector<32x384xbf16>
    %cst = arith.constant dense<0.000000e+00> : vector<16x384xf32>
    %3 = tpu.matmul %1, %2, %cst {dimension_numbers = #tpu.dot_dimension_numbers<[1], [0], [0], [1], [0, 0, 1, 1], [], []>} : vector<16x32xbf16>, vector<32x384xbf16>, vector<16x384xf32> -> vector<16x384xf32>
    %c0_3 = arith.constant 0 : index
    %c0_4 = arith.constant 0 : index
    %4 = vector.load %arg3[%c0_3, %c0_4] : memref<1x384xf32, #tpu.memory_space<vmem>>, vector<1x384xf32>
    %5 = vector.broadcast %4 : vector<1x384xf32> to vector<16x384xf32>
    %6 = arith.addf %3, %5 : vector<16x384xf32>
    %7 = arith.truncf %6 : vector<16x384xf32> to vector<16x384xbf16>
    %c0_5 = arith.constant 0 : index
    %c0_6 = arith.constant 0 : index
    %8 = vector.load %arg4[%c0_5, %c0_6] : memref<16x384xbf16, #tpu.memory_space<vmem>>, vector<16x384xbf16>
    tpu.vector_store %arg4[%c0_5, %c0_6], %7 {strides = array<i32>} : memref<16x384xbf16, #tpu.memory_space<vmem>>, vector<16x384xbf16>,
    return
  }
  func.func @transform_0(%arg0: i32) -> (i32, i32) {
    %c0_i32 = arith.constant 0 : i32
    %c0_i32_0 = arith.constant 0 : i32
    return %arg0, %c0_i32 : i32, i32
  }
  func.func @transform_1(%arg0: i32) -> (i32, i32) {
    %c0_i32 = arith.constant 0 : i32
    %c0_i32_0 = arith.constant 0 : i32
    %c0_i32_1 = arith.constant 0 : i32
    return %c0_i32, %c0_i32_0 : i32, i32
  }
  func.func @transform_2(%arg0: i32) -> (i32, i32) {
    %c0_i32 = arith.constant 0 : i32
    %c0_i32_0 = arith.constant 0 : i32
    %c0_i32_1 = arith.constant 0 : i32
    return %c0_i32, %c0_i32_0 : i32, i32
  }
  func.func @transform_3(%arg0: i32) -> (i32, i32) {
    %c0_i32 = arith.constant 0 : i32
    %c0_i32_0 = arith.constant 0 : i32
    return %arg0, %c0_i32 : i32, i32
  }
}

module attributes {stable_mosaic.version = 11 : i64} {
  func.func @_vocab_kernel(%arg0: i32, %arg1: memref<16x32xbf16, #tpu.memory_space<vmem>>, %arg2: memref<32x64xbf16, #tpu.memory_space<vmem>>, %arg3: memref<1x64xf32, #tpu.memory_space<vmem>>, %arg4: memref<16x64xf32, #tpu.memory_space<vmem>>) attributes {dimension_semantics = [#tpu.dimension_semantics<parallel>], iteration_bounds = array<i64: 2>, scalar_prefetch = 0 : i64, scratch_operands = 0 : i64, tpu.core_type = #tpu.core_type<tc>, window_params = [{transform_indices = @transform_0, window_bounds = array<i64: 16, 32>}, {pipeline_mode = #tpu.pipeline_mode<synchronous>, transform_indices = @transform_1, window_bounds = array<i64: 32, 64>}, {pipeline_mode = #tpu.pipeline_mode<synchronous>, transform_indices = @transform_2, window_bounds = array<i64: 1, 64>}, {transform_indices = @transform_3, window_bounds = array<i64: 16, 64>}]} {
    %c0 = arith.constant 0 : index
    %c0_0 = arith.constant 0 : index
    %0 = vector.load %arg1[%c0, %c0_0] : memref<16x32xbf16, #tpu.memory_space<vmem>>, vector<16x32xbf16>
    %c0_1 = arith.constant 0 : index
    %c0_2 = arith.constant 0 : index
    %1 = vector.load %arg2[%c0_1, %c0_2] : memref<32x64xbf16, #tpu.memory_space<vmem>>, vector<32x64xbf16>
    %cst = arith.constant dense<0.000000e+00> : vector<16x64xf32>
    %2 = tpu.matmul %0, %1, %cst {dimension_numbers = #tpu.dot_dimension_numbers<[1], [0], [0], [1], [0, 0, 1, 1], [], []>} : vector<16x32xbf16>, vector<32x64xbf16>, vector<16x64xf32> -> vector<16x64xf32>
    %c0_3 = arith.constant 0 : index
    %c0_4 = arith.constant 0 : index
    %3 = vector.load %arg3[%c0_3, %c0_4] : memref<1x64xf32, #tpu.memory_space<vmem>>, vector<1x64xf32>
    %4 = vector.broadcast %3 : vector<1x64xf32> to vector<16x64xf32>
    %5 = arith.addf %2, %4 : vector<16x64xf32>
    %cst_5 = arith.constant dense<0xFF800000> : vector<16xf32>
    %6 = vector.multi_reduction <maximumf>, %5, %cst_5 [1] : vector<16x64xf32> to vector<16xf32>
    %7 = vector.shape_cast %6 : vector<16xf32> to vector<16x1xf32>
    %8 = vector.broadcast %7 : vector<16x1xf32> to vector<16x64xf32>
    %9 = arith.subf %5, %8 : vector<16x64xf32>
    %10 = math.exp %9 : vector<16x64xf32>
    %cst_6 = arith.constant dense<0.000000e+00> : vector<16xf32>
    %11 = vector.multi_reduction <add>, %10, %cst_6 [1] : vector<16x64xf32> to vector<16xf32>
    %12 = vector.shape_cast %11 : vector<16xf32> to vector<16x1xf32>
    %13 = math.log %12 : vector<16x1xf32>
    %14 = arith.addf %7, %13 : vector<16x1xf32>
    %15 = vector.broadcast %14 : vector<16x1xf32> to vector<16x64xf32>
    %16 = arith.subf %5, %15 : vector<16x64xf32>
    %c0_7 = arith.constant 0 : index
    %c0_8 = arith.constant 0 : index
    %17 = vector.load %arg4[%c0_7, %c0_8] : memref<16x64xf32, #tpu.memory_space<vmem>>, vector<16x64xf32>
    tpu.vector_store %arg4[%c0_7, %c0_8], %16 {strides = array<i32>} : memref<16x64xf32, #tpu.memory_space<vmem>>, vector<16x64xf32>,
    return
  }
  func.func @transform_0(%arg0: i32) -> (i32, i32) {
    %c0_i32 = arith.constant 0 : i32
    %c0_i32_0 = arith.constant 0 : i32
    return %arg0, %c0_i32 : i32, i32
  }
  func.func @transform_1(%arg0: i32) -> (i32, i32) {
    %c0_i32 = arith.constant 0 : i32
    %c0_i32_0 = arith.constant 0 : i32
    %c0_i32_1 = arith.constant 0 : i32
    return %c0_i32, %c0_i32_0 : i32, i32
  }
  func.func @transform_2(%arg0: i32) -> (i32, i32) {
    %c0_i32 = arith.constant 0 : i32
    %c0_i32_0 = arith.constant 0 : i32
    %c0_i32_1 = arith.constant 0 : i32
    return %c0_i32, %c0_i32_0 : i32, i32
  }
  func.func @transform_3(%arg0: i32) -> (i32, i32) {
    %c0_i32 = arith.constant 0 : i32
    %c0_i32_0 = arith.constant 0 : i32
    return %arg0, %c0_i32 : i32, i32
  }
}

module attributes {stable_mosaic.version = 11 : i64} {
  func.func @kernel(%arg0: i32, %arg1: memref<8x8x96xbf16, #tpu.memory_space<vmem>>, %arg2: memref<1x8x8xf32, #tpu.memory_space<vmem>>, %arg3: memref<8x32xf32, #tpu.memory_space<vmem>>, %arg4: memref<32x192xbf16, #tpu.memory_space<vmem>>, %arg5: memref<1x192xf32, #tpu.memory_space<vmem>>, %arg6: memref<8x8x32xbf16, #tpu.memory_space<vmem>>, %arg7: memref<8x32xf32, #tpu.memory_space<vmem>>) attributes {dimension_semantics = [#tpu.dimension_semantics<arbitrary>], iteration_bounds = array<i64: 1>, scalar_prefetch = 0 : i64, scratch_operands = 1 : i64, tpu.core_type = #tpu.core_type<tc>, window_params = [{transform_indices = @transform_0, window_bounds = array<i64: 8, 8, 96>}, {transform_indices = @transform_1, window_bounds = array<i64: 1, 8, 8>}, {pipeline_mode = #tpu.pipeline_mode<synchronous>, transform_indices = @transform_2, window_bounds = array<i64: 8, 32>}, {pipeline_mode = #tpu.pipeline_mode<synchronous>, transform_indices = @transform_3, window_bounds = array<i64: 32, 192>}, {pipeline_mode = #tpu.pipeline_mode<synchronous>, transform_indices = @transform_4, window_bounds = array<i64: 1, 192>}, {transform_indices = @transform_5, window_bounds = array<i64: 8, 8, 32>}]} {
    %c0_i32 = arith.constant 0 : i32
    %0 = arith.cmpi eq, %arg0, %c0_i32 : i32
    %1 = arith.extui %0 : i1 to i32
    %c0_i32_0 = arith.constant 0 : i32
    %2 = arith.cmpi ne, %1, %c0_i32_0 : i32
    scf.if %2 {
      %c0_100 = arith.constant 0 : index
      %c0_101 = arith.constant 0 : index
      %416 = vector.load %arg3[%c0_100, %c0_101] : memref<8x32xf32, #tpu.memory_space<vmem>>, vector<8x32xf32>
      %c0_102 = arith.constant 0 : index
      %c0_103 = arith.constant 0 : index
      %417 = vector.load %arg7[%c0_102, %c0_103] : memref<8x32xf32, #tpu.memory_space<vmem>>, vector<8x32xf32>
      tpu.vector_store %arg7[%c0_102, %c0_103], %416 {strides = array<i32>} : memref<8x32xf32, #tpu.memory_space<vmem>>, vector<8x32xf32>,
    } else {
    }
    %c0 = arith.constant 0 : index
    %c0_1 = arith.constant 0 : index
    %3 = vector.load %arg4[%c0, %c0_1] : memref<32x192xbf16, #tpu.memory_space<vmem>>, vector<32x192xbf16>
    %c0_2 = arith.constant 0 : index
    %c0_3 = arith.constant 0 : index
    %4 = vector.load %arg5[%c0_2, %c0_3] : memref<1x192xf32, #tpu.memory_space<vmem>>, vector<1x192xf32>
    %5 = vector.extract_strided_slice %4 {offsets = [0, 0], sizes = [1, 96], strides = [1, 1]} : vector<1x192xf32> to vector<1x96xf32>
    %6 = vector.shape_cast %5 : vector<1x96xf32> to vector<1x96xf32>
    %7 = vector.broadcast %6 : vector<1x96xf32> to vector<8x96xf32>
    %8 = vector.extract_strided_slice %4 {offsets = [0, 96], sizes = [1, 96], strides = [1, 1]} : vector<1x192xf32> to vector<1x96xf32>
    %9 = vector.shape_cast %8 : vector<1x96xf32> to vector<1x96xf32>
    %10 = vector.broadcast %9 : vector<1x96xf32> to vector<8x96xf32>
    %c0_4 = arith.constant 0 : index
    %c0_5 = arith.constant 0 : index
    %c0_6 = arith.constant 0 : index
    %11 = vector.load %arg2[%c0_4, %c0_5, %c0_6] : memref<1x8x8xf32, #tpu.memory_space<vmem>>, vector<1x8x8xf32>
    %12 = vector.shape_cast %11 : vector<1x8x8xf32> to vector<8x8xf32>
    %c0_7 = arith.constant 0 : index
    %c0_8 = arith.constant 0 : index
    %13 = vector.load %arg7[%c0_7, %c0_8] : memref<8x32xf32, #tpu.memory_space<vmem>>, vector<8x32xf32>
    %c8_i32 = arith.constant 8 : i32
    %14 = arith.muli %arg0, %c8_i32 : i32
    %c0_9 = arith.constant 0 : index
    %c0_10 = arith.constant 0 : index
    %c0_11 = arith.constant 0 : index
    %15 = vector.load %arg1[%c0_9, %c0_10, %c0_11] : memref<8x8x96xbf16, #tpu.memory_space<vmem>>, vector<1x8x96xbf16>
    %16 = vector.shape_cast %15 : vector<1x8x96xbf16> to vector<8x96xbf16>
    %17 = arith.extf %16 : vector<8x96xbf16> to vector<8x96xf32>
    %18 = vector.extract_strided_slice %12 {offsets = [0, 0], sizes = [8, 1], strides = [1, 1]} : vector<8x8xf32> to vector<8x1xf32>
    %cst = arith.constant 5.000000e-01 : f32
    %19 = vector.broadcast %cst : f32 to vector<8x1xf32>
    %20 = arith.cmpf ogt, %18, %19 : vector<8x1xf32>
    %21 = arith.truncf %13 : vector<8x32xf32> to vector<8x32xbf16>
    %cst_12 = arith.constant dense<0.000000e+00> : vector<8x192xf32>
    %22 = tpu.matmul %21, %3, %cst_12 {dimension_numbers = #tpu.dot_dimension_numbers<[1], [0], [0], [1], [0, 0, 1, 1], [], []>} : vector<8x32xbf16>, vector<32x192xbf16>, vector<8x192xf32> -> vector<8x192xf32>
    %23 = vector.extract_strided_slice %22 {offsets = [0, 0], sizes = [8, 96], strides = [1, 1]} : vector<8x192xf32> to vector<8x96xf32>
    %24 = vector.extract_strided_slice %22 {offsets = [0, 96], sizes = [8, 96], strides = [1, 1]} : vector<8x192xf32> to vector<8x96xf32>
    %25 = vector.shape_cast %20 : vector<8x1xi1> to vector<8x1xi1>
    %26 = vector.broadcast %25 : vector<8x1xi1> to vector<8x96xi1>
    %27 = arith.select %26, %23, %24 : vector<8x96xi1>, vector<8x96xf32>
    %28 = vector.shape_cast %20 : vector<8x1xi1> to vector<8x1xi1>
    %29 = vector.broadcast %28 : vector<8x1xi1> to vector<8x96xi1>
    %30 = arith.select %29, %7, %10 : vector<8x96xi1>, vector<8x96xf32>
    %31 = arith.addf %27, %30 : vector<8x96xf32>
    %32 = vector.extract_strided_slice %17 {offsets = [0, 0], sizes = [8, 32], strides = [1, 1]} : vector<8x96xf32> to vector<8x32xf32>
    %33 = vector.extract_strided_slice %31 {offsets = [0, 0], sizes = [8, 32], strides = [1, 1]} : vector<8x96xf32> to vector<8x32xf32>
    %34 = arith.addf %32, %33 : vector<8x32xf32>
    %35 = arith.negf %34 : vector<8x32xf32>
    %36 = math.exp %35 : vector<8x32xf32>
    %cst_13 = arith.constant 1.000000e+00 : f32
    %37 = vector.broadcast %cst_13 : f32 to vector<8x32xf32>
    %38 = arith.addf %37, %36 : vector<8x32xf32>
    %39 = arith.divf %37, %38 : vector<8x32xf32>
    %40 = vector.extract_strided_slice %17 {offsets = [0, 32], sizes = [8, 32], strides = [1, 1]} : vector<8x96xf32> to vector<8x32xf32>
    %41 = vector.extract_strided_slice %31 {offsets = [0, 32], sizes = [8, 32], strides = [1, 1]} : vector<8x96xf32> to vector<8x32xf32>
    %42 = arith.addf %40, %41 : vector<8x32xf32>
    %43 = arith.negf %42 : vector<8x32xf32>
    %44 = math.exp %43 : vector<8x32xf32>
    %cst_14 = arith.constant 1.000000e+00 : f32
    %45 = vector.broadcast %cst_14 : f32 to vector<8x32xf32>
    %46 = arith.addf %45, %44 : vector<8x32xf32>
    %47 = arith.divf %45, %46 : vector<8x32xf32>
    %48 = vector.extract_strided_slice %17 {offsets = [0, 64], sizes = [8, 32], strides = [1, 1]} : vector<8x96xf32> to vector<8x32xf32>
    %49 = vector.extract_strided_slice %31 {offsets = [0, 64], sizes = [8, 32], strides = [1, 1]} : vector<8x96xf32> to vector<8x32xf32>
    %50 = arith.mulf %39, %49 : vector<8x32xf32>
    %51 = arith.addf %48, %50 : vector<8x32xf32>
    %52 = math.tanh %51 : vector<8x32xf32>
    %cst_15 = arith.constant 1.000000e+00 : f32
    %53 = vector.broadcast %cst_15 : f32 to vector<8x32xf32>
    %54 = arith.subf %53, %47 : vector<8x32xf32>
    %55 = arith.mulf %54, %52 : vector<8x32xf32>
    %56 = arith.mulf %47, %13 : vector<8x32xf32>
    %57 = arith.addf %55, %56 : vector<8x32xf32>
    %c0_i32_16 = arith.constant 0 : i32
    %58 = arith.addi %14, %c0_i32_16 : i32
    %c4_i32 = arith.constant 4 : i32
    %59 = arith.cmpi slt, %58, %c4_i32 : i32
    %60 = arith.select %59, %57, %13 : vector<8x32xf32>
    %61 = arith.truncf %60 : vector<8x32xf32> to vector<8x32xbf16>
    %c0_17 = arith.constant 0 : index
    %c0_18 = arith.constant 0 : index
    %c0_19 = arith.constant 0 : index
    %62 = vector.load %arg6[%c0_17, %c0_18, %c0_19] : memref<8x8x32xbf16, #tpu.memory_space<vmem>>, vector<1x8x32xbf16>
    %63 = vector.shape_cast %62 : vector<1x8x32xbf16> to vector<8x32xbf16>
    %64 = vector.shape_cast %61 : vector<8x32xbf16> to vector<1x8x32xbf16>
    tpu.vector_store %arg6[%c0_17, %c0_18, %c0_19], %64 {strides = array<i32>} : memref<8x8x32xbf16, #tpu.memory_space<vmem>>, vector<1x8x32xbf16>,
    %c1 = arith.constant 1 : index
    %c0_20 = arith.constant 0 : index
    %c0_21 = arith.constant 0 : index
    %65 = vector.load %arg1[%c1, %c0_20, %c0_21] : memref<8x8x96xbf16, #tpu.memory_space<vmem>>, vector<1x8x96xbf16>
    %66 = vector.shape_cast %65 : vector<1x8x96xbf16> to vector<8x96xbf16>
    %67 = arith.extf %66 : vector<8x96xbf16> to vector<8x96xf32>
    %68 = vector.extract_strided_slice %12 {offsets = [0, 1], sizes = [8, 1], strides = [1, 1]} : vector<8x8xf32> to vector<8x1xf32>
    %cst_22 = arith.constant 5.000000e-01 : f32
    %69 = vector.broadcast %cst_22 : f32 to vector<8x1xf32>
    %70 = arith.cmpf ogt, %68, %69 : vector<8x1xf32>
    %71 = arith.truncf %60 : vector<8x32xf32> to vector<8x32xbf16>
    %cst_23 = arith.constant dense<0.000000e+00> : vector<8x192xf32>
    %72 = tpu.matmul %71, %3, %cst_23 {dimension_numbers = #tpu.dot_dimension_numbers<[1], [0], [0], [1], [0, 0, 1, 1], [], []>} : vector<8x32xbf16>, vector<32x192xbf16>, vector<8x192xf32> -> vector<8x192xf32>
    %73 = vector.extract_strided_slice %72 {offsets = [0, 0], sizes = [8, 96], strides = [1, 1]} : vector<8x192xf32> to vector<8x96xf32>
    %74 = vector.extract_strided_slice %72 {offsets = [0, 96], sizes = [8, 96], strides = [1, 1]} : vector<8x192xf32> to vector<8x96xf32>
    %75 = vector.shape_cast %70 : vector<8x1xi1> to vector<8x1xi1>
    %76 = vector.broadcast %75 : vector<8x1xi1> to vector<8x96xi1>
    %77 = arith.select %76, %73, %74 : vector<8x96xi1>, vector<8x96xf32>
    %78 = vector.shape_cast %70 : vector<8x1xi1> to vector<8x1xi1>
    %79 = vector.broadcast %78 : vector<8x1xi1> to vector<8x96xi1>
    %80 = arith.select %79, %7, %10 : vector<8x96xi1>, vector<8x96xf32>
    %81 = arith.addf %77, %80 : vector<8x96xf32>
    %82 = vector.extract_strided_slice %67 {offsets = [0, 0], sizes = [8, 32], strides = [1, 1]} : vector<8x96xf32> to vector<8x32xf32>
    %83 = vector.extract_strided_slice %81 {offsets = [0, 0], sizes = [8, 32], strides = [1, 1]} : vector<8x96xf32> to vector<8x32xf32>
    %84 = arith.addf %82, %83 : vector<8x32xf32>
    %85 = arith.negf %84 : vector<8x32xf32>
    %86 = math.exp %85 : vector<8x32xf32>
    %cst_24 = arith.constant 1.000000e+00 : f32
    %87 = vector.broadcast %cst_24 : f32 to vector<8x32xf32>
    %88 = arith.addf %87, %86 : vector<8x32xf32>
    %89 = arith.divf %87, %88 : vector<8x32xf32>
    %90 = vector.extract_strided_slice %67 {offsets = [0, 32], sizes = [8, 32], strides = [1, 1]} : vector<8x96xf32> to vector<8x32xf32>
    %91 = vector.extract_strided_slice %81 {offsets = [0, 32], sizes = [8, 32], strides = [1, 1]} : vector<8x96xf32> to vector<8x32xf32>
    %92 = arith.addf %90, %91 : vector<8x32xf32>
    %93 = arith.negf %92 : vector<8x32xf32>
    %94 = math.exp %93 : vector<8x32xf32>
    %cst_25 = arith.constant 1.000000e+00 : f32
    %95 = vector.broadcast %cst_25 : f32 to vector<8x32xf32>
    %96 = arith.addf %95, %94 : vector<8x32xf32>
    %97 = arith.divf %95, %96 : vector<8x32xf32>
    %98 = vector.extract_strided_slice %67 {offsets = [0, 64], sizes = [8, 32], strides = [1, 1]} : vector<8x96xf32> to vector<8x32xf32>
    %99 = vector.extract_strided_slice %81 {offsets = [0, 64], sizes = [8, 32], strides = [1, 1]} : vector<8x96xf32> to vector<8x32xf32>
    %100 = arith.mulf %89, %99 : vector<8x32xf32>
    %101 = arith.addf %98, %100 : vector<8x32xf32>
    %102 = math.tanh %101 : vector<8x32xf32>
    %cst_26 = arith.constant 1.000000e+00 : f32
    %103 = vector.broadcast %cst_26 : f32 to vector<8x32xf32>
    %104 = arith.subf %103, %97 : vector<8x32xf32>
    %105 = arith.mulf %104, %102 : vector<8x32xf32>
    %106 = arith.mulf %97, %60 : vector<8x32xf32>
    %107 = arith.addf %105, %106 : vector<8x32xf32>
    %c1_i32 = arith.constant 1 : i32
    %108 = arith.addi %14, %c1_i32 : i32
    %c4_i32_27 = arith.constant 4 : i32
    %109 = arith.cmpi slt, %108, %c4_i32_27 : i32
    %110 = arith.select %109, %107, %60 : vector<8x32xf32>
    %111 = arith.truncf %110 : vector<8x32xf32> to vector<8x32xbf16>
    %c1_28 = arith.constant 1 : index
    %c0_29 = arith.constant 0 : index
    %c0_30 = arith.constant 0 : index
    %112 = vector.load %arg6[%c1_28, %c0_29, %c0_30] : memref<8x8x32xbf16, #tpu.memory_space<vmem>>, vector<1x8x32xbf16>
    %113 = vector.shape_cast %112 : vector<1x8x32xbf16> to vector<8x32xbf16>
    %114 = vector.shape_cast %111 : vector<8x32xbf16> to vector<1x8x32xbf16>
    tpu.vector_store %arg6[%c1_28, %c0_29, %c0_30], %114 {strides = array<i32>} : memref<8x8x32xbf16, #tpu.memory_space<vmem>>, vector<1x8x32xbf16>,
    %c2 = arith.constant 2 : index
    %c0_31 = arith.constant 0 : index
    %c0_32 = arith.constant 0 : index
    %115 = vector.load %arg1[%c2, %c0_31, %c0_32] : memref<8x8x96xbf16, #tpu.memory_space<vmem>>, vector<1x8x96xbf16>
    %116 = vector.shape_cast %115 : vector<1x8x96xbf16> to vector<8x96xbf16>
    %117 = arith.extf %116 : vector<8x96xbf16> to vector<8x96xf32>
    %118 = vector.extract_strided_slice %12 {offsets = [0, 2], sizes = [8, 1], strides = [1, 1]} : vector<8x8xf32> to vector<8x1xf32>
    %cst_33 = arith.constant 5.000000e-01 : f32
    %119 = vector.broadcast %cst_33 : f32 to vector<8x1xf32>
    %120 = arith.cmpf ogt, %118, %119 : vector<8x1xf32>
    %121 = arith.truncf %110 : vector<8x32xf32> to vector<8x32xbf16>
    %cst_34 = arith.constant dense<0.000000e+00> : vector<8x192xf32>
    %122 = tpu.matmul %121, %3, %cst_34 {dimension_numbers = #tpu.dot_dimension_numbers<[1], [0], [0], [1], [0, 0, 1, 1], [], []>} : vector<8x32xbf16>, vector<32x192xbf16>, vector<8x192xf32> -> vector<8x192xf32>
    %123 = vector.extract_strided_slice %122 {offsets = [0, 0], sizes = [8, 96], strides = [1, 1]} : vector<8x192xf32> to vector<8x96xf32>
    %124 = vector.extract_strided_slice %122 {offsets = [0, 96], sizes = [8, 96], strides = [1, 1]} : vector<8x192xf32> to vector<8x96xf32>
    %125 = vector.shape_cast %120 : vector<8x1xi1> to vector<8x1xi1>
    %126 = vector.broadcast %125 : vector<8x1xi1> to vector<8x96xi1>
    %127 = arith.select %126, %123, %124 : vector<8x96xi1>, vector<8x96xf32>
    %128 = vector.shape_cast %120 : vector<8x1xi1> to vector<8x1xi1>
    %129 = vector.broadcast %128 : vector<8x1xi1> to vector<8x96xi1>
    %130 = arith.select %129, %7, %10 : vector<8x96xi1>, vector<8x96xf32>
    %131 = arith.addf %127, %130 : vector<8x96xf32>
    %132 = vector.extract_strided_slice %117 {offsets = [0, 0], sizes = [8, 32], strides = [1, 1]} : vector<8x96xf32> to vector<8x32xf32>
    %133 = vector.extract_strided_slice %131 {offsets = [0, 0], sizes = [8, 32], strides = [1, 1]} : vector<8x96xf32> to vector<8x32xf32>
    %134 = arith.addf %132, %133 : vector<8x32xf32>
    %135 = arith.negf %134 : vector<8x32xf32>
    %136 = math.exp %135 : vector<8x32xf32>
    %cst_35 = arith.constant 1.000000e+00 : f32
    %137 = vector.broadcast %cst_35 : f32 to vector<8x32xf32>
    %138 = arith.addf %137, %136 : vector<8x32xf32>
    %139 = arith.divf %137, %138 : vector<8x32xf32>
    %140 = vector.extract_strided_slice %117 {offsets = [0, 32], sizes = [8, 32], strides = [1, 1]} : vector<8x96xf32> to vector<8x32xf32>
    %141 = vector.extract_strided_slice %131 {offsets = [0, 32], sizes = [8, 32], strides = [1, 1]} : vector<8x96xf32> to vector<8x32xf32>
    %142 = arith.addf %140, %141 : vector<8x32xf32>
    %143 = arith.negf %142 : vector<8x32xf32>
    %144 = math.exp %143 : vector<8x32xf32>
    %cst_36 = arith.constant 1.000000e+00 : f32
    %145 = vector.broadcast %cst_36 : f32 to vector<8x32xf32>
    %146 = arith.addf %145, %144 : vector<8x32xf32>
    %147 = arith.divf %145, %146 : vector<8x32xf32>
    %148 = vector.extract_strided_slice %117 {offsets = [0, 64], sizes = [8, 32], strides = [1, 1]} : vector<8x96xf32> to vector<8x32xf32>
    %149 = vector.extract_strided_slice %131 {offsets = [0, 64], sizes = [8, 32], strides = [1, 1]} : vector<8x96xf32> to vector<8x32xf32>
    %150 = arith.mulf %139, %149 : vector<8x32xf32>
    %151 = arith.addf %148, %150 : vector<8x32xf32>
    %152 = math.tanh %151 : vector<8x32xf32>
    %cst_37 = arith.constant 1.000000e+00 : f32
    %153 = vector.broadcast %cst_37 : f32 to vector<8x32xf32>
    %154 = arith.subf %153, %147 : vector<8x32xf32>
    %155 = arith.mulf %154, %152 : vector<8x32xf32>
    %156 = arith.mulf %147, %110 : vector<8x32xf32>
    %157 = arith.addf %155, %156 : vector<8x32xf32>
    %c2_i32 = arith.constant 2 : i32
    %158 = arith.addi %14, %c2_i32 : i32
    %c4_i32_38 = arith.constant 4 : i32
    %159 = arith.cmpi slt, %158, %c4_i32_38 : i32
    %160 = arith.select %159, %157, %110 : vector<8x32xf32>
    %161 = arith.truncf %160 : vector<8x32xf32> to vector<8x32xbf16>
    %c2_39 = arith.constant 2 : index
    %c0_40 = arith.constant 0 : index
    %c0_41 = arith.constant 0 : index
    %162 = vector.load %arg6[%c2_39, %c0_40, %c0_41] : memref<8x8x32xbf16, #tpu.memory_space<vmem>>, vector<1x8x32xbf16>
    %163 = vector.shape_cast %162 : vector<1x8x32xbf16> to vector<8x32xbf16>
    %164 = vector.shape_cast %161 : vector<8x32xbf16> to vector<1x8x32xbf16>
    tpu.vector_store %arg6[%c2_39, %c0_40, %c0_41], %164 {strides = array<i32>} : memref<8x8x32xbf16, #tpu.memory_space<vmem>>, vector<1x8x32xbf16>,
    %c3 = arith.constant 3 : index
    %c0_42 = arith.constant 0 : index
    %c0_43 = arith.constant 0 : index
    %165 = vector.load %arg1[%c3, %c0_42, %c0_43] : memref<8x8x96xbf16, #tpu.memory_space<vmem>>, vector<1x8x96xbf16>
    %166 = vector.shape_cast %165 : vector<1x8x96xbf16> to vector<8x96xbf16>
    %167 = arith.extf %166 : vector<8x96xbf16> to vector<8x96xf32>
    %168 = vector.extract_strided_slice %12 {offsets = [0, 3], sizes = [8, 1], strides = [1, 1]} : vector<8x8xf32> to vector<8x1xf32>
    %cst_44 = arith.constant 5.000000e-01 : f32
    %169 = vector.broadcast %cst_44 : f32 to vector<8x1xf32>
    %170 = arith.cmpf ogt, %168, %169 : vector<8x1xf32>
    %171 = arith.truncf %160 : vector<8x32xf32> to vector<8x32xbf16>
    %cst_45 = arith.constant dense<0.000000e+00> : vector<8x192xf32>
    %172 = tpu.matmul %171, %3, %cst_45 {dimension_numbers = #tpu.dot_dimension_numbers<[1], [0], [0], [1], [0, 0, 1, 1], [], []>} : vector<8x32xbf16>, vector<32x192xbf16>, vector<8x192xf32> -> vector<8x192xf32>
    %173 = vector.extract_strided_slice %172 {offsets = [0, 0], sizes = [8, 96], strides = [1, 1]} : vector<8x192xf32> to vector<8x96xf32>
    %174 = vector.extract_strided_slice %172 {offsets = [0, 96], sizes = [8, 96], strides = [1, 1]} : vector<8x192xf32> to vector<8x96xf32>
    %175 = vector.shape_cast %170 : vector<8x1xi1> to vector<8x1xi1>
    %176 = vector.broadcast %175 : vector<8x1xi1> to vector<8x96xi1>
    %177 = arith.select %176, %173, %174 : vector<8x96xi1>, vector<8x96xf32>
    %178 = vector.shape_cast %170 : vector<8x1xi1> to vector<8x1xi1>
    %179 = vector.broadcast %178 : vector<8x1xi1> to vector<8x96xi1>
    %180 = arith.select %179, %7, %10 : vector<8x96xi1>, vector<8x96xf32>
    %181 = arith.addf %177, %180 : vector<8x96xf32>
    %182 = vector.extract_strided_slice %167 {offsets = [0, 0], sizes = [8, 32], strides = [1, 1]} : vector<8x96xf32> to vector<8x32xf32>
    %183 = vector.extract_strided_slice %181 {offsets = [0, 0], sizes = [8, 32], strides = [1, 1]} : vector<8x96xf32> to vector<8x32xf32>
    %184 = arith.addf %182, %183 : vector<8x32xf32>
    %185 = arith.negf %184 : vector<8x32xf32>
    %186 = math.exp %185 : vector<8x32xf32>
    %cst_46 = arith.constant 1.000000e+00 : f32
    %187 = vector.broadcast %cst_46 : f32 to vector<8x32xf32>
    %188 = arith.addf %187, %186 : vector<8x32xf32>
    %189 = arith.divf %187, %188 : vector<8x32xf32>
    %190 = vector.extract_strided_slice %167 {offsets = [0, 32], sizes = [8, 32], strides = [1, 1]} : vector<8x96xf32> to vector<8x32xf32>
    %191 = vector.extract_strided_slice %181 {offsets = [0, 32], sizes = [8, 32], strides = [1, 1]} : vector<8x96xf32> to vector<8x32xf32>
    %192 = arith.addf %190, %191 : vector<8x32xf32>
    %193 = arith.negf %192 : vector<8x32xf32>
    %194 = math.exp %193 : vector<8x32xf32>
    %cst_47 = arith.constant 1.000000e+00 : f32
    %195 = vector.broadcast %cst_47 : f32 to vector<8x32xf32>
    %196 = arith.addf %195, %194 : vector<8x32xf32>
    %197 = arith.divf %195, %196 : vector<8x32xf32>
    %198 = vector.extract_strided_slice %167 {offsets = [0, 64], sizes = [8, 32], strides = [1, 1]} : vector<8x96xf32> to vector<8x32xf32>
    %199 = vector.extract_strided_slice %181 {offsets = [0, 64], sizes = [8, 32], strides = [1, 1]} : vector<8x96xf32> to vector<8x32xf32>
    %200 = arith.mulf %189, %199 : vector<8x32xf32>
    %201 = arith.addf %198, %200 : vector<8x32xf32>
    %202 = math.tanh %201 : vector<8x32xf32>
    %cst_48 = arith.constant 1.000000e+00 : f32
    %203 = vector.broadcast %cst_48 : f32 to vector<8x32xf32>
    %204 = arith.subf %203, %197 : vector<8x32xf32>
    %205 = arith.mulf %204, %202 : vector<8x32xf32>
    %206 = arith.mulf %197, %160 : vector<8x32xf32>
    %207 = arith.addf %205, %206 : vector<8x32xf32>
    %c3_i32 = arith.constant 3 : i32
    %208 = arith.addi %14, %c3_i32 : i32
    %c4_i32_49 = arith.constant 4 : i32
    %209 = arith.cmpi slt, %208, %c4_i32_49 : i32
    %210 = arith.select %209, %207, %160 : vector<8x32xf32>
    %211 = arith.truncf %210 : vector<8x32xf32> to vector<8x32xbf16>
    %c3_50 = arith.constant 3 : index
    %c0_51 = arith.constant 0 : index
    %c0_52 = arith.constant 0 : index
    %212 = vector.load %arg6[%c3_50, %c0_51, %c0_52] : memref<8x8x32xbf16, #tpu.memory_space<vmem>>, vector<1x8x32xbf16>
    %213 = vector.shape_cast %212 : vector<1x8x32xbf16> to vector<8x32xbf16>
    %214 = vector.shape_cast %211 : vector<8x32xbf16> to vector<1x8x32xbf16>
    tpu.vector_store %arg6[%c3_50, %c0_51, %c0_52], %214 {strides = array<i32>} : memref<8x8x32xbf16, #tpu.memory_space<vmem>>, vector<1x8x32xbf16>,
    %c4 = arith.constant 4 : index
    %c0_53 = arith.constant 0 : index
    %c0_54 = arith.constant 0 : index
    %215 = vector.load %arg1[%c4, %c0_53, %c0_54] : memref<8x8x96xbf16, #tpu.memory_space<vmem>>, vector<1x8x96xbf16>
    %216 = vector.shape_cast %215 : vector<1x8x96xbf16> to vector<8x96xbf16>
    %217 = arith.extf %216 : vector<8x96xbf16> to vector<8x96xf32>
    %218 = vector.extract_strided_slice %12 {offsets = [0, 4], sizes = [8, 1], strides = [1, 1]} : vector<8x8xf32> to vector<8x1xf32>
    %cst_55 = arith.constant 5.000000e-01 : f32
    %219 = vector.broadcast %cst_55 : f32 to vector<8x1xf32>
    %220 = arith.cmpf ogt, %218, %219 : vector<8x1xf32>
    %221 = arith.truncf %210 : vector<8x32xf32> to vector<8x32xbf16>
    %cst_56 = arith.constant dense<0.000000e+00> : vector<8x192xf32>
    %222 = tpu.matmul %221, %3, %cst_56 {dimension_numbers = #tpu.dot_dimension_numbers<[1], [0], [0], [1], [0, 0, 1, 1], [], []>} : vector<8x32xbf16>, vector<32x192xbf16>, vector<8x192xf32> -> vector<8x192xf32>
    %223 = vector.extract_strided_slice %222 {offsets = [0, 0], sizes = [8, 96], strides = [1, 1]} : vector<8x192xf32> to vector<8x96xf32>
    %224 = vector.extract_strided_slice %222 {offsets = [0, 96], sizes = [8, 96], strides = [1, 1]} : vector<8x192xf32> to vector<8x96xf32>
    %225 = vector.shape_cast %220 : vector<8x1xi1> to vector<8x1xi1>
    %226 = vector.broadcast %225 : vector<8x1xi1> to vector<8x96xi1>
    %227 = arith.select %226, %223, %224 : vector<8x96xi1>, vector<8x96xf32>
    %228 = vector.shape_cast %220 : vector<8x1xi1> to vector<8x1xi1>
    %229 = vector.broadcast %228 : vector<8x1xi1> to vector<8x96xi1>
    %230 = arith.select %229, %7, %10 : vector<8x96xi1>, vector<8x96xf32>
    %231 = arith.addf %227, %230 : vector<8x96xf32>
    %232 = vector.extract_strided_slice %217 {offsets = [0, 0], sizes = [8, 32], strides = [1, 1]} : vector<8x96xf32> to vector<8x32xf32>
    %233 = vector.extract_strided_slice %231 {offsets = [0, 0], sizes = [8, 32], strides = [1, 1]} : vector<8x96xf32> to vector<8x32xf32>
    %234 = arith.addf %232, %233 : vector<8x32xf32>
    %235 = arith.negf %234 : vector<8x32xf32>
    %236 = math.exp %235 : vector<8x32xf32>
    %cst_57 = arith.constant 1.000000e+00 : f32
    %237 = vector.broadcast %cst_57 : f32 to vector<8x32xf32>
    %238 = arith.addf %237, %236 : vector<8x32xf32>
    %239 = arith.divf %237, %238 : vector<8x32xf32>
    %240 = vector.extract_strided_slice %217 {offsets = [0, 32], sizes = [8, 32], strides = [1, 1]} : vector<8x96xf32> to vector<8x32xf32>
    %241 = vector.extract_strided_slice %231 {offsets = [0, 32], sizes = [8, 32], strides = [1, 1]} : vector<8x96xf32> to vector<8x32xf32>
    %242 = arith.addf %240, %241 : vector<8x32xf32>
    %243 = arith.negf %242 : vector<8x32xf32>
    %244 = math.exp %243 : vector<8x32xf32>
    %cst_58 = arith.constant 1.000000e+00 : f32
    %245 = vector.broadcast %cst_58 : f32 to vector<8x32xf32>
    %246 = arith.addf %245, %244 : vector<8x32xf32>
    %247 = arith.divf %245, %246 : vector<8x32xf32>
    %248 = vector.extract_strided_slice %217 {offsets = [0, 64], sizes = [8, 32], strides = [1, 1]} : vector<8x96xf32> to vector<8x32xf32>
    %249 = vector.extract_strided_slice %231 {offsets = [0, 64], sizes = [8, 32], strides = [1, 1]} : vector<8x96xf32> to vector<8x32xf32>
    %250 = arith.mulf %239, %249 : vector<8x32xf32>
    %251 = arith.addf %248, %250 : vector<8x32xf32>
    %252 = math.tanh %251 : vector<8x32xf32>
    %cst_59 = arith.constant 1.000000e+00 : f32
    %253 = vector.broadcast %cst_59 : f32 to vector<8x32xf32>
    %254 = arith.subf %253, %247 : vector<8x32xf32>
    %255 = arith.mulf %254, %252 : vector<8x32xf32>
    %256 = arith.mulf %247, %210 : vector<8x32xf32>
    %257 = arith.addf %255, %256 : vector<8x32xf32>
    %c4_i32_60 = arith.constant 4 : i32
    %258 = arith.addi %14, %c4_i32_60 : i32
    %c4_i32_61 = arith.constant 4 : i32
    %259 = arith.cmpi slt, %258, %c4_i32_61 : i32
    %260 = arith.select %259, %257, %210 : vector<8x32xf32>
    %261 = arith.truncf %260 : vector<8x32xf32> to vector<8x32xbf16>
    %c4_62 = arith.constant 4 : index
    %c0_63 = arith.constant 0 : index
    %c0_64 = arith.constant 0 : index
    %262 = vector.load %arg6[%c4_62, %c0_63, %c0_64] : memref<8x8x32xbf16, #tpu.memory_space<vmem>>, vector<1x8x32xbf16>
    %263 = vector.shape_cast %262 : vector<1x8x32xbf16> to vector<8x32xbf16>
    %264 = vector.shape_cast %261 : vector<8x32xbf16> to vector<1x8x32xbf16>
    tpu.vector_store %arg6[%c4_62, %c0_63, %c0_64], %264 {strides = array<i32>} : memref<8x8x32xbf16, #tpu.memory_space<vmem>>, vector<1x8x32xbf16>,
    %c5 = arith.constant 5 : index
    %c0_65 = arith.constant 0 : index
    %c0_66 = arith.constant 0 : index
    %265 = vector.load %arg1[%c5, %c0_65, %c0_66] : memref<8x8x96xbf16, #tpu.memory_space<vmem>>, vector<1x8x96xbf16>
    %266 = vector.shape_cast %265 : vector<1x8x96xbf16> to vector<8x96xbf16>
    %267 = arith.extf %266 : vector<8x96xbf16> to vector<8x96xf32>
    %268 = vector.extract_strided_slice %12 {offsets = [0, 5], sizes = [8, 1], strides = [1, 1]} : vector<8x8xf32> to vector<8x1xf32>
    %cst_67 = arith.constant 5.000000e-01 : f32
    %269 = vector.broadcast %cst_67 : f32 to vector<8x1xf32>
    %270 = arith.cmpf ogt, %268, %269 : vector<8x1xf32>
    %271 = arith.truncf %260 : vector<8x32xf32> to vector<8x32xbf16>
    %cst_68 = arith.constant dense<0.000000e+00> : vector<8x192xf32>
    %272 = tpu.matmul %271, %3, %cst_68 {dimension_numbers = #tpu.dot_dimension_numbers<[1], [0], [0], [1], [0, 0, 1, 1], [], []>} : vector<8x32xbf16>, vector<32x192xbf16>, vector<8x192xf32> -> vector<8x192xf32>
    %273 = vector.extract_strided_slice %272 {offsets = [0, 0], sizes = [8, 96], strides = [1, 1]} : vector<8x192xf32> to vector<8x96xf32>
    %274 = vector.extract_strided_slice %272 {offsets = [0, 96], sizes = [8, 96], strides = [1, 1]} : vector<8x192xf32> to vector<8x96xf32>
    %275 = vector.shape_cast %270 : vector<8x1xi1> to vector<8x1xi1>
    %276 = vector.broadcast %275 : vector<8x1xi1> to vector<8x96xi1>
    %277 = arith.select %276, %273, %274 : vector<8x96xi1>, vector<8x96xf32>
    %278 = vector.shape_cast %270 : vector<8x1xi1> to vector<8x1xi1>
    %279 = vector.broadcast %278 : vector<8x1xi1> to vector<8x96xi1>
    %280 = arith.select %279, %7, %10 : vector<8x96xi1>, vector<8x96xf32>
    %281 = arith.addf %277, %280 : vector<8x96xf32>
    %282 = vector.extract_strided_slice %267 {offsets = [0, 0], sizes = [8, 32], strides = [1, 1]} : vector<8x96xf32> to vector<8x32xf32>
    %283 = vector.extract_strided_slice %281 {offsets = [0, 0], sizes = [8, 32], strides = [1, 1]} : vector<8x96xf32> to vector<8x32xf32>
    %284 = arith.addf %282, %283 : vector<8x32xf32>
    %285 = arith.negf %284 : vector<8x32xf32>
    %286 = math.exp %285 : vector<8x32xf32>
    %cst_69 = arith.constant 1.000000e+00 : f32
    %287 = vector.broadcast %cst_69 : f32 to vector<8x32xf32>
    %288 = arith.addf %287, %286 : vector<8x32xf32>
    %289 = arith.divf %287, %288 : vector<8x32xf32>
    %290 = vector.extract_strided_slice %267 {offsets = [0, 32], sizes = [8, 32], strides = [1, 1]} : vector<8x96xf32> to vector<8x32xf32>
    %291 = vector.extract_strided_slice %281 {offsets = [0, 32], sizes = [8, 32], strides = [1, 1]} : vector<8x96xf32> to vector<8x32xf32>
    %292 = arith.addf %290, %291 : vector<8x32xf32>
    %293 = arith.negf %292 : vector<8x32xf32>
    %294 = math.exp %293 : vector<8x32xf32>
    %cst_70 = arith.constant 1.000000e+00 : f32
    %295 = vector.broadcast %cst_70 : f32 to vector<8x32xf32>
    %296 = arith.addf %295, %294 : vector<8x32xf32>
    %297 = arith.divf %295, %296 : vector<8x32xf32>
    %298 = vector.extract_strided_slice %267 {offsets = [0, 64], sizes = [8, 32], strides = [1, 1]} : vector<8x96xf32> to vector<8x32xf32>
    %299 = vector.extract_strided_slice %281 {offsets = [0, 64], sizes = [8, 32], strides = [1, 1]} : vector<8x96xf32> to vector<8x32xf32>
    %300 = arith.mulf %289, %299 : vector<8x32xf32>
    %301 = arith.addf %298, %300 : vector<8x32xf32>
    %302 = math.tanh %301 : vector<8x32xf32>
    %cst_71 = arith.constant 1.000000e+00 : f32
    %303 = vector.broadcast %cst_71 : f32 to vector<8x32xf32>
    %304 = arith.subf %303, %297 : vector<8x32xf32>
    %305 = arith.mulf %304, %302 : vector<8x32xf32>
    %306 = arith.mulf %297, %260 : vector<8x32xf32>
    %307 = arith.addf %305, %306 : vector<8x32xf32>
    %c5_i32 = arith.constant 5 : i32
    %308 = arith.addi %14, %c5_i32 : i32
    %c4_i32_72 = arith.constant 4 : i32
    %309 = arith.cmpi slt, %308, %c4_i32_72 : i32
    %310 = arith.select %309, %307, %260 : vector<8x32xf32>
    %311 = arith.truncf %310 : vector<8x32xf32> to vector<8x32xbf16>
    %c5_73 = arith.constant 5 : index
    %c0_74 = arith.constant 0 : index
    %c0_75 = arith.constant 0 : index
    %312 = vector.load %arg6[%c5_73, %c0_74, %c0_75] : memref<8x8x32xbf16, #tpu.memory_space<vmem>>, vector<1x8x32xbf16>
    %313 = vector.shape_cast %312 : vector<1x8x32xbf16> to vector<8x32xbf16>
    %314 = vector.shape_cast %311 : vector<8x32xbf16> to vector<1x8x32xbf16>
    tpu.vector_store %arg6[%c5_73, %c0_74, %c0_75], %314 {strides = array<i32>} : memref<8x8x32xbf16, #tpu.memory_space<vmem>>, vector<1x8x32xbf16>,
    %c6 = arith.constant 6 : index
    %c0_76 = arith.constant 0 : index
    %c0_77 = arith.constant 0 : index
    %315 = vector.load %arg1[%c6, %c0_76, %c0_77] : memref<8x8x96xbf16, #tpu.memory_space<vmem>>, vector<1x8x96xbf16>
    %316 = vector.shape_cast %315 : vector<1x8x96xbf16> to vector<8x96xbf16>
    %317 = arith.extf %316 : vector<8x96xbf16> to vector<8x96xf32>
    %318 = vector.extract_strided_slice %12 {offsets = [0, 6], sizes = [8, 1], strides = [1, 1]} : vector<8x8xf32> to vector<8x1xf32>
    %cst_78 = arith.constant 5.000000e-01 : f32
    %319 = vector.broadcast %cst_78 : f32 to vector<8x1xf32>
    %320 = arith.cmpf ogt, %318, %319 : vector<8x1xf32>
    %321 = arith.truncf %310 : vector<8x32xf32> to vector<8x32xbf16>
    %cst_79 = arith.constant dense<0.000000e+00> : vector<8x192xf32>
    %322 = tpu.matmul %321, %3, %cst_79 {dimension_numbers = #tpu.dot_dimension_numbers<[1], [0], [0], [1], [0, 0, 1, 1], [], []>} : vector<8x32xbf16>, vector<32x192xbf16>, vector<8x192xf32> -> vector<8x192xf32>
    %323 = vector.extract_strided_slice %322 {offsets = [0, 0], sizes = [8, 96], strides = [1, 1]} : vector<8x192xf32> to vector<8x96xf32>
    %324 = vector.extract_strided_slice %322 {offsets = [0, 96], sizes = [8, 96], strides = [1, 1]} : vector<8x192xf32> to vector<8x96xf32>
    %325 = vector.shape_cast %320 : vector<8x1xi1> to vector<8x1xi1>
    %326 = vector.broadcast %325 : vector<8x1xi1> to vector<8x96xi1>
    %327 = arith.select %326, %323, %324 : vector<8x96xi1>, vector<8x96xf32>
    %328 = vector.shape_cast %320 : vector<8x1xi1> to vector<8x1xi1>
    %329 = vector.broadcast %328 : vector<8x1xi1> to vector<8x96xi1>
    %330 = arith.select %329, %7, %10 : vector<8x96xi1>, vector<8x96xf32>
    %331 = arith.addf %327, %330 : vector<8x96xf32>
    %332 = vector.extract_strided_slice %317 {offsets = [0, 0], sizes = [8, 32], strides = [1, 1]} : vector<8x96xf32> to vector<8x32xf32>
    %333 = vector.extract_strided_slice %331 {offsets = [0, 0], sizes = [8, 32], strides = [1, 1]} : vector<8x96xf32> to vector<8x32xf32>
    %334 = arith.addf %332, %333 : vector<8x32xf32>
    %335 = arith.negf %334 : vector<8x32xf32>
    %336 = math.exp %335 : vector<8x32xf32>
    %cst_80 = arith.constant 1.000000e+00 : f32
    %337 = vector.broadcast %cst_80 : f32 to vector<8x32xf32>
    %338 = arith.addf %337, %336 : vector<8x32xf32>
    %339 = arith.divf %337, %338 : vector<8x32xf32>
    %340 = vector.extract_strided_slice %317 {offsets = [0, 32], sizes = [8, 32], strides = [1, 1]} : vector<8x96xf32> to vector<8x32xf32>
    %341 = vector.extract_strided_slice %331 {offsets = [0, 32], sizes = [8, 32], strides = [1, 1]} : vector<8x96xf32> to vector<8x32xf32>
    %342 = arith.addf %340, %341 : vector<8x32xf32>
    %343 = arith.negf %342 : vector<8x32xf32>
    %344 = math.exp %343 : vector<8x32xf32>
    %cst_81 = arith.constant 1.000000e+00 : f32
    %345 = vector.broadcast %cst_81 : f32 to vector<8x32xf32>
    %346 = arith.addf %345, %344 : vector<8x32xf32>
    %347 = arith.divf %345, %346 : vector<8x32xf32>
    %348 = vector.extract_strided_slice %317 {offsets = [0, 64], sizes = [8, 32], strides = [1, 1]} : vector<8x96xf32> to vector<8x32xf32>
    %349 = vector.extract_strided_slice %331 {offsets = [0, 64], sizes = [8, 32], strides = [1, 1]} : vector<8x96xf32> to vector<8x32xf32>
    %350 = arith.mulf %339, %349 : vector<8x32xf32>
    %351 = arith.addf %348, %350 : vector<8x32xf32>
    %352 = math.tanh %351 : vector<8x32xf32>
    %cst_82 = arith.constant 1.000000e+00 : f32
    %353 = vector.broadcast %cst_82 : f32 to vector<8x32xf32>
    %354 = arith.subf %353, %347 : vector<8x32xf32>
    %355 = arith.mulf %354, %352 : vector<8x32xf32>
    %356 = arith.mulf %347, %310 : vector<8x32xf32>
    %357 = arith.addf %355, %356 : vector<8x32xf32>
    %c6_i32 = arith.constant 6 : i32
    %358 = arith.addi %14, %c6_i32 : i32
    %c4_i32_83 = arith.constant 4 : i32
    %359 = arith.cmpi slt, %358, %c4_i32_83 : i32
    %360 = arith.select %359, %357, %310 : vector<8x32xf32>
    %361 = arith.truncf %360 : vector<8x32xf32> to vector<8x32xbf16>
    %c6_84 = arith.constant 6 : index
    %c0_85 = arith.constant 0 : index
    %c0_86 = arith.constant 0 : index
    %362 = vector.load %arg6[%c6_84, %c0_85, %c0_86] : memref<8x8x32xbf16, #tpu.memory_space<vmem>>, vector<1x8x32xbf16>
    %363 = vector.shape_cast %362 : vector<1x8x32xbf16> to vector<8x32xbf16>
    %364 = vector.shape_cast %361 : vector<8x32xbf16> to vector<1x8x32xbf16>
    tpu.vector_store %arg6[%c6_84, %c0_85, %c0_86], %364 {strides = array<i32>} : memref<8x8x32xbf16, #tpu.memory_space<vmem>>, vector<1x8x32xbf16>,
    %c7 = arith.constant 7 : index
    %c0_87 = arith.constant 0 : index
    %c0_88 = arith.constant 0 : index
    %365 = vector.load %arg1[%c7, %c0_87, %c0_88] : memref<8x8x96xbf16, #tpu.memory_space<vmem>>, vector<1x8x96xbf16>
    %366 = vector.shape_cast %365 : vector<1x8x96xbf16> to vector<8x96xbf16>
    %367 = arith.extf %366 : vector<8x96xbf16> to vector<8x96xf32>
    %368 = vector.extract_strided_slice %12 {offsets = [0, 7], sizes = [8, 1], strides = [1, 1]} : vector<8x8xf32> to vector<8x1xf32>
    %cst_89 = arith.constant 5.000000e-01 : f32
    %369 = vector.broadcast %cst_89 : f32 to vector<8x1xf32>
    %370 = arith.cmpf ogt, %368, %369 : vector<8x1xf32>
    %371 = arith.truncf %360 : vector<8x32xf32> to vector<8x32xbf16>
    %cst_90 = arith.constant dense<0.000000e+00> : vector<8x192xf32>
    %372 = tpu.matmul %371, %3, %cst_90 {dimension_numbers = #tpu.dot_dimension_numbers<[1], [0], [0], [1], [0, 0, 1, 1], [], []>} : vector<8x32xbf16>, vector<32x192xbf16>, vector<8x192xf32> -> vector<8x192xf32>
    %373 = vector.extract_strided_slice %372 {offsets = [0, 0], sizes = [8, 96], strides = [1, 1]} : vector<8x192xf32> to vector<8x96xf32>
    %374 = vector.extract_strided_slice %372 {offsets = [0, 96], sizes = [8, 96], strides = [1, 1]} : vector<8x192xf32> to vector<8x96xf32>
    %375 = vector.shape_cast %370 : vector<8x1xi1> to vector<8x1xi1>
    %376 = vector.broadcast %375 : vector<8x1xi1> to vector<8x96xi1>
    %377 = arith.select %376, %373, %374 : vector<8x96xi1>, vector<8x96xf32>
    %378 = vector.shape_cast %370 : vector<8x1xi1> to vector<8x1xi1>
    %379 = vector.broadcast %378 : vector<8x1xi1> to vector<8x96xi1>
    %380 = arith.select %379, %7, %10 : vector<8x96xi1>, vector<8x96xf32>
    %381 = arith.addf %377, %380 : vector<8x96xf32>
    %382 = vector.extract_strided_slice %367 {offsets = [0, 0], sizes = [8, 32], strides = [1, 1]} : vector<8x96xf32> to vector<8x32xf32>
    %383 = vector.extract_strided_slice %381 {offsets = [0, 0], sizes = [8, 32], strides = [1, 1]} : vector<8x96xf32> to vector<8x32xf32>
    %384 = arith.addf %382, %383 : vector<8x32xf32>
    %385 = arith.negf %384 : vector<8x32xf32>
    %386 = math.exp %385 : vector<8x32xf32>
    %cst_91 = arith.constant 1.000000e+00 : f32
    %387 = vector.broadcast %cst_91 : f32 to vector<8x32xf32>
    %388 = arith.addf %387, %386 : vector<8x32xf32>
    %389 = arith.divf %387, %388 : vector<8x32xf32>
    %390 = vector.extract_strided_slice %367 {offsets = [0, 32], sizes = [8, 32], strides = [1, 1]} : vector<8x96xf32> to vector<8x32xf32>
    %391 = vector.extract_strided_slice %381 {offsets = [0, 32], sizes = [8, 32], strides = [1, 1]} : vector<8x96xf32> to vector<8x32xf32>
    %392 = arith.addf %390, %391 : vector<8x32xf32>
    %393 = arith.negf %392 : vector<8x32xf32>
    %394 = math.exp %393 : vector<8x32xf32>
    %cst_92 = arith.constant 1.000000e+00 : f32
    %395 = vector.broadcast %cst_92 : f32 to vector<8x32xf32>
    %396 = arith.addf %395, %394 : vector<8x32xf32>
    %397 = arith.divf %395, %396 : vector<8x32xf32>
    %398 = vector.extract_strided_slice %367 {offsets = [0, 64], sizes = [8, 32], strides = [1, 1]} : vector<8x96xf32> to vector<8x32xf32>
    %399 = vector.extract_strided_slice %381 {offsets = [0, 64], sizes = [8, 32], strides = [1, 1]} : vector<8x96xf32> to vector<8x32xf32>
    %400 = arith.mulf %389, %399 : vector<8x32xf32>
    %401 = arith.addf %398, %400 : vector<8x32xf32>
    %402 = math.tanh %401 : vector<8x32xf32>
    %cst_93 = arith.constant 1.000000e+00 : f32
    %403 = vector.broadcast %cst_93 : f32 to vector<8x32xf32>
    %404 = arith.subf %403, %397 : vector<8x32xf32>
    %405 = arith.mulf %404, %402 : vector<8x32xf32>
    %406 = arith.mulf %397, %360 : vector<8x32xf32>
    %407 = arith.addf %405, %406 : vector<8x32xf32>
    %c7_i32 = arith.constant 7 : i32
    %408 = arith.addi %14, %c7_i32 : i32
    %c4_i32_94 = arith.constant 4 : i32
    %409 = arith.cmpi slt, %408, %c4_i32_94 : i32
    %410 = arith.select %409, %407, %360 : vector<8x32xf32>
    %411 = arith.truncf %410 : vector<8x32xf32> to vector<8x32xbf16>
    %c7_95 = arith.constant 7 : index
    %c0_96 = arith.constant 0 : index
    %c0_97 = arith.constant 0 : index
    %412 = vector.load %arg6[%c7_95, %c0_96, %c0_97] : memref<8x8x32xbf16, #tpu.memory_space<vmem>>, vector<1x8x32xbf16>
    %413 = vector.shape_cast %412 : vector<1x8x32xbf16> to vector<8x32xbf16>
    %414 = vector.shape_cast %411 : vector<8x32xbf16> to vector<1x8x32xbf16>
    tpu.vector_store %arg6[%c7_95, %c0_96, %c0_97], %414 {strides = array<i32>} : memref<8x8x32xbf16, #tpu.memory_space<vmem>>, vector<1x8x32xbf16>,
    %c0_98 = arith.constant 0 : index
    %c0_99 = arith.constant 0 : index
    %415 = vector.load %arg7[%c0_98, %c0_99] : memref<8x32xf32, #tpu.memory_space<vmem>>, vector<8x32xf32>
    tpu.vector_store %arg7[%c0_98, %c0_99], %410 {strides = array<i32>} : memref<8x32xf32, #tpu.memory_space<vmem>>, vector<8x32xf32>,
    return
  }
  func.func @transform_0(%arg0: i32) -> (i32, i32, i32) {
    %c0_i32 = arith.constant 0 : i32
    %c0_i32_0 = arith.constant 0 : i32
    %c0_i32_1 = arith.constant 0 : i32
    return %arg0, %c0_i32, %c0_i32_0 : i32, i32, i32
  }
  func.func @transform_1(%arg0: i32) -> (i32, i32, i32) {
    %c0_i32 = arith.constant 0 : i32
    %c0_i32_0 = arith.constant 0 : i32
    %c0_i32_1 = arith.constant 0 : i32
    return %arg0, %c0_i32, %c0_i32_0 : i32, i32, i32
  }
  func.func @transform_2(%arg0: i32) -> (i32, i32) {
    %c0_i32 = arith.constant 0 : i32
    %c0_i32_0 = arith.constant 0 : i32
    %c0_i32_1 = arith.constant 0 : i32
    return %c0_i32, %c0_i32_0 : i32, i32
  }
  func.func @transform_3(%arg0: i32) -> (i32, i32) {
    %c0_i32 = arith.constant 0 : i32
    %c0_i32_0 = arith.constant 0 : i32
    %c0_i32_1 = arith.constant 0 : i32
    return %c0_i32, %c0_i32_0 : i32, i32
  }
  func.func @transform_4(%arg0: i32) -> (i32, i32) {
    %c0_i32 = arith.constant 0 : i32
    %c0_i32_0 = arith.constant 0 : i32
    %c0_i32_1 = arith.constant 0 : i32
    return %c0_i32, %c0_i32_0 : i32, i32
  }
  func.func @transform_5(%arg0: i32) -> (i32, i32, i32) {
    %c0_i32 = arith.constant 0 : i32
    %c0_i32_0 = arith.constant 0 : i32
    %c0_i32_1 = arith.constant 0 : i32
    return %arg0, %c0_i32, %c0_i32_0 : i32, i32, i32
  }
}

module attributes {stable_mosaic.version = 11 : i64} {
  func.func @kernel(%arg0: i32, %arg1: memref<8x8x96xbf16, #tpu.memory_space<vmem>>, %arg2: memref<1x8x8xf32, #tpu.memory_space<vmem>>, %arg3: memref<8x32xf32, #tpu.memory_space<vmem>>, %arg4: memref<32x192xbf16, #tpu.memory_space<vmem>>, %arg5: memref<1x192xf32, #tpu.memory_space<vmem>>, %arg6: memref<32x32xbf16, #tpu.memory_space<vmem>>, %arg7: memref<1x32xf32, #tpu.memory_space<vmem>>, %arg8: memref<16x32xbf16, #tpu.memory_space<vmem>>, %arg9: memref<1x32xf32, #tpu.memory_space<vmem>>, %arg10: memref<8x16xf32, #tpu.memory_space<vmem>>, %arg11: memref<8x16xf32, #tpu.memory_space<vmem>>, %arg12: memref<8x16xf32, #tpu.memory_space<vmem>>, %arg13: memref<8x16xf32, #tpu.memory_space<vmem>>, %arg14: memref<8x32xf32, #tpu.memory_space<vmem>>, %arg15: memref<8x32xf32, #tpu.memory_space<vmem>>) attributes {dimension_semantics = [#tpu.dimension_semantics<arbitrary>], iteration_bounds = array<i64: 1>, scalar_prefetch = 0 : i64, scratch_operands = 1 : i64, tpu.core_type = #tpu.core_type<tc>, window_params = [{transform_indices = @transform_0, window_bounds = array<i64: 8, 8, 96>}, {transform_indices = @transform_1, window_bounds = array<i64: 1, 8, 8>}, {pipeline_mode = #tpu.pipeline_mode<synchronous>, transform_indices = @transform_2, window_bounds = array<i64: 8, 32>}, {pipeline_mode = #tpu.pipeline_mode<synchronous>, transform_indices = @transform_3, window_bounds = array<i64: 32, 192>}, {pipeline_mode = #tpu.pipeline_mode<synchronous>, transform_indices = @transform_4, window_bounds = array<i64: 1, 192>}, {pipeline_mode = #tpu.pipeline_mode<synchronous>, transform_indices = @transform_5, window_bounds = array<i64: 32, 32>}, {pipeline_mode = #tpu.pipeline_mode<synchronous>, transform_indices = @transform_6, window_bounds = array<i64: 1, 32>}, {pipeline_mode = #tpu.pipeline_mode<synchronous>, transform_indices = @transform_7, window_bounds = array<i64: 16, 32>}, {pipeline_mode = #tpu.pipeline_mode<synchronous>, transform_indices = @transform_8, window_bounds = array<i64: 1, 32>}, {pipeline_mode = #tpu.pipeline_mode<synchronous>, transform_indices = @transform_9, window_bounds = array<i64: 8, 16>}, {pipeline_mode = #tpu.pipeline_mode<synchronous>, transform_indices = @transform_10, window_bounds = array<i64: 8, 16>}, {pipeline_mode = #tpu.pipeline_mode<synchronous>, transform_indices = @transform_11, window_bounds = array<i64: 8, 16>}, {pipeline_mode = #tpu.pipeline_mode<synchronous>, transform_indices = @transform_12, window_bounds = array<i64: 8, 16>}, {pipeline_mode = #tpu.pipeline_mode<synchronous>, transform_indices = @transform_13, window_bounds = array<i64: 8, 32>}]} {
    %c0_i32 = arith.constant 0 : i32
    %0 = arith.cmpi eq, %arg0, %c0_i32 : i32
    %1 = arith.extui %0 : i1 to i32
    %c0_i32_0 = arith.constant 0 : i32
    %2 = arith.cmpi ne, %1, %c0_i32_0 : i32
    scf.if %2 {
      %c0_78 = arith.constant 0 : index
      %c0_79 = arith.constant 0 : index
      %387 = vector.load %arg3[%c0_78, %c0_79] : memref<8x32xf32, #tpu.memory_space<vmem>>, vector<8x32xf32>
      %c0_80 = arith.constant 0 : index
      %c0_81 = arith.constant 0 : index
      %388 = vector.load %arg15[%c0_80, %c0_81] : memref<8x32xf32, #tpu.memory_space<vmem>>, vector<8x32xf32>
      tpu.vector_store %arg15[%c0_80, %c0_81], %387 {strides = array<i32>} : memref<8x32xf32, #tpu.memory_space<vmem>>, vector<8x32xf32>,
    } else {
    }
    %c0 = arith.constant 0 : index
    %c0_1 = arith.constant 0 : index
    %3 = vector.load %arg4[%c0, %c0_1] : memref<32x192xbf16, #tpu.memory_space<vmem>>, vector<32x192xbf16>
    %c0_2 = arith.constant 0 : index
    %c0_3 = arith.constant 0 : index
    %4 = vector.load %arg5[%c0_2, %c0_3] : memref<1x192xf32, #tpu.memory_space<vmem>>, vector<1x192xf32>
    %5 = vector.extract_strided_slice %4 {offsets = [0, 0], sizes = [1, 96], strides = [1, 1]} : vector<1x192xf32> to vector<1x96xf32>
    %6 = vector.shape_cast %5 : vector<1x96xf32> to vector<1x96xf32>
    %7 = vector.broadcast %6 : vector<1x96xf32> to vector<8x96xf32>
    %8 = vector.extract_strided_slice %4 {offsets = [0, 96], sizes = [1, 96], strides = [1, 1]} : vector<1x192xf32> to vector<1x96xf32>
    %9 = vector.shape_cast %8 : vector<1x96xf32> to vector<1x96xf32>
    %10 = vector.broadcast %9 : vector<1x96xf32> to vector<8x96xf32>
    %c0_4 = arith.constant 0 : index
    %c0_5 = arith.constant 0 : index
    %c0_6 = arith.constant 0 : index
    %11 = vector.load %arg2[%c0_4, %c0_5, %c0_6] : memref<1x8x8xf32, #tpu.memory_space<vmem>>, vector<1x8x8xf32>
    %12 = vector.shape_cast %11 : vector<1x8x8xf32> to vector<8x8xf32>
    %c0_7 = arith.constant 0 : index
    %c0_8 = arith.constant 0 : index
    %13 = vector.load %arg15[%c0_7, %c0_8] : memref<8x32xf32, #tpu.memory_space<vmem>>, vector<8x32xf32>
    %c8_i32 = arith.constant 8 : i32
    %14 = arith.muli %arg0, %c8_i32 : i32
    %c0_9 = arith.constant 0 : index
    %c0_10 = arith.constant 0 : index
    %c0_11 = arith.constant 0 : index
    %15 = vector.load %arg1[%c0_9, %c0_10, %c0_11] : memref<8x8x96xbf16, #tpu.memory_space<vmem>>, vector<1x8x96xbf16>
    %16 = vector.shape_cast %15 : vector<1x8x96xbf16> to vector<8x96xbf16>
    %17 = arith.extf %16 : vector<8x96xbf16> to vector<8x96xf32>
    %18 = vector.extract_strided_slice %12 {offsets = [0, 0], sizes = [8, 1], strides = [1, 1]} : vector<8x8xf32> to vector<8x1xf32>
    %cst = arith.constant 5.000000e-01 : f32
    %19 = vector.broadcast %cst : f32 to vector<8x1xf32>
    %20 = arith.cmpf ogt, %18, %19 : vector<8x1xf32>
    %21 = arith.truncf %13 : vector<8x32xf32> to vector<8x32xbf16>
    %cst_12 = arith.constant dense<0.000000e+00> : vector<8x192xf32>
    %22 = tpu.matmul %21, %3, %cst_12 {dimension_numbers = #tpu.dot_dimension_numbers<[1], [0], [0], [1], [0, 0, 1, 1], [], []>} : vector<8x32xbf16>, vector<32x192xbf16>, vector<8x192xf32> -> vector<8x192xf32>
    %23 = vector.extract_strided_slice %22 {offsets = [0, 0], sizes = [8, 96], strides = [1, 1]} : vector<8x192xf32> to vector<8x96xf32>
    %24 = vector.extract_strided_slice %22 {offsets = [0, 96], sizes = [8, 96], strides = [1, 1]} : vector<8x192xf32> to vector<8x96xf32>
    %25 = vector.shape_cast %20 : vector<8x1xi1> to vector<8x1xi1>
    %26 = vector.broadcast %25 : vector<8x1xi1> to vector<8x96xi1>
    %27 = arith.select %26, %23, %24 : vector<8x96xi1>, vector<8x96xf32>
    %28 = vector.shape_cast %20 : vector<8x1xi1> to vector<8x1xi1>
    %29 = vector.broadcast %28 : vector<8x1xi1> to vector<8x96xi1>
    %30 = arith.select %29, %7, %10 : vector<8x96xi1>, vector<8x96xf32>
    %31 = arith.addf %27, %30 : vector<8x96xf32>
    %32 = vector.extract_strided_slice %17 {offsets = [0, 0], sizes = [8, 32], strides = [1, 1]} : vector<8x96xf32> to vector<8x32xf32>
    %33 = vector.extract_strided_slice %31 {offsets = [0, 0], sizes = [8, 32], strides = [1, 1]} : vector<8x96xf32> to vector<8x32xf32>
    %34 = arith.addf %32, %33 : vector<8x32xf32>
    %35 = arith.negf %34 : vector<8x32xf32>
    %36 = math.exp %35 : vector<8x32xf32>
    %cst_13 = arith.constant 1.000000e+00 : f32
    %37 = vector.broadcast %cst_13 : f32 to vector<8x32xf32>
    %38 = arith.addf %37, %36 : vector<8x32xf32>
    %39 = arith.divf %37, %38 : vector<8x32xf32>
    %40 = vector.extract_strided_slice %17 {offsets = [0, 32], sizes = [8, 32], strides = [1, 1]} : vector<8x96xf32> to vector<8x32xf32>
    %41 = vector.extract_strided_slice %31 {offsets = [0, 32], sizes = [8, 32], strides = [1, 1]} : vector<8x96xf32> to vector<8x32xf32>
    %42 = arith.addf %40, %41 : vector<8x32xf32>
    %43 = arith.negf %42 : vector<8x32xf32>
    %44 = math.exp %43 : vector<8x32xf32>
    %cst_14 = arith.constant 1.000000e+00 : f32
    %45 = vector.broadcast %cst_14 : f32 to vector<8x32xf32>
    %46 = arith.addf %45, %44 : vector<8x32xf32>
    %47 = arith.divf %45, %46 : vector<8x32xf32>
    %48 = vector.extract_strided_slice %17 {offsets = [0, 64], sizes = [8, 32], strides = [1, 1]} : vector<8x96xf32> to vector<8x32xf32>
    %49 = vector.extract_strided_slice %31 {offsets = [0, 64], sizes = [8, 32], strides = [1, 1]} : vector<8x96xf32> to vector<8x32xf32>
    %50 = arith.mulf %39, %49 : vector<8x32xf32>
    %51 = arith.addf %48, %50 : vector<8x32xf32>
    %52 = math.tanh %51 : vector<8x32xf32>
    %cst_15 = arith.constant 1.000000e+00 : f32
    %53 = vector.broadcast %cst_15 : f32 to vector<8x32xf32>
    %54 = arith.subf %53, %47 : vector<8x32xf32>
    %55 = arith.mulf %54, %52 : vector<8x32xf32>
    %56 = arith.mulf %47, %13 : vector<8x32xf32>
    %57 = arith.addf %55, %56 : vector<8x32xf32>
    %c0_i32_16 = arith.constant 0 : i32
    %58 = arith.addi %14, %c0_i32_16 : i32
    %c4_i32 = arith.constant 4 : i32
    %59 = arith.cmpi slt, %58, %c4_i32 : i32
    %60 = arith.select %59, %57, %13 : vector<8x32xf32>
    %c1 = arith.constant 1 : index
    %c0_17 = arith.constant 0 : index
    %c0_18 = arith.constant 0 : index
    %61 = vector.load %arg1[%c1, %c0_17, %c0_18] : memref<8x8x96xbf16, #tpu.memory_space<vmem>>, vector<1x8x96xbf16>
    %62 = vector.shape_cast %61 : vector<1x8x96xbf16> to vector<8x96xbf16>
    %63 = arith.extf %62 : vector<8x96xbf16> to vector<8x96xf32>
    %64 = vector.extract_strided_slice %12 {offsets = [0, 1], sizes = [8, 1], strides = [1, 1]} : vector<8x8xf32> to vector<8x1xf32>
    %cst_19 = arith.constant 5.000000e-01 : f32
    %65 = vector.broadcast %cst_19 : f32 to vector<8x1xf32>
    %66 = arith.cmpf ogt, %64, %65 : vector<8x1xf32>
    %67 = arith.truncf %60 : vector<8x32xf32> to vector<8x32xbf16>
    %cst_20 = arith.constant dense<0.000000e+00> : vector<8x192xf32>
    %68 = tpu.matmul %67, %3, %cst_20 {dimension_numbers = #tpu.dot_dimension_numbers<[1], [0], [0], [1], [0, 0, 1, 1], [], []>} : vector<8x32xbf16>, vector<32x192xbf16>, vector<8x192xf32> -> vector<8x192xf32>
    %69 = vector.extract_strided_slice %68 {offsets = [0, 0], sizes = [8, 96], strides = [1, 1]} : vector<8x192xf32> to vector<8x96xf32>
    %70 = vector.extract_strided_slice %68 {offsets = [0, 96], sizes = [8, 96], strides = [1, 1]} : vector<8x192xf32> to vector<8x96xf32>
    %71 = vector.shape_cast %66 : vector<8x1xi1> to vector<8x1xi1>
    %72 = vector.broadcast %71 : vector<8x1xi1> to vector<8x96xi1>
    %73 = arith.select %72, %69, %70 : vector<8x96xi1>, vector<8x96xf32>
    %74 = vector.shape_cast %66 : vector<8x1xi1> to vector<8x1xi1>
    %75 = vector.broadcast %74 : vector<8x1xi1> to vector<8x96xi1>
    %76 = arith.select %75, %7, %10 : vector<8x96xi1>, vector<8x96xf32>
    %77 = arith.addf %73, %76 : vector<8x96xf32>
    %78 = vector.extract_strided_slice %63 {offsets = [0, 0], sizes = [8, 32], strides = [1, 1]} : vector<8x96xf32> to vector<8x32xf32>
    %79 = vector.extract_strided_slice %77 {offsets = [0, 0], sizes = [8, 32], strides = [1, 1]} : vector<8x96xf32> to vector<8x32xf32>
    %80 = arith.addf %78, %79 : vector<8x32xf32>
    %81 = arith.negf %80 : vector<8x32xf32>
    %82 = math.exp %81 : vector<8x32xf32>
    %cst_21 = arith.constant 1.000000e+00 : f32
    %83 = vector.broadcast %cst_21 : f32 to vector<8x32xf32>
    %84 = arith.addf %83, %82 : vector<8x32xf32>
    %85 = arith.divf %83, %84 : vector<8x32xf32>
    %86 = vector.extract_strided_slice %63 {offsets = [0, 32], sizes = [8, 32], strides = [1, 1]} : vector<8x96xf32> to vector<8x32xf32>
    %87 = vector.extract_strided_slice %77 {offsets = [0, 32], sizes = [8, 32], strides = [1, 1]} : vector<8x96xf32> to vector<8x32xf32>
    %88 = arith.addf %86, %87 : vector<8x32xf32>
    %89 = arith.negf %88 : vector<8x32xf32>
    %90 = math.exp %89 : vector<8x32xf32>
    %cst_22 = arith.constant 1.000000e+00 : f32
    %91 = vector.broadcast %cst_22 : f32 to vector<8x32xf32>
    %92 = arith.addf %91, %90 : vector<8x32xf32>
    %93 = arith.divf %91, %92 : vector<8x32xf32>
    %94 = vector.extract_strided_slice %63 {offsets = [0, 64], sizes = [8, 32], strides = [1, 1]} : vector<8x96xf32> to vector<8x32xf32>
    %95 = vector.extract_strided_slice %77 {offsets = [0, 64], sizes = [8, 32], strides = [1, 1]} : vector<8x96xf32> to vector<8x32xf32>
    %96 = arith.mulf %85, %95 : vector<8x32xf32>
    %97 = arith.addf %94, %96 : vector<8x32xf32>
    %98 = math.tanh %97 : vector<8x32xf32>
    %cst_23 = arith.constant 1.000000e+00 : f32
    %99 = vector.broadcast %cst_23 : f32 to vector<8x32xf32>
    %100 = arith.subf %99, %93 : vector<8x32xf32>
    %101 = arith.mulf %100, %98 : vector<8x32xf32>
    %102 = arith.mulf %93, %60 : vector<8x32xf32>
    %103 = arith.addf %101, %102 : vector<8x32xf32>
    %c1_i32 = arith.constant 1 : i32
    %104 = arith.addi %14, %c1_i32 : i32
    %c4_i32_24 = arith.constant 4 : i32
    %105 = arith.cmpi slt, %104, %c4_i32_24 : i32
    %106 = arith.select %105, %103, %60 : vector<8x32xf32>
    %c2 = arith.constant 2 : index
    %c0_25 = arith.constant 0 : index
    %c0_26 = arith.constant 0 : index
    %107 = vector.load %arg1[%c2, %c0_25, %c0_26] : memref<8x8x96xbf16, #tpu.memory_space<vmem>>, vector<1x8x96xbf16>
    %108 = vector.shape_cast %107 : vector<1x8x96xbf16> to vector<8x96xbf16>
    %109 = arith.extf %108 : vector<8x96xbf16> to vector<8x96xf32>
    %110 = vector.extract_strided_slice %12 {offsets = [0, 2], sizes = [8, 1], strides = [1, 1]} : vector<8x8xf32> to vector<8x1xf32>
    %cst_27 = arith.constant 5.000000e-01 : f32
    %111 = vector.broadcast %cst_27 : f32 to vector<8x1xf32>
    %112 = arith.cmpf ogt, %110, %111 : vector<8x1xf32>
    %113 = arith.truncf %106 : vector<8x32xf32> to vector<8x32xbf16>
    %cst_28 = arith.constant dense<0.000000e+00> : vector<8x192xf32>
    %114 = tpu.matmul %113, %3, %cst_28 {dimension_numbers = #tpu.dot_dimension_numbers<[1], [0], [0], [1], [0, 0, 1, 1], [], []>} : vector<8x32xbf16>, vector<32x192xbf16>, vector<8x192xf32> -> vector<8x192xf32>
    %115 = vector.extract_strided_slice %114 {offsets = [0, 0], sizes = [8, 96], strides = [1, 1]} : vector<8x192xf32> to vector<8x96xf32>
    %116 = vector.extract_strided_slice %114 {offsets = [0, 96], sizes = [8, 96], strides = [1, 1]} : vector<8x192xf32> to vector<8x96xf32>
    %117 = vector.shape_cast %112 : vector<8x1xi1> to vector<8x1xi1>
    %118 = vector.broadcast %117 : vector<8x1xi1> to vector<8x96xi1>
    %119 = arith.select %118, %115, %116 : vector<8x96xi1>, vector<8x96xf32>
    %120 = vector.shape_cast %112 : vector<8x1xi1> to vector<8x1xi1>
    %121 = vector.broadcast %120 : vector<8x1xi1> to vector<8x96xi1>
    %122 = arith.select %121, %7, %10 : vector<8x96xi1>, vector<8x96xf32>
    %123 = arith.addf %119, %122 : vector<8x96xf32>
    %124 = vector.extract_strided_slice %109 {offsets = [0, 0], sizes = [8, 32], strides = [1, 1]} : vector<8x96xf32> to vector<8x32xf32>
    %125 = vector.extract_strided_slice %123 {offsets = [0, 0], sizes = [8, 32], strides = [1, 1]} : vector<8x96xf32> to vector<8x32xf32>
    %126 = arith.addf %124, %125 : vector<8x32xf32>
    %127 = arith.negf %126 : vector<8x32xf32>
    %128 = math.exp %127 : vector<8x32xf32>
    %cst_29 = arith.constant 1.000000e+00 : f32
    %129 = vector.broadcast %cst_29 : f32 to vector<8x32xf32>
    %130 = arith.addf %129, %128 : vector<8x32xf32>
    %131 = arith.divf %129, %130 : vector<8x32xf32>
    %132 = vector.extract_strided_slice %109 {offsets = [0, 32], sizes = [8, 32], strides = [1, 1]} : vector<8x96xf32> to vector<8x32xf32>
    %133 = vector.extract_strided_slice %123 {offsets = [0, 32], sizes = [8, 32], strides = [1, 1]} : vector<8x96xf32> to vector<8x32xf32>
    %134 = arith.addf %132, %133 : vector<8x32xf32>
    %135 = arith.negf %134 : vector<8x32xf32>
    %136 = math.exp %135 : vector<8x32xf32>
    %cst_30 = arith.constant 1.000000e+00 : f32
    %137 = vector.broadcast %cst_30 : f32 to vector<8x32xf32>
    %138 = arith.addf %137, %136 : vector<8x32xf32>
    %139 = arith.divf %137, %138 : vector<8x32xf32>
    %140 = vector.extract_strided_slice %109 {offsets = [0, 64], sizes = [8, 32], strides = [1, 1]} : vector<8x96xf32> to vector<8x32xf32>
    %141 = vector.extract_strided_slice %123 {offsets = [0, 64], sizes = [8, 32], strides = [1, 1]} : vector<8x96xf32> to vector<8x32xf32>
    %142 = arith.mulf %131, %141 : vector<8x32xf32>
    %143 = arith.addf %140, %142 : vector<8x32xf32>
    %144 = math.tanh %143 : vector<8x32xf32>
    %cst_31 = arith.constant 1.000000e+00 : f32
    %145 = vector.broadcast %cst_31 : f32 to vector<8x32xf32>
    %146 = arith.subf %145, %139 : vector<8x32xf32>
    %147 = arith.mulf %146, %144 : vector<8x32xf32>
    %148 = arith.mulf %139, %106 : vector<8x32xf32>
    %149 = arith.addf %147, %148 : vector<8x32xf32>
    %c2_i32 = arith.constant 2 : i32
    %150 = arith.addi %14, %c2_i32 : i32
    %c4_i32_32 = arith.constant 4 : i32
    %151 = arith.cmpi slt, %150, %c4_i32_32 : i32
    %152 = arith.select %151, %149, %106 : vector<8x32xf32>
    %c3 = arith.constant 3 : index
    %c0_33 = arith.constant 0 : index
    %c0_34 = arith.constant 0 : index
    %153 = vector.load %arg1[%c3, %c0_33, %c0_34] : memref<8x8x96xbf16, #tpu.memory_space<vmem>>, vector<1x8x96xbf16>
    %154 = vector.shape_cast %153 : vector<1x8x96xbf16> to vector<8x96xbf16>
    %155 = arith.extf %154 : vector<8x96xbf16> to vector<8x96xf32>
    %156 = vector.extract_strided_slice %12 {offsets = [0, 3], sizes = [8, 1], strides = [1, 1]} : vector<8x8xf32> to vector<8x1xf32>
    %cst_35 = arith.constant 5.000000e-01 : f32
    %157 = vector.broadcast %cst_35 : f32 to vector<8x1xf32>
    %158 = arith.cmpf ogt, %156, %157 : vector<8x1xf32>
    %159 = arith.truncf %152 : vector<8x32xf32> to vector<8x32xbf16>
    %cst_36 = arith.constant dense<0.000000e+00> : vector<8x192xf32>
    %160 = tpu.matmul %159, %3, %cst_36 {dimension_numbers = #tpu.dot_dimension_numbers<[1], [0], [0], [1], [0, 0, 1, 1], [], []>} : vector<8x32xbf16>, vector<32x192xbf16>, vector<8x192xf32> -> vector<8x192xf32>
    %161 = vector.extract_strided_slice %160 {offsets = [0, 0], sizes = [8, 96], strides = [1, 1]} : vector<8x192xf32> to vector<8x96xf32>
    %162 = vector.extract_strided_slice %160 {offsets = [0, 96], sizes = [8, 96], strides = [1, 1]} : vector<8x192xf32> to vector<8x96xf32>
    %163 = vector.shape_cast %158 : vector<8x1xi1> to vector<8x1xi1>
    %164 = vector.broadcast %163 : vector<8x1xi1> to vector<8x96xi1>
    %165 = arith.select %164, %161, %162 : vector<8x96xi1>, vector<8x96xf32>
    %166 = vector.shape_cast %158 : vector<8x1xi1> to vector<8x1xi1>
    %167 = vector.broadcast %166 : vector<8x1xi1> to vector<8x96xi1>
    %168 = arith.select %167, %7, %10 : vector<8x96xi1>, vector<8x96xf32>
    %169 = arith.addf %165, %168 : vector<8x96xf32>
    %170 = vector.extract_strided_slice %155 {offsets = [0, 0], sizes = [8, 32], strides = [1, 1]} : vector<8x96xf32> to vector<8x32xf32>
    %171 = vector.extract_strided_slice %169 {offsets = [0, 0], sizes = [8, 32], strides = [1, 1]} : vector<8x96xf32> to vector<8x32xf32>
    %172 = arith.addf %170, %171 : vector<8x32xf32>
    %173 = arith.negf %172 : vector<8x32xf32>
    %174 = math.exp %173 : vector<8x32xf32>
    %cst_37 = arith.constant 1.000000e+00 : f32
    %175 = vector.broadcast %cst_37 : f32 to vector<8x32xf32>
    %176 = arith.addf %175, %174 : vector<8x32xf32>
    %177 = arith.divf %175, %176 : vector<8x32xf32>
    %178 = vector.extract_strided_slice %155 {offsets = [0, 32], sizes = [8, 32], strides = [1, 1]} : vector<8x96xf32> to vector<8x32xf32>
    %179 = vector.extract_strided_slice %169 {offsets = [0, 32], sizes = [8, 32], strides = [1, 1]} : vector<8x96xf32> to vector<8x32xf32>
    %180 = arith.addf %178, %179 : vector<8x32xf32>
    %181 = arith.negf %180 : vector<8x32xf32>
    %182 = math.exp %181 : vector<8x32xf32>
    %cst_38 = arith.constant 1.000000e+00 : f32
    %183 = vector.broadcast %cst_38 : f32 to vector<8x32xf32>
    %184 = arith.addf %183, %182 : vector<8x32xf32>
    %185 = arith.divf %183, %184 : vector<8x32xf32>
    %186 = vector.extract_strided_slice %155 {offsets = [0, 64], sizes = [8, 32], strides = [1, 1]} : vector<8x96xf32> to vector<8x32xf32>
    %187 = vector.extract_strided_slice %169 {offsets = [0, 64], sizes = [8, 32], strides = [1, 1]} : vector<8x96xf32> to vector<8x32xf32>
    %188 = arith.mulf %177, %187 : vector<8x32xf32>
    %189 = arith.addf %186, %188 : vector<8x32xf32>
    %190 = math.tanh %189 : vector<8x32xf32>
    %cst_39 = arith.constant 1.000000e+00 : f32
    %191 = vector.broadcast %cst_39 : f32 to vector<8x32xf32>
    %192 = arith.subf %191, %185 : vector<8x32xf32>
    %193 = arith.mulf %192, %190 : vector<8x32xf32>
    %194 = arith.mulf %185, %152 : vector<8x32xf32>
    %195 = arith.addf %193, %194 : vector<8x32xf32>
    %c3_i32 = arith.constant 3 : i32
    %196 = arith.addi %14, %c3_i32 : i32
    %c4_i32_40 = arith.constant 4 : i32
    %197 = arith.cmpi slt, %196, %c4_i32_40 : i32
    %198 = arith.select %197, %195, %152 : vector<8x32xf32>
    %c4 = arith.constant 4 : index
    %c0_41 = arith.constant 0 : index
    %c0_42 = arith.constant 0 : index
    %199 = vector.load %arg1[%c4, %c0_41, %c0_42] : memref<8x8x96xbf16, #tpu.memory_space<vmem>>, vector<1x8x96xbf16>
    %200 = vector.shape_cast %199 : vector<1x8x96xbf16> to vector<8x96xbf16>
    %201 = arith.extf %200 : vector<8x96xbf16> to vector<8x96xf32>
    %202 = vector.extract_strided_slice %12 {offsets = [0, 4], sizes = [8, 1], strides = [1, 1]} : vector<8x8xf32> to vector<8x1xf32>
    %cst_43 = arith.constant 5.000000e-01 : f32
    %203 = vector.broadcast %cst_43 : f32 to vector<8x1xf32>
    %204 = arith.cmpf ogt, %202, %203 : vector<8x1xf32>
    %205 = arith.truncf %198 : vector<8x32xf32> to vector<8x32xbf16>
    %cst_44 = arith.constant dense<0.000000e+00> : vector<8x192xf32>
    %206 = tpu.matmul %205, %3, %cst_44 {dimension_numbers = #tpu.dot_dimension_numbers<[1], [0], [0], [1], [0, 0, 1, 1], [], []>} : vector<8x32xbf16>, vector<32x192xbf16>, vector<8x192xf32> -> vector<8x192xf32>
    %207 = vector.extract_strided_slice %206 {offsets = [0, 0], sizes = [8, 96], strides = [1, 1]} : vector<8x192xf32> to vector<8x96xf32>
    %208 = vector.extract_strided_slice %206 {offsets = [0, 96], sizes = [8, 96], strides = [1, 1]} : vector<8x192xf32> to vector<8x96xf32>
    %209 = vector.shape_cast %204 : vector<8x1xi1> to vector<8x1xi1>
    %210 = vector.broadcast %209 : vector<8x1xi1> to vector<8x96xi1>
    %211 = arith.select %210, %207, %208 : vector<8x96xi1>, vector<8x96xf32>
    %212 = vector.shape_cast %204 : vector<8x1xi1> to vector<8x1xi1>
    %213 = vector.broadcast %212 : vector<8x1xi1> to vector<8x96xi1>
    %214 = arith.select %213, %7, %10 : vector<8x96xi1>, vector<8x96xf32>
    %215 = arith.addf %211, %214 : vector<8x96xf32>
    %216 = vector.extract_strided_slice %201 {offsets = [0, 0], sizes = [8, 32], strides = [1, 1]} : vector<8x96xf32> to vector<8x32xf32>
    %217 = vector.extract_strided_slice %215 {offsets = [0, 0], sizes = [8, 32], strides = [1, 1]} : vector<8x96xf32> to vector<8x32xf32>
    %218 = arith.addf %216, %217 : vector<8x32xf32>
    %219 = arith.negf %218 : vector<8x32xf32>
    %220 = math.exp %219 : vector<8x32xf32>
    %cst_45 = arith.constant 1.000000e+00 : f32
    %221 = vector.broadcast %cst_45 : f32 to vector<8x32xf32>
    %222 = arith.addf %221, %220 : vector<8x32xf32>
    %223 = arith.divf %221, %222 : vector<8x32xf32>
    %224 = vector.extract_strided_slice %201 {offsets = [0, 32], sizes = [8, 32], strides = [1, 1]} : vector<8x96xf32> to vector<8x32xf32>
    %225 = vector.extract_strided_slice %215 {offsets = [0, 32], sizes = [8, 32], strides = [1, 1]} : vector<8x96xf32> to vector<8x32xf32>
    %226 = arith.addf %224, %225 : vector<8x32xf32>
    %227 = arith.negf %226 : vector<8x32xf32>
    %228 = math.exp %227 : vector<8x32xf32>
    %cst_46 = arith.constant 1.000000e+00 : f32
    %229 = vector.broadcast %cst_46 : f32 to vector<8x32xf32>
    %230 = arith.addf %229, %228 : vector<8x32xf32>
    %231 = arith.divf %229, %230 : vector<8x32xf32>
    %232 = vector.extract_strided_slice %201 {offsets = [0, 64], sizes = [8, 32], strides = [1, 1]} : vector<8x96xf32> to vector<8x32xf32>
    %233 = vector.extract_strided_slice %215 {offsets = [0, 64], sizes = [8, 32], strides = [1, 1]} : vector<8x96xf32> to vector<8x32xf32>
    %234 = arith.mulf %223, %233 : vector<8x32xf32>
    %235 = arith.addf %232, %234 : vector<8x32xf32>
    %236 = math.tanh %235 : vector<8x32xf32>
    %cst_47 = arith.constant 1.000000e+00 : f32
    %237 = vector.broadcast %cst_47 : f32 to vector<8x32xf32>
    %238 = arith.subf %237, %231 : vector<8x32xf32>
    %239 = arith.mulf %238, %236 : vector<8x32xf32>
    %240 = arith.mulf %231, %198 : vector<8x32xf32>
    %241 = arith.addf %239, %240 : vector<8x32xf32>
    %c4_i32_48 = arith.constant 4 : i32
    %242 = arith.addi %14, %c4_i32_48 : i32
    %c4_i32_49 = arith.constant 4 : i32
    %243 = arith.cmpi slt, %242, %c4_i32_49 : i32
    %244 = arith.select %243, %241, %198 : vector<8x32xf32>
    %c5 = arith.constant 5 : index
    %c0_50 = arith.constant 0 : index
    %c0_51 = arith.constant 0 : index
    %245 = vector.load %arg1[%c5, %c0_50, %c0_51] : memref<8x8x96xbf16, #tpu.memory_space<vmem>>, vector<1x8x96xbf16>
    %246 = vector.shape_cast %245 : vector<1x8x96xbf16> to vector<8x96xbf16>
    %247 = arith.extf %246 : vector<8x96xbf16> to vector<8x96xf32>
    %248 = vector.extract_strided_slice %12 {offsets = [0, 5], sizes = [8, 1], strides = [1, 1]} : vector<8x8xf32> to vector<8x1xf32>
    %cst_52 = arith.constant 5.000000e-01 : f32
    %249 = vector.broadcast %cst_52 : f32 to vector<8x1xf32>
    %250 = arith.cmpf ogt, %248, %249 : vector<8x1xf32>
    %251 = arith.truncf %244 : vector<8x32xf32> to vector<8x32xbf16>
    %cst_53 = arith.constant dense<0.000000e+00> : vector<8x192xf32>
    %252 = tpu.matmul %251, %3, %cst_53 {dimension_numbers = #tpu.dot_dimension_numbers<[1], [0], [0], [1], [0, 0, 1, 1], [], []>} : vector<8x32xbf16>, vector<32x192xbf16>, vector<8x192xf32> -> vector<8x192xf32>
    %253 = vector.extract_strided_slice %252 {offsets = [0, 0], sizes = [8, 96], strides = [1, 1]} : vector<8x192xf32> to vector<8x96xf32>
    %254 = vector.extract_strided_slice %252 {offsets = [0, 96], sizes = [8, 96], strides = [1, 1]} : vector<8x192xf32> to vector<8x96xf32>
    %255 = vector.shape_cast %250 : vector<8x1xi1> to vector<8x1xi1>
    %256 = vector.broadcast %255 : vector<8x1xi1> to vector<8x96xi1>
    %257 = arith.select %256, %253, %254 : vector<8x96xi1>, vector<8x96xf32>
    %258 = vector.shape_cast %250 : vector<8x1xi1> to vector<8x1xi1>
    %259 = vector.broadcast %258 : vector<8x1xi1> to vector<8x96xi1>
    %260 = arith.select %259, %7, %10 : vector<8x96xi1>, vector<8x96xf32>
    %261 = arith.addf %257, %260 : vector<8x96xf32>
    %262 = vector.extract_strided_slice %247 {offsets = [0, 0], sizes = [8, 32], strides = [1, 1]} : vector<8x96xf32> to vector<8x32xf32>
    %263 = vector.extract_strided_slice %261 {offsets = [0, 0], sizes = [8, 32], strides = [1, 1]} : vector<8x96xf32> to vector<8x32xf32>
    %264 = arith.addf %262, %263 : vector<8x32xf32>
    %265 = arith.negf %264 : vector<8x32xf32>
    %266 = math.exp %265 : vector<8x32xf32>
    %cst_54 = arith.constant 1.000000e+00 : f32
    %267 = vector.broadcast %cst_54 : f32 to vector<8x32xf32>
    %268 = arith.addf %267, %266 : vector<8x32xf32>
    %269 = arith.divf %267, %268 : vector<8x32xf32>
    %270 = vector.extract_strided_slice %247 {offsets = [0, 32], sizes = [8, 32], strides = [1, 1]} : vector<8x96xf32> to vector<8x32xf32>
    %271 = vector.extract_strided_slice %261 {offsets = [0, 32], sizes = [8, 32], strides = [1, 1]} : vector<8x96xf32> to vector<8x32xf32>
    %272 = arith.addf %270, %271 : vector<8x32xf32>
    %273 = arith.negf %272 : vector<8x32xf32>
    %274 = math.exp %273 : vector<8x32xf32>
    %cst_55 = arith.constant 1.000000e+00 : f32
    %275 = vector.broadcast %cst_55 : f32 to vector<8x32xf32>
    %276 = arith.addf %275, %274 : vector<8x32xf32>
    %277 = arith.divf %275, %276 : vector<8x32xf32>
    %278 = vector.extract_strided_slice %247 {offsets = [0, 64], sizes = [8, 32], strides = [1, 1]} : vector<8x96xf32> to vector<8x32xf32>
    %279 = vector.extract_strided_slice %261 {offsets = [0, 64], sizes = [8, 32], strides = [1, 1]} : vector<8x96xf32> to vector<8x32xf32>
    %280 = arith.mulf %269, %279 : vector<8x32xf32>
    %281 = arith.addf %278, %280 : vector<8x32xf32>
    %282 = math.tanh %281 : vector<8x32xf32>
    %cst_56 = arith.constant 1.000000e+00 : f32
    %283 = vector.broadcast %cst_56 : f32 to vector<8x32xf32>
    %284 = arith.subf %283, %277 : vector<8x32xf32>
    %285 = arith.mulf %284, %282 : vector<8x32xf32>
    %286 = arith.mulf %277, %244 : vector<8x32xf32>
    %287 = arith.addf %285, %286 : vector<8x32xf32>
    %c5_i32 = arith.constant 5 : i32
    %288 = arith.addi %14, %c5_i32 : i32
    %c4_i32_57 = arith.constant 4 : i32
    %289 = arith.cmpi slt, %288, %c4_i32_57 : i32
    %290 = arith.select %289, %287, %244 : vector<8x32xf32>
    %c6 = arith.constant 6 : index
    %c0_58 = arith.constant 0 : index
    %c0_59 = arith.constant 0 : index
    %291 = vector.load %arg1[%c6, %c0_58, %c0_59] : memref<8x8x96xbf16, #tpu.memory_space<vmem>>, vector<1x8x96xbf16>
    %292 = vector.shape_cast %291 : vector<1x8x96xbf16> to vector<8x96xbf16>
    %293 = arith.extf %292 : vector<8x96xbf16> to vector<8x96xf32>
    %294 = vector.extract_strided_slice %12 {offsets = [0, 6], sizes = [8, 1], strides = [1, 1]} : vector<8x8xf32> to vector<8x1xf32>
    %cst_60 = arith.constant 5.000000e-01 : f32
    %295 = vector.broadcast %cst_60 : f32 to vector<8x1xf32>
    %296 = arith.cmpf ogt, %294, %295 : vector<8x1xf32>
    %297 = arith.truncf %290 : vector<8x32xf32> to vector<8x32xbf16>
    %cst_61 = arith.constant dense<0.000000e+00> : vector<8x192xf32>
    %298 = tpu.matmul %297, %3, %cst_61 {dimension_numbers = #tpu.dot_dimension_numbers<[1], [0], [0], [1], [0, 0, 1, 1], [], []>} : vector<8x32xbf16>, vector<32x192xbf16>, vector<8x192xf32> -> vector<8x192xf32>
    %299 = vector.extract_strided_slice %298 {offsets = [0, 0], sizes = [8, 96], strides = [1, 1]} : vector<8x192xf32> to vector<8x96xf32>
    %300 = vector.extract_strided_slice %298 {offsets = [0, 96], sizes = [8, 96], strides = [1, 1]} : vector<8x192xf32> to vector<8x96xf32>
    %301 = vector.shape_cast %296 : vector<8x1xi1> to vector<8x1xi1>
    %302 = vector.broadcast %301 : vector<8x1xi1> to vector<8x96xi1>
    %303 = arith.select %302, %299, %300 : vector<8x96xi1>, vector<8x96xf32>
    %304 = vector.shape_cast %296 : vector<8x1xi1> to vector<8x1xi1>
    %305 = vector.broadcast %304 : vector<8x1xi1> to vector<8x96xi1>
    %306 = arith.select %305, %7, %10 : vector<8x96xi1>, vector<8x96xf32>
    %307 = arith.addf %303, %306 : vector<8x96xf32>
    %308 = vector.extract_strided_slice %293 {offsets = [0, 0], sizes = [8, 32], strides = [1, 1]} : vector<8x96xf32> to vector<8x32xf32>
    %309 = vector.extract_strided_slice %307 {offsets = [0, 0], sizes = [8, 32], strides = [1, 1]} : vector<8x96xf32> to vector<8x32xf32>
    %310 = arith.addf %308, %309 : vector<8x32xf32>
    %311 = arith.negf %310 : vector<8x32xf32>
    %312 = math.exp %311 : vector<8x32xf32>
    %cst_62 = arith.constant 1.000000e+00 : f32
    %313 = vector.broadcast %cst_62 : f32 to vector<8x32xf32>
    %314 = arith.addf %313, %312 : vector<8x32xf32>
    %315 = arith.divf %313, %314 : vector<8x32xf32>
    %316 = vector.extract_strided_slice %293 {offsets = [0, 32], sizes = [8, 32], strides = [1, 1]} : vector<8x96xf32> to vector<8x32xf32>
    %317 = vector.extract_strided_slice %307 {offsets = [0, 32], sizes = [8, 32], strides = [1, 1]} : vector<8x96xf32> to vector<8x32xf32>
    %318 = arith.addf %316, %317 : vector<8x32xf32>
    %319 = arith.negf %318 : vector<8x32xf32>
    %320 = math.exp %319 : vector<8x32xf32>
    %cst_63 = arith.constant 1.000000e+00 : f32
    %321 = vector.broadcast %cst_63 : f32 to vector<8x32xf32>
    %322 = arith.addf %321, %320 : vector<8x32xf32>
    %323 = arith.divf %321, %322 : vector<8x32xf32>
    %324 = vector.extract_strided_slice %293 {offsets = [0, 64], sizes = [8, 32], strides = [1, 1]} : vector<8x96xf32> to vector<8x32xf32>
    %325 = vector.extract_strided_slice %307 {offsets = [0, 64], sizes = [8, 32], strides = [1, 1]} : vector<8x96xf32> to vector<8x32xf32>
    %326 = arith.mulf %315, %325 : vector<8x32xf32>
    %327 = arith.addf %324, %326 : vector<8x32xf32>
    %328 = math.tanh %327 : vector<8x32xf32>
    %cst_64 = arith.constant 1.000000e+00 : f32
    %329 = vector.broadcast %cst_64 : f32 to vector<8x32xf32>
    %330 = arith.subf %329, %323 : vector<8x32xf32>
    %331 = arith.mulf %330, %328 : vector<8x32xf32>
    %332 = arith.mulf %323, %290 : vector<8x32xf32>
    %333 = arith.addf %331, %332 : vector<8x32xf32>
    %c6_i32 = arith.constant 6 : i32
    %334 = arith.addi %14, %c6_i32 : i32
    %c4_i32_65 = arith.constant 4 : i32
    %335 = arith.cmpi slt, %334, %c4_i32_65 : i32
    %336 = arith.select %335, %333, %290 : vector<8x32xf32>
    %c7 = arith.constant 7 : index
    %c0_66 = arith.constant 0 : index
    %c0_67 = arith.constant 0 : index
    %337 = vector.load %arg1[%c7, %c0_66, %c0_67] : memref<8x8x96xbf16, #tpu.memory_space<vmem>>, vector<1x8x96xbf16>
    %338 = vector.shape_cast %337 : vector<1x8x96xbf16> to vector<8x96xbf16>
    %339 = arith.extf %338 : vector<8x96xbf16> to vector<8x96xf32>
    %340 = vector.extract_strided_slice %12 {offsets = [0, 7], sizes = [8, 1], strides = [1, 1]} : vector<8x8xf32> to vector<8x1xf32>
    %cst_68 = arith.constant 5.000000e-01 : f32
    %341 = vector.broadcast %cst_68 : f32 to vector<8x1xf32>
    %342 = arith.cmpf ogt, %340, %341 : vector<8x1xf32>
    %343 = arith.truncf %336 : vector<8x32xf32> to vector<8x32xbf16>
    %cst_69 = arith.constant dense<0.000000e+00> : vector<8x192xf32>
    %344 = tpu.matmul %343, %3, %cst_69 {dimension_numbers = #tpu.dot_dimension_numbers<[1], [0], [0], [1], [0, 0, 1, 1], [], []>} : vector<8x32xbf16>, vector<32x192xbf16>, vector<8x192xf32> -> vector<8x192xf32>
    %345 = vector.extract_strided_slice %344 {offsets = [0, 0], sizes = [8, 96], strides = [1, 1]} : vector<8x192xf32> to vector<8x96xf32>
    %346 = vector.extract_strided_slice %344 {offsets = [0, 96], sizes = [8, 96], strides = [1, 1]} : vector<8x192xf32> to vector<8x96xf32>
    %347 = vector.shape_cast %342 : vector<8x1xi1> to vector<8x1xi1>
    %348 = vector.broadcast %347 : vector<8x1xi1> to vector<8x96xi1>
    %349 = arith.select %348, %345, %346 : vector<8x96xi1>, vector<8x96xf32>
    %350 = vector.shape_cast %342 : vector<8x1xi1> to vector<8x1xi1>
    %351 = vector.broadcast %350 : vector<8x1xi1> to vector<8x96xi1>
    %352 = arith.select %351, %7, %10 : vector<8x96xi1>, vector<8x96xf32>
    %353 = arith.addf %349, %352 : vector<8x96xf32>
    %354 = vector.extract_strided_slice %339 {offsets = [0, 0], sizes = [8, 32], strides = [1, 1]} : vector<8x96xf32> to vector<8x32xf32>
    %355 = vector.extract_strided_slice %353 {offsets = [0, 0], sizes = [8, 32], strides = [1, 1]} : vector<8x96xf32> to vector<8x32xf32>
    %356 = arith.addf %354, %355 : vector<8x32xf32>
    %357 = arith.negf %356 : vector<8x32xf32>
    %358 = math.exp %357 : vector<8x32xf32>
    %cst_70 = arith.constant 1.000000e+00 : f32
    %359 = vector.broadcast %cst_70 : f32 to vector<8x32xf32>
    %360 = arith.addf %359, %358 : vector<8x32xf32>
    %361 = arith.divf %359, %360 : vector<8x32xf32>
    %362 = vector.extract_strided_slice %339 {offsets = [0, 32], sizes = [8, 32], strides = [1, 1]} : vector<8x96xf32> to vector<8x32xf32>
    %363 = vector.extract_strided_slice %353 {offsets = [0, 32], sizes = [8, 32], strides = [1, 1]} : vector<8x96xf32> to vector<8x32xf32>
    %364 = arith.addf %362, %363 : vector<8x32xf32>
    %365 = arith.negf %364 : vector<8x32xf32>
    %366 = math.exp %365 : vector<8x32xf32>
    %cst_71 = arith.constant 1.000000e+00 : f32
    %367 = vector.broadcast %cst_71 : f32 to vector<8x32xf32>
    %368 = arith.addf %367, %366 : vector<8x32xf32>
    %369 = arith.divf %367, %368 : vector<8x32xf32>
    %370 = vector.extract_strided_slice %339 {offsets = [0, 64], sizes = [8, 32], strides = [1, 1]} : vector<8x96xf32> to vector<8x32xf32>
    %371 = vector.extract_strided_slice %353 {offsets = [0, 64], sizes = [8, 32], strides = [1, 1]} : vector<8x96xf32> to vector<8x32xf32>
    %372 = arith.mulf %361, %371 : vector<8x32xf32>
    %373 = arith.addf %370, %372 : vector<8x32xf32>
    %374 = math.tanh %373 : vector<8x32xf32>
    %cst_72 = arith.constant 1.000000e+00 : f32
    %375 = vector.broadcast %cst_72 : f32 to vector<8x32xf32>
    %376 = arith.subf %375, %369 : vector<8x32xf32>
    %377 = arith.mulf %376, %374 : vector<8x32xf32>
    %378 = arith.mulf %369, %336 : vector<8x32xf32>
    %379 = arith.addf %377, %378 : vector<8x32xf32>
    %c7_i32 = arith.constant 7 : i32
    %380 = arith.addi %14, %c7_i32 : i32
    %c4_i32_73 = arith.constant 4 : i32
    %381 = arith.cmpi slt, %380, %c4_i32_73 : i32
    %382 = arith.select %381, %379, %336 : vector<8x32xf32>
    %c0_74 = arith.constant 0 : index
    %c0_75 = arith.constant 0 : index
    %383 = vector.load %arg15[%c0_74, %c0_75] : memref<8x32xf32, #tpu.memory_space<vmem>>, vector<8x32xf32>
    tpu.vector_store %arg15[%c0_74, %c0_75], %382 {strides = array<i32>} : memref<8x32xf32, #tpu.memory_space<vmem>>, vector<8x32xf32>,
    %c0_i32_76 = arith.constant 0 : i32
    %384 = arith.cmpi eq, %arg0, %c0_i32_76 : i32
    %385 = arith.extui %384 : i1 to i32
    %c0_i32_77 = arith.constant 0 : i32
    %386 = arith.cmpi ne, %385, %c0_i32_77 : i32
    scf.if %386 {
      %387 = arith.truncf %382 : vector<8x32xf32> to vector<8x32xbf16>
      %c0_78 = arith.constant 0 : index
      %c0_79 = arith.constant 0 : index
      %388 = vector.load %arg6[%c0_78, %c0_79] : memref<32x32xbf16, #tpu.memory_space<vmem>>, vector<32x32xbf16>
      %cst_80 = arith.constant dense<0.000000e+00> : vector<8x32xf32>
      %389 = tpu.matmul %387, %388, %cst_80 {dimension_numbers = #tpu.dot_dimension_numbers<[1], [0], [0], [1], [0, 0, 1, 1], [], []>} : vector<8x32xbf16>, vector<32x32xbf16>, vector<8x32xf32> -> vector<8x32xf32>
      %c0_81 = arith.constant 0 : index
      %c0_82 = arith.constant 0 : index
      %390 = vector.load %arg7[%c0_81, %c0_82] : memref<1x32xf32, #tpu.memory_space<vmem>>, vector<1x32xf32>
      %391 = vector.broadcast %390 : vector<1x32xf32> to vector<8x32xf32>
      %392 = arith.addf %389, %391 : vector<8x32xf32>
      %393 = vector.extract_strided_slice %392 {offsets = [0, 0], sizes = [8, 16], strides = [1, 1]} : vector<8x32xf32> to vector<8x16xf32>
      %394 = vector.extract_strided_slice %392 {offsets = [0, 16], sizes = [8, 16], strides = [1, 1]} : vector<8x32xf32> to vector<8x16xf32>
      %cst_83 = arith.constant 5.000000e-01 : f32
      %395 = vector.broadcast %cst_83 : f32 to vector<8x16xf32>
      %396 = arith.mulf %395, %394 : vector<8x16xf32>
      %397 = math.exp %396 : vector<8x16xf32>
      %c0_84 = arith.constant 0 : index
      %c0_85 = arith.constant 0 : index
      %398 = vector.load %arg10[%c0_84, %c0_85] : memref<8x16xf32, #tpu.memory_space<vmem>>, vector<8x16xf32>
      %399 = arith.mulf %398, %397 : vector<8x16xf32>
      %400 = arith.addf %399, %393 : vector<8x16xf32>
      %401 = arith.truncf %400 : vector<8x16xf32> to vector<8x16xbf16>
      %c0_86 = arith.constant 0 : index
      %c0_87 = arith.constant 0 : index
      %402 = vector.load %arg8[%c0_86, %c0_87] : memref<16x32xbf16, #tpu.memory_space<vmem>>, vector<16x32xbf16>
      %cst_88 = arith.constant dense<0.000000e+00> : vector<8x32xf32>
      %403 = tpu.matmul %401, %402, %cst_88 {dimension_numbers = #tpu.dot_dimension_numbers<[1], [0], [0], [1], [0, 0, 1, 1], [], []>} : vector<8x16xbf16>, vector<16x32xbf16>, vector<8x32xf32> -> vector<8x32xf32>
      %c0_89 = arith.constant 0 : index
      %c0_90 = arith.constant 0 : index
      %404 = vector.load %arg9[%c0_89, %c0_90] : memref<1x32xf32, #tpu.memory_space<vmem>>, vector<1x32xf32>
      %405 = vector.broadcast %404 : vector<1x32xf32> to vector<8x32xf32>
      %406 = arith.addf %403, %405 : vector<8x32xf32>
      %c0_91 = arith.constant 0 : index
      %c0_92 = arith.constant 0 : index
      %407 = vector.load %arg11[%c0_91, %c0_92] : memref<8x16xf32, #tpu.memory_space<vmem>>, vector<8x16xf32>
      tpu.vector_store %arg11[%c0_91, %c0_92], %393 {strides = array<i32>} : memref<8x16xf32, #tpu.memory_space<vmem>>, vector<8x16xf32>,
      %c0_93 = arith.constant 0 : index
      %c0_94 = arith.constant 0 : index
      %408 = vector.load %arg12[%c0_93, %c0_94] : memref<8x16xf32, #tpu.memory_space<vmem>>, vector<8x16xf32>
      tpu.vector_store %arg12[%c0_93, %c0_94], %394 {strides = array<i32>} : memref<8x16xf32, #tpu.memory_space<vmem>>, vector<8x16xf32>,
      %c0_95 = arith.constant 0 : index
      %c0_96 = arith.constant 0 : index
      %409 = vector.load %arg13[%c0_95, %c0_96] : memref<8x16xf32, #tpu.memory_space<vmem>>, vector<8x16xf32>
      tpu.vector_store %arg13[%c0_95, %c0_96], %400 {strides = array<i32>} : memref<8x16xf32, #tpu.memory_space<vmem>>, vector<8x16xf32>,
      %c0_97 = arith.constant 0 : index
      %c0_98 = arith.constant 0 : index
      %410 = vector.load %arg14[%c0_97, %c0_98] : memref<8x32xf32, #tpu.memory_space<vmem>>, vector<8x32xf32>
      tpu.vector_store %arg14[%c0_97, %c0_98], %406 {strides = array<i32>} : memref<8x32xf32, #tpu.memory_space<vmem>>, vector<8x32xf32>,
    } else {
    }
    return
  }
  func.func @transform_0(%arg0: i32) -> (i32, i32, i32) {
    %c0_i32 = arith.constant 0 : i32
    %c0_i32_0 = arith.constant 0 : i32
    %c0_i32_1 = arith.constant 0 : i32
    return %arg0, %c0_i32, %c0_i32_0 : i32, i32, i32
  }
  func.func @transform_1(%arg0: i32) -> (i32, i32, i32) {
    %c0_i32 = arith.constant 0 : i32
    %c0_i32_0 = arith.constant 0 : i32
    %c0_i32_1 = arith.constant 0 : i32
    return %arg0, %c0_i32, %c0_i32_0 : i32, i32, i32
  }
  func.func @transform_2(%arg0: i32) -> (i32, i32) {
    %c0_i32 = arith.constant 0 : i32
    %c0_i32_0 = arith.constant 0 : i32
    %c0_i32_1 = arith.constant 0 : i32
    return %c0_i32, %c0_i32_0 : i32, i32
  }
  func.func @transform_3(%arg0: i32) -> (i32, i32) {
    %c0_i32 = arith.constant 0 : i32
    %c0_i32_0 = arith.constant 0 : i32
    %c0_i32_1 = arith.constant 0 : i32
    return %c0_i32, %c0_i32_0 : i32, i32
  }
  func.func @transform_4(%arg0: i32) -> (i32, i32) {
    %c0_i32 = arith.constant 0 : i32
    %c0_i32_0 = arith.constant 0 : i32
    %c0_i32_1 = arith.constant 0 : i32
    return %c0_i32, %c0_i32_0 : i32, i32
  }
  func.func @transform_5(%arg0: i32) -> (i32, i32) {
    %c0_i32 = arith.constant 0 : i32
    %c0_i32_0 = arith.constant 0 : i32
    %c0_i32_1 = arith.constant 0 : i32
    return %c0_i32, %c0_i32_0 : i32, i32
  }
  func.func @transform_6(%arg0: i32) -> (i32, i32) {
    %c0_i32 = arith.constant 0 : i32
    %c0_i32_0 = arith.constant 0 : i32
    %c0_i32_1 = arith.constant 0 : i32
    return %c0_i32, %c0_i32_0 : i32, i32
  }
  func.func @transform_7(%arg0: i32) -> (i32, i32) {
    %c0_i32 = arith.constant 0 : i32
    %c0_i32_0 = arith.constant 0 : i32
    %c0_i32_1 = arith.constant 0 : i32
    return %c0_i32, %c0_i32_0 : i32, i32
  }
  func.func @transform_8(%arg0: i32) -> (i32, i32) {
    %c0_i32 = arith.constant 0 : i32
    %c0_i32_0 = arith.constant 0 : i32
    %c0_i32_1 = arith.constant 0 : i32
    return %c0_i32, %c0_i32_0 : i32, i32
  }
  func.func @transform_9(%arg0: i32) -> (i32, i32) {
    %c0_i32 = arith.constant 0 : i32
    %c0_i32_0 = arith.constant 0 : i32
    %c0_i32_1 = arith.constant 0 : i32
    return %c0_i32, %c0_i32_0 : i32, i32
  }
  func.func @transform_10(%arg0: i32) -> (i32, i32) {
    %c0_i32 = arith.constant 0 : i32
    %c0_i32_0 = arith.constant 0 : i32
    %c0_i32_1 = arith.constant 0 : i32
    return %c0_i32, %c0_i32_0 : i32, i32
  }
  func.func @transform_11(%arg0: i32) -> (i32, i32) {
    %c0_i32 = arith.constant 0 : i32
    %c0_i32_0 = arith.constant 0 : i32
    %c0_i32_1 = arith.constant 0 : i32
    return %c0_i32, %c0_i32_0 : i32, i32
  }
  func.func @transform_12(%arg0: i32) -> (i32, i32) {
    %c0_i32 = arith.constant 0 : i32
    %c0_i32_0 = arith.constant 0 : i32
    %c0_i32_1 = arith.constant 0 : i32
    return %c0_i32, %c0_i32_0 : i32, i32
  }
  func.func @transform_13(%arg0: i32) -> (i32, i32) {
    %c0_i32 = arith.constant 0 : i32
    %c0_i32_0 = arith.constant 0 : i32
    %c0_i32_1 = arith.constant 0 : i32
    return %c0_i32, %c0_i32_0 : i32, i32
  }
}

</mosaic_0001>

<llo_original>
// kernel: vrnn_forward.7
$region0: #{vrnn_forward.7}
  #allocation0 [shape = 'u32[]', space=smem, size = 0x4, offset = 0x4, fixed_abs, tag = 'smem constant byte address 0x4 - core index']
  #allocation1 [shape = 'u32[144,128]{1,0:T(1,128)}', space=vmem, size = 0x12000, scoped, tag = 'internal scratch']
  %s0 = inlined_call_operand.vmem [shape: bf16[32,32], index: 0, kind: input, shape index: {}]
  %s1 = inlined_call_operand.vmem [shape: bf16[32,64], index: 1, kind: input, shape index: {}]
  %s2 = inlined_call_operand.vmem [shape: f32[1,64], index: 2, kind: input, shape index: {}]
  %s3 = inlined_call_operand.hbm [shape: f32[32,64], index: 3, kind: output, shape index: {}]
  %s4 = sld [smem:[#allocation0]]
  $region45: #{vrnn_forward.7} parent=0
    _
  %s6 = ssub.s32 1, %s4
  %s7 = scalar_select 0, %s6, %s4
  $region1: #{vrnn_forward.7} parent=0
    #allocation2 [shape = 'u8[16384]{0}', space=vmem, size = 0x4000, scoped, tag = 'output window, operand 0']
    #allocation3 [shape = 's32[2]{0}', space=sflag, size = 0x8, scoped, tag = 'scoped memory for vrnn_forward.7']
    %8 = vsyncpa [#allocation3], 0
    %s9 = scalar_lea.sflag [#allocation3], 1
    %10 = vsyncpa %s9, 0
    loop: start=0, step=1, limit=4
    $region2: #{vrnn_forward.7} parent=1 // loop_pre_header
      _
    $region3: #{vrnn_forward.7} parent=1 // loop_header
      %s12 = sphi 0, %s16
      %p13 = scmp.ge.s32.totalorder %s12, 4
      %s22 = sphi 0, %s24
      %s25 = sphi 0, %s22
      %s26 = sphi 0, %s25
      %s42 = sphi 0, %s26
      %s46 = sphi 0, %s46
      %s48 = sphi 0, %s46
      %s49 = sphi 0, %s48
      %s63 = sphi 0, %s49
      %s67 = sphi 0, %s67
      %s69 = sphi 0, %s67
      %s70 = sphi 0, %s69
      %s84 = sphi 0, %s70
      %s90 = sphi 0, %s92
      %s93 = sphi 0, %s90
      %s94 = sphi 0, %s93
      %s110 = sphi 0, %s94
    $region4: #{vrnn_forward.7} parent=1 // loop_header_branch
      %15 = sbr.rel (%p13) target = $region8
    $region5: #{vrnn_forward.7} parent=1 // loop_body
      %s17 = ssub.s32 %s12, 1
      %s18 = ssub.s32 %s12, 2
      %s19 = sadd.s32 %s12, 1
      %s20 = ssub.s32 %s12, %s19
      %p21 = scmp.eq.s32.totalorder %s20, 0
      %s23 = sadd.s32 %s22, 1
      %s24 = scalar_select %p21, %s22, %s23
      %p27 = pneg %p21
      %p28 = scmp.eq.s32.totalorder %s12, 1
      %p29 = por %p27, %p28
      %p30 = scmp.ne.s32.totalorder %s22, %s25
      %p31 = scmp.eq.s32.totalorder %s12, 0
      %p32 = por %p30, %p31
      %p33 = scmp.ne.s32.totalorder %s22, %s25
      %p34 = scmp.eq.s32.totalorder %s17, 1
      %p35 = por %p33, %p34
      %p36 = scmp.ne.s32.totalorder %s25, %s26
      %p37 = scmp.eq.s32.totalorder %s17, 0
      %p38 = por %p36, %p37
      %p39 = scmp.ne.s32.totalorder %s25, %s26
      %p40 = scmp.eq.s32.totalorder %s18, 1
      %p41 = por %p39, %p40
      %p43 = scmp.ne.s32.totalorder %s26, %s42
      %p44 = scmp.eq.s32.totalorder %s18, 0
      %p45 = por %p43, %p44
      %s47 = sadd.s32 %s46, 1
      %p50 = scmp.eq.s32.totalorder %s12, 1
      %p51 = scmp.ne.s32.totalorder %s46, %s48
      %p52 = scmp.eq.s32.totalorder %s12, 0
      %p53 = por %p51, %p52
      %p54 = scmp.ne.s32.totalorder %s46, %s48
      %p55 = scmp.eq.s32.totalorder %s17, 1
      %p56 = por %p54, %p55
      %p57 = scmp.ne.s32.totalorder %s48, %s49
      %p58 = scmp.eq.s32.totalorder %s17, 0
      %p59 = por %p57, %p58
      %p60 = scmp.ne.s32.totalorder %s48, %s49
      %p61 = scmp.eq.s32.totalorder %s18, 1
      %p62 = por %p60, %p61
      %p64 = scmp.ne.s32.totalorder %s49, %s63
      %p65 = scmp.eq.s32.totalorder %s18, 0
      %p66 = por %p64, %p65
      %s68 = sadd.s32 %s67, 1
      %p71 = scmp.eq.s32.totalorder %s12, 1
      %p72 = scmp.ne.s32.totalorder %s67, %s69
      %p73 = scmp.eq.s32.totalorder %s12, 0
      %p74 = por %p72, %p73
      %p75 = scmp.ne.s32.totalorder %s67, %s69
      %p76 = scmp.eq.s32.totalorder %s17, 1
      %p77 = por %p75, %p76
      %p78 = scmp.ne.s32.totalorder %s69, %s70
      %p79 = scmp.eq.s32.totalorder %s17, 0
      %p80 = por %p78, %p79
      %p81 = scmp.ne.s32.totalorder %s69, %s70
      %p82 = scmp.eq.s32.totalorder %s18, 1
      %p83 = por %p81, %p82
      %p85 = scmp.ne.s32.totalorder %s70, %s84
      %p86 = scmp.eq.s32.totalorder %s18, 0
      %p87 = por %p85, %p86
      %s88 = ssub.s32 %s12, %s19
      %p89 = scmp.eq.s32.totalorder %s88, 0
      %s91 = sadd.s32 %s90, 1
      %s92 = scalar_select %p89, %s90, %s91
      %p95 = pneg %p89
      %p96 = scmp.eq.s32.totalorder %s12, 1
      %p97 = por %p95, %p96
      %p98 = scmp.ne.s32.totalorder %s90, %s93
      %p99 = scmp.eq.s32.totalorder %s12, 0
      %p100 = por %p98, %p99
      %p101 = scmp.ne.s32.totalorder %s90, %s93
      %p102 = scmp.eq.s32.totalorder %s17, 1
      %p103 = por %p101, %p102
      %p104 = scmp.ne.s32.totalorder %s93, %s94
      %p105 = scmp.eq.s32.totalorder %s17, 0
      %p106 = por %p104, %p105
      %p107 = scmp.ne.s32.totalorder %s93, %s94
      %p108 = scmp.eq.s32.totalorder %s18, 1
      %p109 = por %p107, %p108
      %p111 = scmp.ne.s32.totalorder %s94, %s110
      %p112 = scmp.eq.s32.totalorder %s18, 0
      %p113 = por %p111, %p112
      %p114 = scmp.le.s32.totalorder 1, %s12
      %p115 = scmp.lt.s32.totalorder %s12, 3
      %p116 = pnand %p114, %p115
      %p117 = pneg %p116
      // Predicated region
      $region9: #{vrnn_forward.7} parent=5 // pred_check
        _
      $region10: #{vrnn_forward.7} parent=5 // pred_check_branch
        %119 = sbr.rel (%p116) target = $region12
      $region11: #{vrnn_forward.7} parent=5 // pred_region
        %s120 = ssub.s32 %s12, 1
        // Predicated region
        $region13: #{vrnn_forward.7} parent=11 // pred_check
          %p121 = pneg %p59
        $region14: #{vrnn_forward.7} parent=11 // pred_check_branch
          %123 = sbr.rel (%p121) target = $region16
        $region15: #{vrnn_forward.7} parent=11 // pred_region
          _
        $region16: #{vrnn_forward.7} parent=11 // pred_fallthru
          _
        // Predicated region
        $region17: #{vrnn_forward.7} parent=11 // pred_check
          %p124 = pneg %p80
        $region18: #{vrnn_forward.7} parent=11 // pred_check_branch
          %126 = sbr.rel (%p124) target = $region20
        $region19: #{vrnn_forward.7} parent=11 // pred_region
          _
        $region20: #{vrnn_forward.7} parent=11 // pred_fallthru
          _
      $region12: #{vrnn_forward.7} parent=5 // pred_fallthru
        _
      %p127 = scmp.lt.s32.totalorder %s12, 2
      // Predicated region
      $region21: #{vrnn_forward.7} parent=5 // pred_check
        %p128 = pneg %p127
      $region22: #{vrnn_forward.7} parent=5 // pred_check_branch
        %130 = sbr.rel (%p128) target = $region24
      $region23: #{vrnn_forward.7} parent=5 // pred_region
        // Predicated region
        $region25: #{vrnn_forward.7} parent=23 // pred_check
          %p131 = pneg %p32
        $region26: #{vrnn_forward.7} parent=23 // pred_check_branch
          %133 = sbr.rel (%p131) target = $region28
        $region27: #{vrnn_forward.7} parent=23 // pred_region
          %s134 = smul.u32 2, %s12
          %p135 = scmp.lt.s32.totalorder %s134, 3
          %s136 = scalar_select %p135, %s134, 3
          %s137 = smul.addr %s136, 4
          %s138 = scalar_lea.vmem %s0, %s137
          %s139 = smul.u32 2, %s12
        $region28: #{vrnn_forward.7} parent=23 // pred_fallthru
          _
      $region24: #{vrnn_forward.7} parent=5 // pred_fallthru
        _
      %p140 = scmp.le.s32.totalorder 1, %s12
      %p141 = scmp.lt.s32.totalorder %s12, 3
      %p142 = pnand %p140, %p141
      %p143 = pneg %p142
      // Predicated region
      $region29: #{vrnn_forward.7} parent=5 // pred_check
        _
      $region30: #{vrnn_forward.7} parent=5 // pred_check_branch
        %145 = sbr.rel (%p142) target = $region32
      $region31: #{vrnn_forward.7} parent=5 // pred_region
        %s146 = ssub.s32 %s12, 1
        %s147 = smul.u32 2, %s17
        %p148 = scmp.lt.s32.totalorder %s147, 3
        %s149 = scalar_select %p148, %s147, 3
        %s150 = smul.addr %s149, 4
        %s151 = scalar_lea.vmem %s0, %s150
        %p152 = pneg %p38
        %p153 = pneg %p35
        %p154 = pneg %p59
        %p155 = pneg %p56
        %p156 = pneg %p80
        %p157 = pneg %p77
        %p158 = pneg %p106
        %p159 = pneg %p103
        %s160 = sand.u32 %s93, 1
        %s161 = scalar_lea.sflag [#allocation3], %s160
        %s162 = sand.u32 %s93, 1
        %s163 = smul.addr %s162, 16
        %s164 = scalar_lea.vmem [#allocation2], %s163
        %s165 = smul.u32 2, %s17
        %p166 = scmp.lt.s32.totalorder %s165, 3
        %s167 = scalar_select %p166, %s165, 3
        %s168 = smul.addr %s167, 4
        %s169 = scalar_lea.vmem %s0, %s168
        %s170 = smul.u32 2, %s17
        %s171 = smul.u32 2, %s17
        %v173 = vld [vmem:[%s169] sm:$0xf]
        %v174 = vld [vmem:[%s169 + $0x4] sm:$0xf]
        %v175 = vld [vmem:[%s1] sm:$0xf]
        %v176 = vld [vmem:[%s1 + $0x4] sm:$0xf]
        %v177 = vld [vmem:[%s1 + $0x8] sm:$0xf]
        %v178 = vld [vmem:[%s1 + $0xc] sm:$0xf]
        %v179 = vld [vmem:[%s2] sm:$0x1]
        %v181 = vlaneseq
        %v182 = vshrl.u32 %v181, 7
        %v183 = vsub.s32 0, %v182
        %v184 = vrot.slane %v179, %v183
        %v188 = vunpack.c.l.b16 %v173
        %v189 = vunpack.c.l.b16 %v174
        %v190 = vpack.c.b16 %v189, %v188
        %v195 = vunpack.c.l.b16 %v175
        %v196 = vunpack.c.l.b16 %v176
        %v197 = vunpack.c.l.b16 %v177
        %v198 = vunpack.c.l.b16 %v178
        %v199 = vpack.c.b16 %v196, %v195
        %v200 = vpack.c.b16 %v198, %v197
        %vm203 = vcmask 261120
        %v205 = vsel %vm203, %v190, 0
        %207 = vmatprep.subr.bf16.mxu0 0
        %208 = vmatpush1.bf16.msra.mxu0 %v199
        %209 = vmatprep.subr.bf16.mxu0 0
        %210 = vmatpush1.bf16.msra.mxu0 %v200
        %211 = vmatprep.subr.bf16.mxu0 0
        %212 = vmatpush1.bf16.msra.mxu0 0
        %213 = vmatprep.subr.bf16.mxu0 0
        %214 = vmatpush1.bf16.msra.mxu0 0
        %215 = vmatprep.subr.bf16.mxu0 0
        %216 = vmatpush1.bf16.msra.mxu0 0
        %217 = vmatprep.subr.bf16.mxu0 0
        %218 = vmatpush1.bf16.msra.mxu0 0
        %219 = vmatprep.subr.bf16.mxu0 0
        %220 = vmatpush1.bf16.msra.mxu0 0
        %221 = vmatprep.subr.bf16.mxu0 0
        %222 = vmatpush1.bf16.msra.mxu0 0
        %223 = vmatprep.subr.bf16.mxu0 0
        %224 = vmatpush1.bf16.msra.mxu0 0
        %225 = vmatprep.subr.bf16.mxu0 0
        %226 = vmatpush1.bf16.msra.mxu0 0
        %227 = vmatprep.subr.bf16.mxu0 0
        %228 = vmatpush1.bf16.msra.mxu0 0
        %229 = vmatprep.subr.bf16.mxu0 0
        %230 = vmatpush1.bf16.msra.mxu0 0
        %231 = vmatprep.subr.bf16.mxu0 0
        %232 = vmatpush1.bf16.msra.mxu0 0
        %233 = vmatprep.subr.bf16.mxu0 0
        %234 = vmatpush1.bf16.msra.mxu0 0
        %235 = vmatprep.subr.bf16.mxu0 0
        %236 = vmatpush1.bf16.msra.mxu0 0
        %237 = vmatprep.subr.bf16.mxu0 0
        %238 = vmatpush1.bf16.msra.mxu0 0
        %239 = vmatprep.mubr.bf16.mxu0 0
        %240 = vmatmul.mubr.bf16.gmra.mrb[0].mxu0 %v205
        %v241 = vpop.f32.mrb[0].mxu0
        %v242 = vadd.f32 %v184, %v241
        %v243 = vpop.f32.mrb[0].mxu0
        %v244 = vpop.f32.mrb[0].mxu0
        %v245 = vadd.f32 %v184, %v244
        %v246 = vpop.f32.mrb[0].mxu0
        %247 = vdwg.mxu0
        %vm248 = vcmask 523264
        %v249 = vsel %vm248, %v242, -inf
        %250 = vmax.xlane.f32.xlu0 %v249
        %v251 = vpop.xlane.xlu0 %250
        %v252 = vsel %vm248, %v245, -inf
        %253 = vmax.xlane.f32.xlu0 %v252
        %v254 = vpop.xlane.xlu0 %253
        %v255 = vsub.f32 %v242, %v251
        %v256 = vsub.f32 %v245, %v254
        %v257 = vmul.f32 %v255, 1.442695
        %v258 = vpow.pop %v257
        %v259 = vmul.f32 %v256, 1.442695
        %v260 = vpow.pop %v259
        %v261 = vsel %vm248, %v258, 0.0
        %262 = vadd.xlane.f32.xlu0 %v261
        %v263 = vpop.xlane.xlu0 %262
        %v264 = vsel %vm248, %v260, 0.0
        %265 = vadd.xlane.f32.xlu0 %v264
        %v266 = vpop.xlane.xlu0 %265
        %v267 = vlog2.pop %v263
        %v268 = vmul.f32 %v267, 0.6931472
        %v269 = vlog2.pop %v266
        %v270 = vmul.f32 %v269, 0.6931472
        %v271 = vadd.f32 %v251, %v268
        %v272 = vadd.f32 %v254, %v270
        %v273 = vsub.f32 %v242, %v271
        %v274 = vsub.f32 %v245, %v272
        %275 = vst.msk [vmem:[%s164] sm:$0xff] %vm248, %v273
        %276 = vst.msk [vmem:[%s164 + $0x8] sm:$0xff] %vm248, %v274
        %s277 = sand.u32 %s93, 1
        %s278 = scalar_lea.sflag [#allocation3], %s277
        %s279 = sand.u32 %s93, 1
        %s280 = smul.addr %s279, 16
        %s281 = scalar_lea.vmem [#allocation2], %s280
        // Predicated region
        $region33: #{vrnn_forward.7} parent=31 // pred_check
          %p282 = pneg %p103
        $region34: #{vrnn_forward.7} parent=31 // pred_check_branch
          %284 = sbr.rel (%p282) target = $region36
        $region35: #{vrnn_forward.7} parent=31 // pred_region
          %s285 = smul.u32 2, %s17
          %s287 = ssub.s32 256, 256
          %288 = vsyncadd %s278, %s287
          %s289 = smul.addr %s285, 128
          %s290 = scalar_lea.hbm %s3, %s289
          %s291 = sshll.u32 %s281, 4
          %s292 = int_to_ptr.vmem [resolvable:$true] %s291
          %297 = dma.vmem_to_hbm [thread:$0]  %s292, 256, %s290, %s278, 128, 128, 8
        $region36: #{vrnn_forward.7} parent=31 // pred_fallthru
          _
      $region32: #{vrnn_forward.7} parent=5 // pred_fallthru
        _
      %p298 = scmp.le.s32.totalorder 2, %s12
      // Predicated region
      $region37: #{vrnn_forward.7} parent=5 // pred_check
        %p299 = pneg %p298
      $region38: #{vrnn_forward.7} parent=5 // pred_check_branch
        %301 = sbr.rel (%p299) target = $region40
      $region39: #{vrnn_forward.7} parent=5 // pred_region
        %s302 = ssub.s32 %s12, 2
        // Predicated region
        $region41: #{vrnn_forward.7} parent=39 // pred_check
          %p303 = pneg %p109
        $region42: #{vrnn_forward.7} parent=39 // pred_check_branch
          %305 = sbr.rel (%p303) target = $region44
        $region43: #{vrnn_forward.7} parent=39 // pred_region
          %s306 = sand.u32 %s94, 1
          %s307 = scalar_lea.sflag [#allocation3], %s306
          %s308 = sand.u32 %s94, 1
          %s309 = smul.addr %s308, 16
          %s310 = scalar_lea.vmem [#allocation2], %s309
          %311 = dma.done %s307, 256
        $region44: #{vrnn_forward.7} parent=39 // pred_fallthru
          _
      $region40: #{vrnn_forward.7} parent=5 // pred_fallthru
        _
    $region6: #{vrnn_forward.7} parent=1 // loop_footer
      %s16 = sadd.s32 1, %s12
    $region7: #{vrnn_forward.7} parent=1 // loop_footer_branch
      %11 = sbr.rel target = $region3
    $region8: #{vrnn_forward.7} parent=1 // loop_exit
      _
    %312 = vsyncpa [#allocation3], 1
    %s313 = scalar_lea.sflag [#allocation3], 1
    %314 = vsyncpa %s313, 1

// kernel: vrnn_forward.4
$region0: #{vrnn_forward.4}
  #allocation0 [shape = 'u32[]', space=smem, size = 0x4, offset = 0x4, fixed_abs, tag = 'smem constant byte address 0x4 - core index']
  #allocation1 [shape = 'u32[144,128]{1,0:T(1,128)}', space=vmem, size = 0x12000, scoped, tag = 'internal scratch']
  %s0 = inlined_call_operand.vmem [shape: f32[32,32], index: 0, kind: input, shape index: {}]
  %s1 = inlined_call_operand.vmem [shape: bf16[32,384], index: 1, kind: input, shape index: {}]
  %s2 = inlined_call_operand.vmem [shape: f32[1,384], index: 2, kind: input, shape index: {}]
  %s3 = inlined_call_operand.vmem [shape: bf16[32,384], index: 3, kind: output, shape index: {}]
  %s4 = sld [smem:[#allocation0]]
  $region45: #{vrnn_forward.4} parent=0
    _
  %s6 = ssub.s32 1, %s4
  %s7 = scalar_select 0, %s6, %s4
  loop: start=0, step=1, limit=4
  $region2: #{vrnn_forward.4} parent=0 // loop_pre_header
    _
  $region3: #{vrnn_forward.4} parent=0 // loop_header
    %s9 = sphi 0, %s13
    %p10 = scmp.ge.s32.totalorder %s9, 4
    %s19 = sphi 0, %s21
    %s22 = sphi 0, %s19
    %s23 = sphi 0, %s22
    %s39 = sphi 0, %s23
    %s43 = sphi 0, %s43
    %s45 = sphi 0, %s43
    %s46 = sphi 0, %s45
    %s60 = sphi 0, %s46
    %s64 = sphi 0, %s64
    %s66 = sphi 0, %s64
    %s67 = sphi 0, %s66
    %s81 = sphi 0, %s67
    %s87 = sphi 0, %s89
    %s90 = sphi 0, %s87
    %s91 = sphi 0, %s90
    %s107 = sphi 0, %s91
  $region4: #{vrnn_forward.4} parent=0 // loop_header_branch
    %12 = sbr.rel (%p10) target = $region8
  $region5: #{vrnn_forward.4} parent=0 // loop_body
    %s14 = ssub.s32 %s9, 1
    %s15 = ssub.s32 %s9, 2
    %s16 = sadd.s32 %s9, 1
    %s17 = ssub.s32 %s9, %s16
    %p18 = scmp.eq.s32.totalorder %s17, 0
    %s20 = sadd.s32 %s19, 1
    %s21 = scalar_select %p18, %s19, %s20
    %p24 = pneg %p18
    %p25 = scmp.eq.s32.totalorder %s9, 1
    %p26 = por %p24, %p25
    %p27 = scmp.ne.s32.totalorder %s19, %s22
    %p28 = scmp.eq.s32.totalorder %s9, 0
    %p29 = por %p27, %p28
    %p30 = scmp.ne.s32.totalorder %s19, %s22
    %p31 = scmp.eq.s32.totalorder %s14, 1
    %p32 = por %p30, %p31
    %p33 = scmp.ne.s32.totalorder %s22, %s23
    %p34 = scmp.eq.s32.totalorder %s14, 0
    %p35 = por %p33, %p34
    %p36 = scmp.ne.s32.totalorder %s22, %s23
    %p37 = scmp.eq.s32.totalorder %s15, 1
    %p38 = por %p36, %p37
    %p40 = scmp.ne.s32.totalorder %s23, %s39
    %p41 = scmp.eq.s32.totalorder %s15, 0
    %p42 = por %p40, %p41
    %s44 = sadd.s32 %s43, 1
    %p47 = scmp.eq.s32.totalorder %s9, 1
    %p48 = scmp.ne.s32.totalorder %s43, %s45
    %p49 = scmp.eq.s32.totalorder %s9, 0
    %p50 = por %p48, %p49
    %p51 = scmp.ne.s32.totalorder %s43, %s45
    %p52 = scmp.eq.s32.totalorder %s14, 1
    %p53 = por %p51, %p52
    %p54 = scmp.ne.s32.totalorder %s45, %s46
    %p55 = scmp.eq.s32.totalorder %s14, 0
    %p56 = por %p54, %p55
    %p57 = scmp.ne.s32.totalorder %s45, %s46
    %p58 = scmp.eq.s32.totalorder %s15, 1
    %p59 = por %p57, %p58
    %p61 = scmp.ne.s32.totalorder %s46, %s60
    %p62 = scmp.eq.s32.totalorder %s15, 0
    %p63 = por %p61, %p62
    %s65 = sadd.s32 %s64, 1
    %p68 = scmp.eq.s32.totalorder %s9, 1
    %p69 = scmp.ne.s32.totalorder %s64, %s66
    %p70 = scmp.eq.s32.totalorder %s9, 0
    %p71 = por %p69, %p70
    %p72 = scmp.ne.s32.totalorder %s64, %s66
    %p73 = scmp.eq.s32.totalorder %s14, 1
    %p74 = por %p72, %p73
    %p75 = scmp.ne.s32.totalorder %s66, %s67
    %p76 = scmp.eq.s32.totalorder %s14, 0
    %p77 = por %p75, %p76
    %p78 = scmp.ne.s32.totalorder %s66, %s67
    %p79 = scmp.eq.s32.totalorder %s15, 1
    %p80 = por %p78, %p79
    %p82 = scmp.ne.s32.totalorder %s67, %s81
    %p83 = scmp.eq.s32.totalorder %s15, 0
    %p84 = por %p82, %p83
    %s85 = ssub.s32 %s9, %s16
    %p86 = scmp.eq.s32.totalorder %s85, 0
    %s88 = sadd.s32 %s87, 1
    %s89 = scalar_select %p86, %s87, %s88
    %p92 = pneg %p86
    %p93 = scmp.eq.s32.totalorder %s9, 1
    %p94 = por %p92, %p93
    %p95 = scmp.ne.s32.totalorder %s87, %s90
    %p96 = scmp.eq.s32.totalorder %s9, 0
    %p97 = por %p95, %p96
    %p98 = scmp.ne.s32.totalorder %s87, %s90
    %p99 = scmp.eq.s32.totalorder %s14, 1
    %p100 = por %p98, %p99
    %p101 = scmp.ne.s32.totalorder %s90, %s91
    %p102 = scmp.eq.s32.totalorder %s14, 0
    %p103 = por %p101, %p102
    %p104 = scmp.ne.s32.totalorder %s90, %s91
    %p105 = scmp.eq.s32.totalorder %s15, 1
    %p106 = por %p104, %p105
    %p108 = scmp.ne.s32.totalorder %s91, %s107
    %p109 = scmp.eq.s32.totalorder %s15, 0
    %p110 = por %p108, %p109
    %p111 = scmp.le.s32.totalorder 1, %s9
    %p112 = scmp.lt.s32.totalorder %s9, 3
    %p113 = pnand %p111, %p112
    %p114 = pneg %p113
    // Predicated region
    $region9: #{vrnn_forward.4} parent=5 // pred_check
      _
    $region10: #{vrnn_forward.4} parent=5 // pred_check_branch
      %116 = sbr.rel (%p113) target = $region12
    $region11: #{vrnn_forward.4} parent=5 // pred_region
      %s117 = ssub.s32 %s9, 1
      // Predicated region
      $region13: #{vrnn_forward.4} parent=11 // pred_check
        %p118 = pneg %p56
      $region14: #{vrnn_forward.4} parent=11 // pred_check_branch
        %120 = sbr.rel (%p118) target = $region16
      $region15: #{vrnn_forward.4} parent=11 // pred_region
        _
      $region16: #{vrnn_forward.4} parent=11 // pred_fallthru
        _
      // Predicated region
      $region17: #{vrnn_forward.4} parent=11 // pred_check
        %p121 = pneg %p77
      $region18: #{vrnn_forward.4} parent=11 // pred_check_branch
        %123 = sbr.rel (%p121) target = $region20
      $region19: #{vrnn_forward.4} parent=11 // pred_region
        _
      $region20: #{vrnn_forward.4} parent=11 // pred_fallthru
        _
    $region12: #{vrnn_forward.4} parent=5 // pred_fallthru
      _
    %p124 = scmp.lt.s32.totalorder %s9, 2
    // Predicated region
    $region21: #{vrnn_forward.4} parent=5 // pred_check
      %p125 = pneg %p124
    $region22: #{vrnn_forward.4} parent=5 // pred_check_branch
      %127 = sbr.rel (%p125) target = $region24
    $region23: #{vrnn_forward.4} parent=5 // pred_region
      // Predicated region
      $region25: #{vrnn_forward.4} parent=23 // pred_check
        %p128 = pneg %p29
      $region26: #{vrnn_forward.4} parent=23 // pred_check_branch
        %130 = sbr.rel (%p128) target = $region28
      $region27: #{vrnn_forward.4} parent=23 // pred_region
        %s131 = smul.u32 2, %s9
        %p132 = scmp.lt.s32.totalorder %s131, 3
        %s133 = scalar_select %p132, %s131, 3
        %s134 = smul.addr %s133, 8
        %s135 = scalar_lea.vmem %s0, %s134
        %s136 = smul.u32 2, %s9
      $region28: #{vrnn_forward.4} parent=23 // pred_fallthru
        _
    $region24: #{vrnn_forward.4} parent=5 // pred_fallthru
      _
    %p137 = scmp.le.s32.totalorder 1, %s9
    %p138 = scmp.lt.s32.totalorder %s9, 3
    %p139 = pnand %p137, %p138
    %p140 = pneg %p139
    // Predicated region
    $region29: #{vrnn_forward.4} parent=5 // pred_check
      _
    $region30: #{vrnn_forward.4} parent=5 // pred_check_branch
      %142 = sbr.rel (%p139) target = $region32
    $region31: #{vrnn_forward.4} parent=5 // pred_region
      %s143 = ssub.s32 %s9, 1
      %s144 = smul.u32 2, %s14
      %p145 = scmp.lt.s32.totalorder %s144, 3
      %s146 = scalar_select %p145, %s144, 3
      %s147 = smul.addr %s146, 8
      %s148 = scalar_lea.vmem %s0, %s147
      %p149 = pneg %p35
      %p150 = pneg %p32
      %p151 = pneg %p56
      %p152 = pneg %p53
      %p153 = pneg %p77
      %p154 = pneg %p74
      %p155 = pneg %p103
      %p156 = pneg %p100
      %s157 = smul.u32 2, %s14
      %p158 = scmp.lt.s32.totalorder %s157, 3
      %s159 = scalar_select %p158, %s157, 3
      %s160 = smul.addr %s159, 3
      %s161 = smul.addr %s160, 4
      %s162 = scalar_lea.vmem %s3, %s161
      %s163 = smul.u32 2, %s14
      %p164 = scmp.lt.s32.totalorder %s163, 3
      %s165 = scalar_select %p164, %s163, 3
      %s166 = smul.addr %s165, 8
      %s167 = scalar_lea.vmem %s0, %s166
      %s168 = smul.u32 2, %s14
      %s169 = smul.u32 2, %s14
      %p170 = scmp.lt.s32.totalorder %s169, 3
      %s171 = scalar_select %p170, %s169, 3
      %s172 = smul.addr %s171, 3
      %s173 = smul.addr %s172, 4
      %s174 = scalar_lea.vmem %s3, %s173
      %s175 = smul.u32 2, %s14
      %v177 = vld [vmem:[%s167] sm:$0xff]
      %v178 = vld [vmem:[%s167 + $0x8] sm:$0xff]
      %v179 = vpack.c.bf16 %v178, %v177
      %v180 = vld [vmem:[%s1] sm:$0xff]
      %v181 = vld [vmem:[%s1 + $0x8] sm:$0xf]
      %v182 = vld [vmem:[%s1 + $0xc] sm:$0xff]
      %v183 = vld [vmem:[%s1 + $0x14] sm:$0xf]
      %v184 = vld [vmem:[%s1 + $0x18] sm:$0xff]
      %v185 = vld [vmem:[%s1 + $0x20] sm:$0xf]
      %v186 = vld [vmem:[%s1 + $0x24] sm:$0xff]
      %v187 = vld [vmem:[%s1 + $0x2c] sm:$0xf]
      %v188 = vld [vmem:[%s2] sm:$0x7]
      %v190 = vlaneseq
      %v191 = vshrl.u32 %v190, 7
      %v192 = vsub.s32 0, %v191
      %v193 = vrot.slane %v188, %v192
      %v194 = vlaneseq
      %v195 = vshrl.u32 %v194, 7
      %v196 = vsub.s32 1, %v195
      %v197 = vrot.slane %v188, %v196
      %v198 = vlaneseq
      %v199 = vshrl.u32 %v198, 7
      %v200 = vsub.s32 2, %v199
      %v201 = vrot.slane %v188, %v200
      %v213 = vunpack.c.l.b16 %v180
      %v214 = vunpack.c.h.b16 %v180
      %v215 = vunpack.c.l.b16 %v181
      %v216 = vunpack.c.l.b16 %v182
      %v217 = vunpack.c.h.b16 %v182
      %v218 = vunpack.c.l.b16 %v183
      %v219 = vunpack.c.l.b16 %v184
      %v220 = vunpack.c.h.b16 %v184
      %v221 = vunpack.c.l.b16 %v185
      %v222 = vunpack.c.l.b16 %v186
      %v223 = vunpack.c.h.b16 %v186
      %v224 = vunpack.c.l.b16 %v187
      %v225 = vpack.c.b16 %v216, %v213
      %v226 = vpack.c.b16 %v217, %v214
      %v227 = vpack.c.b16 %v218, %v215
      %v228 = vpack.c.b16 %v222, %v219
      %v229 = vpack.c.b16 %v223, %v220
      %v230 = vpack.c.b16 %v224, %v221
      %vm237 = vcmask 261120
      %v239 = vsel %vm237, %v179, 0
      %241 = vmatprep.subr.bf16.mxu0 %v226
      %242 = vmatpush1.bf16.msra.mxu0 %v225
      %243 = vmatprep.subr.bf16.mxu0 %v229
      %244 = vmatpush1.bf16.msra.mxu0 %v228
      %245 = vmatprep.subr.bf16.mxu0 0
      %246 = vmatpush1.bf16.msra.mxu0 0
      %247 = vmatprep.subr.bf16.mxu0 0
      %248 = vmatpush1.bf16.msra.mxu0 0
      %249 = vmatprep.subr.bf16.mxu0 0
      %250 = vmatpush1.bf16.msra.mxu0 0
      %251 = vmatprep.subr.bf16.mxu0 0
      %252 = vmatpush1.bf16.msra.mxu0 0
      %253 = vmatprep.subr.bf16.mxu0 0
      %254 = vmatpush1.bf16.msra.mxu0 0
      %255 = vmatprep.subr.bf16.mxu0 0
      %256 = vmatpush1.bf16.msra.mxu0 0
      %257 = vmatprep.subr.bf16.mxu0 0
      %258 = vmatpush1.bf16.msra.mxu0 0
      %259 = vmatprep.subr.bf16.mxu0 0
      %260 = vmatpush1.bf16.msra.mxu0 0
      %261 = vmatprep.subr.bf16.mxu0 0
      %262 = vmatpush1.bf16.msra.mxu0 0
      %263 = vmatprep.subr.bf16.mxu0 0
      %264 = vmatpush1.bf16.msra.mxu0 0
      %265 = vmatprep.subr.bf16.mxu0 0
      %266 = vmatpush1.bf16.msra.mxu0 0
      %267 = vmatprep.subr.bf16.mxu0 0
      %268 = vmatpush1.bf16.msra.mxu0 0
      %269 = vmatprep.subr.bf16.mxu0 0
      %270 = vmatpush1.bf16.msra.mxu0 0
      %271 = vmatprep.subr.bf16.mxu0 0
      %272 = vmatpush1.bf16.msra.mxu0 0
      %273 = vmatprep.mubr.bf16.mxu0 0
      %274 = vmatmul.mubr.bf16.gmra.mrb[0].mxu0 %v239
      %v275 = vpop.f32.mrb[0].mxu0
      %v276 = vadd.f32 %v193, %v275
      %v277 = vpop.f32.mrb[0].mxu0
      %v278 = vadd.f32 %v197, %v277
      %v279 = vpop.f32.mrb[0].mxu0
      %v280 = vadd.f32 %v193, %v279
      %v281 = vpop.f32.mrb[0].mxu0
      %v282 = vadd.f32 %v197, %v281
      %283 = vdwg.mxu0
      %284 = vmatprep.subr.bf16.mxu0 0
      %285 = vmatpush1.bf16.msra.mxu0 %v227
      %286 = vmatprep.subr.bf16.mxu0 0
      %287 = vmatpush1.bf16.msra.mxu0 %v230
      %288 = vmatprep.subr.bf16.mxu0 0
      %289 = vmatpush1.bf16.msra.mxu0 0
      %290 = vmatprep.subr.bf16.mxu0 0
      %291 = vmatpush1.bf16.msra.mxu0 0
      %292 = vmatprep.subr.bf16.mxu0 0
      %293 = vmatpush1.bf16.msra.mxu0 0
      %294 = vmatprep.subr.bf16.mxu0 0
      %295 = vmatpush1.bf16.msra.mxu0 0
      %296 = vmatprep.subr.bf16.mxu0 0
      %297 = vmatpush1.bf16.msra.mxu0 0
      %298 = vmatprep.subr.bf16.mxu0 0
      %299 = vmatpush1.bf16.msra.mxu0 0
      %300 = vmatprep.subr.bf16.mxu0 0
      %301 = vmatpush1.bf16.msra.mxu0 0
      %302 = vmatprep.subr.bf16.mxu0 0
      %303 = vmatpush1.bf16.msra.mxu0 0
      %304 = vmatprep.subr.bf16.mxu0 0
      %305 = vmatpush1.bf16.msra.mxu0 0
      %306 = vmatprep.subr.bf16.mxu0 0
      %307 = vmatpush1.bf16.msra.mxu0 0
      %308 = vmatprep.subr.bf16.mxu0 0
      %309 = vmatpush1.bf16.msra.mxu0 0
      %310 = vmatprep.subr.bf16.mxu0 0
      %311 = vmatpush1.bf16.msra.mxu0 0
      %312 = vmatprep.subr.bf16.mxu0 0
      %313 = vmatpush1.bf16.msra.mxu0 0
      %314 = vmatprep.subr.bf16.mxu0 0
      %315 = vmatpush1.bf16.msra.mxu0 0
      %316 = vmatprep.mubr.bf16.mxu0 0
      %317 = vmatmul.mubr.bf16.gmra.mrb[0].mxu0 %v239
      %v318 = vpop.f32.mrb[0].mxu0
      %v319 = vadd.f32 %v201, %v318
      %v320 = vpop.f32.mrb[0].mxu0
      %v321 = vpop.f32.mrb[0].mxu0
      %v322 = vadd.f32 %v201, %v321
      %v323 = vpop.f32.mrb[0].mxu0
      %324 = vdwg.mxu0
      %v325 = vpack.c.bf16 %v280, %v276
      %v326 = vpack.c.bf16 %v282, %v278
      %v327 = vpack.c.bf16 %v322, %v319
      %v331 = vunpack.c.l.b16 %v325
      %v332 = vunpack.c.l.b16 %v326
      %v333 = vunpack.c.l.b16 %v327
      %v334 = vunpack.c.h.b16 %v325
      %v335 = vunpack.c.h.b16 %v326
      %v336 = vunpack.c.h.b16 %v327
      %v337 = vpack.c.b16 %v332, %v331
      %v338 = vpack.c.b16 %v333, %v333
      %v339 = vpack.c.b16 %v335, %v334
      %v340 = vpack.c.b16 %v336, %v336
      %345 = vst [vmem:[%s174] sm:$0xff] %v337
      %346 = vst [vmem:[%s174 + $0x8] sm:$0xf] %v338
      %347 = vst [vmem:[%s174 + $0xc] sm:$0xff] %v339
      %348 = vst [vmem:[%s174 + $0x14] sm:$0xf] %v340
      %s349 = smul.u32 2, %s14
      %p350 = scmp.lt.s32.totalorder %s349, 3
      %s351 = scalar_select %p350, %s349, 3
      %s352 = smul.addr %s351, 3
      %s353 = smul.addr %s352, 4
      %s354 = scalar_lea.vmem %s3, %s353
      // Predicated region
      $region33: #{vrnn_forward.4} parent=31 // pred_check
        %p355 = pneg %p100
      $region34: #{vrnn_forward.4} parent=31 // pred_check_branch
        %357 = sbr.rel (%p355) target = $region36
      $region35: #{vrnn_forward.4} parent=31 // pred_region
        %s358 = smul.u32 2, %s14
      $region36: #{vrnn_forward.4} parent=31 // pred_fallthru
        _
    $region32: #{vrnn_forward.4} parent=5 // pred_fallthru
      _
    %p359 = scmp.le.s32.totalorder 2, %s9
    // Predicated region
    $region37: #{vrnn_forward.4} parent=5 // pred_check
      %p360 = pneg %p359
    $region38: #{vrnn_forward.4} parent=5 // pred_check_branch
      %362 = sbr.rel (%p360) target = $region40
    $region39: #{vrnn_forward.4} parent=5 // pred_region
      %s363 = ssub.s32 %s9, 2
      // Predicated region
      $region41: #{vrnn_forward.4} parent=39 // pred_check
        %p364 = pneg %p106
      $region42: #{vrnn_forward.4} parent=39 // pred_check_branch
        %366 = sbr.rel (%p364) target = $region44
      $region43: #{vrnn_forward.4} parent=39 // pred_region
        %s367 = smul.u32 2, %s15
        %p368 = scmp.lt.s32.totalorder %s367, 3
        %s369 = scalar_select %p368, %s367, 3
        %s370 = smul.addr %s369, 3
        %s371 = smul.addr %s370, 4
        %s372 = scalar_lea.vmem %s3, %s371
      $region44: #{vrnn_forward.4} parent=39 // pred_fallthru
        _
    $region40: #{vrnn_forward.4} parent=5 // pred_fallthru
      _
  $region6: #{vrnn_forward.4} parent=0 // loop_footer
    %s13 = sadd.s32 1, %s9
  $region7: #{vrnn_forward.4} parent=0 // loop_footer_branch
    %8 = sbr.rel target = $region3
  $region8: #{vrnn_forward.4} parent=0 // loop_exit
    _

// kernel: vrnn_forward.6
$region0: #{vrnn_forward.6}
  #allocation0 [shape = 'u32[]', space=smem, size = 0x4, offset = 0x4, fixed_abs, tag = 'smem constant byte address 0x4 - core index']
  #allocation1 [shape = 'u32[144,128]{1,0:T(1,128)}', space=vmem, size = 0x12000, scoped, tag = 'internal scratch']
  #allocation2 [shape = 'f32[8,32]{1,0:T(8,128)}', space=vmem, size = 0x1000, scoped, tag = 'scratch operand']
  %s0 = inlined_call_operand.vmem [shape: bf16[8,8,96], index: 0, kind: input, shape index: {}]
  %s1 = inlined_call_operand.vmem [shape: f32[1,8,8], index: 1, kind: input, shape index: {}]
  %s2 = inlined_call_operand.vmem [shape: f32[8,32], index: 2, kind: input, shape index: {}]
  %s3 = inlined_call_operand.vmem [shape: bf16[32,192], index: 3, kind: input, shape index: {}]
  %s4 = inlined_call_operand.vmem [shape: f32[1,192], index: 4, kind: input, shape index: {}]
  %s5 = inlined_call_operand.vmem [shape: bf16[8,8,32], index: 5, kind: output, shape index: {}]
  %s6 = sld [smem:[#allocation0]]
  $region34: #{vrnn_forward.6} parent=0
    _
  %s8 = ssub.s32 1, %s6
  %s9 = scalar_select 0, %s8, %s6
  // Predicated region
  $region2: #{vrnn_forward.6} parent=0 // pred_check
    _
  $region3: #{vrnn_forward.6} parent=0 // pred_check_branch
    %11 = sbr.rel (0) target = $region5
  $region4: #{vrnn_forward.6} parent=0 // pred_region
    _
  $region5: #{vrnn_forward.6} parent=0 // pred_fallthru
    _
  // Predicated region
  $region6: #{vrnn_forward.6} parent=0 // pred_check
    _
  $region7: #{vrnn_forward.6} parent=0 // pred_check_branch
    %13 = sbr.rel (0) target = $region9
  $region8: #{vrnn_forward.6} parent=0 // pred_region
    _
  $region9: #{vrnn_forward.6} parent=0 // pred_fallthru
    _
  // Predicated region
  $region10: #{vrnn_forward.6} parent=0 // pred_check
    _
  $region11: #{vrnn_forward.6} parent=0 // pred_check_branch
    %15 = sbr.rel (0) target = $region13
  $region12: #{vrnn_forward.6} parent=0 // pred_region
    _
  $region13: #{vrnn_forward.6} parent=0 // pred_fallthru
    _
  // Predicated region
  $region14: #{vrnn_forward.6} parent=0 // pred_check
    _
  $region15: #{vrnn_forward.6} parent=0 // pred_check_branch
    %17 = sbr.rel (0) target = $region17
  $region16: #{vrnn_forward.6} parent=0 // pred_region
    _
  $region17: #{vrnn_forward.6} parent=0 // pred_fallthru
    _
  // Predicated region
  $region18: #{vrnn_forward.6} parent=0 // pred_check
    _
  $region19: #{vrnn_forward.6} parent=0 // pred_check_branch
    %19 = sbr.rel (0) target = $region21
  $region20: #{vrnn_forward.6} parent=0 // pred_region
    _
  $region21: #{vrnn_forward.6} parent=0 // pred_fallthru
    _
  %p21 = scmp.eq.s32.totalorder 0, 0
  // Predicated region
  $region22: #{vrnn_forward.6} parent=0 // pred_check
    %p22 = pneg %p21
  $region23: #{vrnn_forward.6} parent=0 // pred_check_branch
    %24 = sbr.rel (%p22) target = $region25
  $region24: #{vrnn_forward.6} parent=0 // pred_region
    %v25 = vld [vmem:[%s2] sm:$0xff]
    %vm26 = vcmask 261120
    %27 = vst.msk [vmem:[#allocation2] sm:$0xff] %vm26, %v25
  $region25: #{vrnn_forward.6} parent=0 // pred_fallthru
    _
  %v28 = vld [vmem:[%s3] sm:$0xff]
  %v29 = vld [vmem:[%s3 + $0x8] sm:$0xff]
  %v30 = vld [vmem:[%s3 + $0x10] sm:$0xff]
  %v31 = vld [vmem:[%s3 + $0x18] sm:$0xff]
  %v32 = vld [vmem:[%s4] sm:$0x3]
  %v34 = vlaneseq
  %v35 = vshrl.u32 %v34, 7
  %v36 = vsub.s32 0, %v35
  %v37 = vrot.slane %v32, %v36
  %v39 = vlaneseq
  %v40 = vshrl.u32 %v39, 7
  %v41 = vsub.s32 1, %v40
  %v42 = vrot.slane %v32, %v41
  %v43 = vld [vmem:[%s1] sm:$0xff]
  %v44 = vld [vmem:[#allocation2] sm:$0xff]
  %s45 = smul.u32 0, 8
  %v46 = vld [vmem:[%s0] sm:$0xf]
  %v47 = vunpack.c.l.bf16 %v46
  %vm48 = vcmp.gt.f32.partialorder %v43, 0.5
  %v49 = vpack.c.bf16 %v44, %v44
  %v54 = vunpack.c.l.b16 %v28
  %v55 = vunpack.c.h.b16 %v28
  %v56 = vunpack.c.l.b16 %v29
  %v57 = vunpack.c.h.b16 %v29
  %v58 = vunpack.c.l.b16 %v30
  %v59 = vunpack.c.h.b16 %v30
  %v60 = vunpack.c.l.b16 %v31
  %v61 = vunpack.c.h.b16 %v31
  %v62 = vpack.c.b16 %v56, %v54
  %v63 = vpack.c.b16 %v57, %v55
  %v64 = vpack.c.b16 %v60, %v58
  %v65 = vpack.c.b16 %v61, %v59
  %vm70 = vcmask 261120
  %v72 = vsel %vm70, %v49, 0
  %74 = vmatprep.subr.bf16.mxu0 %v63
  %75 = vmatpush1.bf16.msra.mxu0 %v62
  %76 = vmatprep.subr.bf16.mxu0 %v65
  %77 = vmatpush1.bf16.msra.mxu0 %v64
  %78 = vmatprep.subr.bf16.mxu0 0
  %79 = vmatpush1.bf16.msra.mxu0 0
  %80 = vmatprep.subr.bf16.mxu0 0
  %81 = vmatpush1.bf16.msra.mxu0 0
  %82 = vmatprep.subr.bf16.mxu0 0
  %83 = vmatpush1.bf16.msra.mxu0 0
  %84 = vmatprep.subr.bf16.mxu0 0
  %85 = vmatpush1.bf16.msra.mxu0 0
  %86 = vmatprep.subr.bf16.mxu0 0
  %87 = vmatpush1.bf16.msra.mxu0 0
  %88 = vmatprep.subr.bf16.mxu0 0
  %89 = vmatpush1.bf16.msra.mxu0 0
  %90 = vmatprep.subr.bf16.mxu0 0
  %91 = vmatpush1.bf16.msra.mxu0 0
  %92 = vmatprep.subr.bf16.mxu0 0
  %93 = vmatpush1.bf16.msra.mxu0 0
  %94 = vmatprep.subr.bf16.mxu0 0
  %95 = vmatpush1.bf16.msra.mxu0 0
  %96 = vmatprep.subr.bf16.mxu0 0
  %97 = vmatpush1.bf16.msra.mxu0 0
  %98 = vmatprep.subr.bf16.mxu0 0
  %99 = vmatpush1.bf16.msra.mxu0 0
  %100 = vmatprep.subr.bf16.mxu0 0
  %101 = vmatpush1.bf16.msra.mxu0 0
  %102 = vmatprep.subr.bf16.mxu0 0
  %103 = vmatpush1.bf16.msra.mxu0 0
  %104 = vmatprep.subr.bf16.mxu0 0
  %105 = vmatpush1.bf16.msra.mxu0 0
  %106 = vmatprep.mubr.bf16.mxu0 0
  %107 = vmatmul.mubr.bf16.gmra.mrb[0].mxu0 %v72
  %v108 = vpop.f32.mrb[0].mxu0
  %v109 = vadd.f32 0.0, %v108
  %v110 = vpop.f32.mrb[0].mxu0
  %v111 = vadd.f32 0.0, %v110
  %v112 = vpop.f32.mrb[0].mxu0
  %v113 = vpop.f32.mrb[0].mxu0
  %114 = vdwg.mxu0
  %v115 = vsel %vm48, 1, 0
  %116 = vset.pattern.permute.xlu0 0
  %117 = vperm.xlu0 %116, %v115
  %v118 = vpop.permute.xlu0 %117
  %vm119 = vcmp.eq.s32.totalorder %v118, 1
  %122 = vrot.lane.b32.xlu0 %v109, 32
  %v123 = vpop.permute.xlu0 %122
  %124 = vrot.lane.b32.xlu0 %v111, 32
  %v125 = vpop.permute.xlu0 %124
  %v126 = vsel %vm70, %v123, %v125
  %v128 = vsel %vm119, %v109, %v126
  %129 = vrot.lane.b32.xlu0 %v37, 32
  %v130 = vpop.permute.xlu0 %129
  %131 = vrot.lane.b32.xlu0 %v42, 32
  %v132 = vpop.permute.xlu0 %131
  %v133 = vsel %vm70, %v130, %v132
  %v135 = vsel %vm119, %v37, %v133
  %v136 = vadd.f32 %v128, %v135
  %v137 = vadd.f32 %v47, %v136
  %v138 = vxor.u32 %v137, 2147483648
  %v139 = vmul.f32 %v138, 1.442695
  %v140 = vpow.pop %v139
  %v141 = vadd.f32 %v140, 1.0
  %v142 = vrcp.pop %v141
  %v143 = vmul.f32 1.0, %v142
  %145 = vrot.lane.b32.xlu0 %v136, 64
  %v146 = vpop.permute.xlu0 %145
  %v148 = vmul.f32 %v143, %v146
  %150 = vrot.lane.b32.xlu0 %v148, 64
  %v151 = vpop.permute.xlu0 %150
  %v153 = vadd.f32 %v47, %v151
  %v154 = vtanh.pop %v153
  %v155 = vsub.f32 1.0, %v143
  %157 = vrot.lane.b32.xlu0 %v154, 96
  %v158 = vpop.permute.xlu0 %157
  %v160 = vmul.f32 %v155, %v158
  %162 = vrot.lane.b32.xlu0 %v44, 32
  %v163 = vpop.permute.xlu0 %162
  %v165 = vmul.f32 %v143, %v163
  %v166 = vadd.f32 %v160, %v165
  %p167 = scmp.lt.s32.totalorder %s45, 4
  %s168 = scalar_select %p167, 1, 0
  %v169 = vstv %s168
  %vm170 = vcmp.eq.s32.totalorder %v169, 1
  %v171 = vsel %vm170, %v166, %v163
  %v172 = vpack.c.bf16 %v171, %v171
  %v174 = vunpack.c.l.b16 %v172
  %v175 = vpack.c.b16 %v174, %v174
  %176 = vrot.lane.b32.xlu0 %v175, 96
  %v177 = vpop.permute.xlu0 %176
  %vm179 = vcmask 257024
  %180 = vst.msk [vmem:[%s5] sm:$0xf] %vm179, %v177
  %s181 = scalar_lea.vmem %s0, 4
  %v182 = vld [vmem:[%s181] sm:$0xf]
  %v183 = vunpack.c.l.bf16 %v182
  %184 = vrot.lane.b32.xlu0 %v172, 96
  %v185 = vpop.permute.xlu0 %184
  %v187 = vsel %vm70, %v185, 0
  %189 = vmatprep.subr.bf16.mxu0 %v63
  %190 = vmatpush1.bf16.msra.mxu0 %v62
  %191 = vmatprep.subr.bf16.mxu0 %v65
  %192 = vmatpush1.bf16.msra.mxu0 %v64
  %193 = vmatprep.subr.bf16.mxu0 0
  %194 = vmatpush1.bf16.msra.mxu0 0
  %195 = vmatprep.subr.bf16.mxu0 0
  %196 = vmatpush1.bf16.msra.mxu0 0
  %197 = vmatprep.subr.bf16.mxu0 0
  %198 = vmatpush1.bf16.msra.mxu0 0
  %199 = vmatprep.subr.bf16.mxu0 0
  %200 = vmatpush1.bf16.msra.mxu0 0
  %201 = vmatprep.subr.bf16.mxu0 0
  %202 = vmatpush1.bf16.msra.mxu0 0
  %203 = vmatprep.subr.bf16.mxu0 0
  %204 = vmatpush1.bf16.msra.mxu0 0
  %205 = vmatprep.subr.bf16.mxu0 0
  %206 = vmatpush1.bf16.msra.mxu0 0
  %207 = vmatprep.subr.bf16.mxu0 0
  %208 = vmatpush1.bf16.msra.mxu0 0
  %209 = vmatprep.subr.bf16.mxu0 0
  %210 = vmatpush1.bf16.msra.mxu0 0
  %211 = vmatprep.subr.bf16.mxu0 0
  %212 = vmatpush1.bf16.msra.mxu0 0
  %213 = vmatprep.subr.bf16.mxu0 0
  %214 = vmatpush1.bf16.msra.mxu0 0
  %215 = vmatprep.subr.bf16.mxu0 0
  %216 = vmatpush1.bf16.msra.mxu0 0
  %217 = vmatprep.subr.bf16.mxu0 0
  %218 = vmatpush1.bf16.msra.mxu0 0
  %219 = vmatprep.subr.bf16.mxu0 0
  %220 = vmatpush1.bf16.msra.mxu0 0
  %221 = vmatprep.mubr.bf16.mxu0 0
  %222 = vmatmul.mubr.bf16.gmra.mrb[0].mxu0 %v187
  %v223 = vpop.f32.mrb[0].mxu0
  %v224 = vadd.f32 0.0, %v223
  %v225 = vpop.f32.mrb[0].mxu0
  %v226 = vadd.f32 0.0, %v225
  %v227 = vpop.f32.mrb[0].mxu0
  %v228 = vpop.f32.mrb[0].mxu0
  %229 = vdwg.mxu0
  %230 = vset.pattern.permute.xlu0 1
  %231 = vperm.xlu0 %230, %v115
  %v232 = vpop.permute.xlu0 %231
  %vm233 = vcmp.eq.s32.totalorder %v232, 1
  %236 = vrot.lane.b32.xlu0 %v224, 32
  %v237 = vpop.permute.xlu0 %236
  %238 = vrot.lane.b32.xlu0 %v226, 32
  %v239 = vpop.permute.xlu0 %238
  %v240 = vsel %vm70, %v237, %v239
  %v242 = vsel %vm233, %v224, %v240
  %v243 = vsel %vm233, %v37, %v133
  %v244 = vadd.f32 %v242, %v243
  %v245 = vadd.f32 %v183, %v244
  %v246 = vxor.u32 %v245, 2147483648
  %v247 = vmul.f32 %v246, 1.442695
  %v248 = vpow.pop %v247
  %v249 = vadd.f32 %v248, 1.0
  %v250 = vrcp.pop %v249
  %v251 = vmul.f32 1.0, %v250
  %253 = vrot.lane.b32.xlu0 %v244, 64
  %v254 = vpop.permute.xlu0 %253
  %v256 = vmul.f32 %v251, %v254
  %258 = vrot.lane.b32.xlu0 %v256, 64
  %v259 = vpop.permute.xlu0 %258
  %v261 = vadd.f32 %v183, %v259
  %v262 = vtanh.pop %v261
  %v263 = vsub.f32 1.0, %v251
  %265 = vrot.lane.b32.xlu0 %v262, 96
  %v266 = vpop.permute.xlu0 %265
  %v268 = vmul.f32 %v263, %v266
  %v269 = vmul.f32 %v251, %v171
  %v270 = vadd.f32 %v268, %v269
  %s271 = sadd.s32 %s45, 1
  %p272 = scmp.lt.s32.totalorder %s271, 4
  %s273 = scalar_select %p272, 1, 0
  %v274 = vstv %s273
  %vm275 = vcmp.eq.s32.totalorder %v274, 1
  %v276 = vsel %vm275, %v270, %v171
  %v277 = vpack.c.bf16 %v276, %v276
  %v279 = vunpack.c.l.b16 %v277
  %v280 = vpack.c.b16 %v279, %v279
  %281 = vrot.lane.b32.xlu0 %v280, 96
  %v282 = vpop.permute.xlu0 %281
  %s284 = scalar_lea.vmem %s5, 4
  %285 = vst.msk [vmem:[%s284] sm:$0xf] %vm179, %v282
  %s286 = scalar_lea.vmem %s0, 8
  %v287 = vld [vmem:[%s286] sm:$0xf]
  %v288 = vunpack.c.l.bf16 %v287
  %289 = vrot.lane.b32.xlu0 %v277, 96
  %v290 = vpop.permute.xlu0 %289
  %v292 = vsel %vm70, %v290, 0
  %294 = vmatprep.subr.bf16.mxu0 %v63
  %295 = vmatpush1.bf16.msra.mxu0 %v62
  %296 = vmatprep.subr.bf16.mxu0 %v65
  %297 = vmatpush1.bf16.msra.mxu0 %v64
  %298 = vmatprep.subr.bf16.mxu0 0
  %299 = vmatpush1.bf16.msra.mxu0 0
  %300 = vmatprep.subr.bf16.mxu0 0
  %301 = vmatpush1.bf16.msra.mxu0 0
  %302 = vmatprep.subr.bf16.mxu0 0
  %303 = vmatpush1.bf16.msra.mxu0 0
  %304 = vmatprep.subr.bf16.mxu0 0
  %305 = vmatpush1.bf16.msra.mxu0 0
  %306 = vmatprep.subr.bf16.mxu0 0
  %307 = vmatpush1.bf16.msra.mxu0 0
  %308 = vmatprep.subr.bf16.mxu0 0
  %309 = vmatpush1.bf16.msra.mxu0 0
  %310 = vmatprep.subr.bf16.mxu0 0
  %311 = vmatpush1.bf16.msra.mxu0 0
  %312 = vmatprep.subr.bf16.mxu0 0
  %313 = vmatpush1.bf16.msra.mxu0 0
  %314 = vmatprep.subr.bf16.mxu0 0
  %315 = vmatpush1.bf16.msra.mxu0 0
  %316 = vmatprep.subr.bf16.mxu0 0
  %317 = vmatpush1.bf16.msra.mxu0 0
  %318 = vmatprep.subr.bf16.mxu0 0
  %319 = vmatpush1.bf16.msra.mxu0 0
  %320 = vmatprep.subr.bf16.mxu0 0
  %321 = vmatpush1.bf16.msra.mxu0 0
  %322 = vmatprep.subr.bf16.mxu0 0
  %323 = vmatpush1.bf16.msra.mxu0 0
  %324 = vmatprep.subr.bf16.mxu0 0
  %325 = vmatpush1.bf16.msra.mxu0 0
  %326 = vmatprep.mubr.bf16.mxu0 0
  %327 = vmatmul.mubr.bf16.gmra.mrb[0].mxu0 %v292
  %v328 = vpop.f32.mrb[0].mxu0
  %v329 = vadd.f32 0.0, %v328
  %v330 = vpop.f32.mrb[0].mxu0
  %v331 = vadd.f32 0.0, %v330
  %v332 = vpop.f32.mrb[0].mxu0
  %v333 = vpop.f32.mrb[0].mxu0
  %334 = vdwg.mxu0
  %335 = vset.pattern.permute.xlu0 2
  %336 = vperm.xlu0 %335, %v115
  %v337 = vpop.permute.xlu0 %336
  %vm338 = vcmp.eq.s32.totalorder %v337, 1
  %341 = vrot.lane.b32.xlu0 %v329, 32
  %v342 = vpop.permute.xlu0 %341
  %343 = vrot.lane.b32.xlu0 %v331, 32
  %v344 = vpop.permute.xlu0 %343
  %v345 = vsel %vm70, %v342, %v344
  %v347 = vsel %vm338, %v329, %v345
  %v348 = vsel %vm338, %v37, %v133
  %v349 = vadd.f32 %v347, %v348
  %v350 = vadd.f32 %v288, %v349
  %v351 = vxor.u32 %v350, 2147483648
  %v352 = vmul.f32 %v351, 1.442695
  %v353 = vpow.pop %v352
  %v354 = vadd.f32 %v353, 1.0
  %v355 = vrcp.pop %v354
  %v356 = vmul.f32 1.0, %v355
  %358 = vrot.lane.b32.xlu0 %v349, 64
  %v359 = vpop.permute.xlu0 %358
  %v361 = vmul.f32 %v356, %v359
  %363 = vrot.lane.b32.xlu0 %v361, 64
  %v364 = vpop.permute.xlu0 %363
  %v366 = vadd.f32 %v288, %v364
  %v367 = vtanh.pop %v366
  %v368 = vsub.f32 1.0, %v356
  %370 = vrot.lane.b32.xlu0 %v367, 96
  %v371 = vpop.permute.xlu0 %370
  %v373 = vmul.f32 %v368, %v371
  %v374 = vmul.f32 %v356, %v276
  %v375 = vadd.f32 %v373, %v374
  %s376 = sadd.s32 %s45, 2
  %p377 = scmp.lt.s32.totalorder %s376, 4
  %s378 = scalar_select %p377, 1, 0
  %v379 = vstv %s378
  %vm380 = vcmp.eq.s32.totalorder %v379, 1
  %v381 = vsel %vm380, %v375, %v276
  %v382 = vpack.c.bf16 %v381, %v381
  %v384 = vunpack.c.l.b16 %v382
  %v385 = vpack.c.b16 %v384, %v384
  %386 = vrot.lane.b32.xlu0 %v385, 96
  %v387 = vpop.permute.xlu0 %386
  %s389 = scalar_lea.vmem %s5, 8
  %390 = vst.msk [vmem:[%s389] sm:$0xf] %vm179, %v387
  %s391 = scalar_lea.vmem %s0, 12
  %v392 = vld [vmem:[%s391] sm:$0xf]
  %v393 = vunpack.c.l.bf16 %v392
  %394 = vrot.lane.b32.xlu0 %v382, 96
  %v395 = vpop.permute.xlu0 %394
  %v397 = vsel %vm70, %v395, 0
  %399 = vmatprep.subr.bf16.mxu0 %v63
  %400 = vmatpush1.bf16.msra.mxu0 %v62
  %401 = vmatprep.subr.bf16.mxu0 %v65
  %402 = vmatpush1.bf16.msra.mxu0 %v64
  %403 = vmatprep.subr.bf16.mxu0 0
  %404 = vmatpush1.bf16.msra.mxu0 0
  %405 = vmatprep.subr.bf16.mxu0 0
  %406 = vmatpush1.bf16.msra.mxu0 0
  %407 = vmatprep.subr.bf16.mxu0 0
  %408 = vmatpush1.bf16.msra.mxu0 0
  %409 = vmatprep.subr.bf16.mxu0 0
  %410 = vmatpush1.bf16.msra.mxu0 0
  %411 = vmatprep.subr.bf16.mxu0 0
  %412 = vmatpush1.bf16.msra.mxu0 0
  %413 = vmatprep.subr.bf16.mxu0 0
  %414 = vmatpush1.bf16.msra.mxu0 0
  %415 = vmatprep.subr.bf16.mxu0 0
  %416 = vmatpush1.bf16.msra.mxu0 0
  %417 = vmatprep.subr.bf16.mxu0 0
  %418 = vmatpush1.bf16.msra.mxu0 0
  %419 = vmatprep.subr.bf16.mxu0 0
  %420 = vmatpush1.bf16.msra.mxu0 0
  %421 = vmatprep.subr.bf16.mxu0 0
  %422 = vmatpush1.bf16.msra.mxu0 0
  %423 = vmatprep.subr.bf16.mxu0 0
  %424 = vmatpush1.bf16.msra.mxu0 0
  %425 = vmatprep.subr.bf16.mxu0 0
  %426 = vmatpush1.bf16.msra.mxu0 0
  %427 = vmatprep.subr.bf16.mxu0 0
  %428 = vmatpush1.bf16.msra.mxu0 0
  %429 = vmatprep.subr.bf16.mxu0 0
  %430 = vmatpush1.bf16.msra.mxu0 0
  %431 = vmatprep.mubr.bf16.mxu0 0
  %432 = vmatmul.mubr.bf16.gmra.mrb[0].mxu0 %v397
  %v433 = vpop.f32.mrb[0].mxu0
  %v434 = vadd.f32 0.0, %v433
  %v435 = vpop.f32.mrb[0].mxu0
  %v436 = vadd.f32 0.0, %v435
  %v437 = vpop.f32.mrb[0].mxu0
  %v438 = vpop.f32.mrb[0].mxu0
  %439 = vdwg.mxu0
  %440 = vset.pattern.permute.xlu0 3
  %441 = vperm.xlu0 %440, %v115
  %v442 = vpop.permute.xlu0 %441
  %vm443 = vcmp.eq.s32.totalorder %v442, 1
  %446 = vrot.lane.b32.xlu0 %v434, 32
  %v447 = vpop.permute.xlu0 %446
  %448 = vrot.lane.b32.xlu0 %v436, 32
  %v449 = vpop.permute.xlu0 %448
  %v450 = vsel %vm70, %v447, %v449
  %v452 = vsel %vm443, %v434, %v450
  %v453 = vsel %vm443, %v37, %v133
  %v454 = vadd.f32 %v452, %v453
  %v455 = vadd.f32 %v393, %v454
  %v456 = vxor.u32 %v455, 2147483648
  %v457 = vmul.f32 %v456, 1.442695
  %v458 = vpow.pop %v457
  %v459 = vadd.f32 %v458, 1.0
  %v460 = vrcp.pop %v459
  %v461 = vmul.f32 1.0, %v460
  %463 = vrot.lane.b32.xlu0 %v454, 64
  %v464 = vpop.permute.xlu0 %463
  %v466 = vmul.f32 %v461, %v464
  %468 = vrot.lane.b32.xlu0 %v466, 64
  %v469 = vpop.permute.xlu0 %468
  %v471 = vadd.f32 %v393, %v469
  %v472 = vtanh.pop %v471
  %v473 = vsub.f32 1.0, %v461
  %475 = vrot.lane.b32.xlu0 %v472, 96
  %v476 = vpop.permute.xlu0 %475
  %v478 = vmul.f32 %v473, %v476
  %v479 = vmul.f32 %v461, %v381
  %v480 = vadd.f32 %v478, %v479
  %s481 = sadd.s32 %s45, 3
  %p482 = scmp.lt.s32.totalorder %s481, 4
  %s483 = scalar_select %p482, 1, 0
  %v484 = vstv %s483
  %vm485 = vcmp.eq.s32.totalorder %v484, 1
  %v486 = vsel %vm485, %v480, %v381
  %v487 = vpack.c.bf16 %v486, %v486
  %v489 = vunpack.c.l.b16 %v487
  %v490 = vpack.c.b16 %v489, %v489
  %491 = vrot.lane.b32.xlu0 %v490, 96
  %v492 = vpop.permute.xlu0 %491
  %s494 = scalar_lea.vmem %s5, 12
  %495 = vst.msk [vmem:[%s494] sm:$0xf] %vm179, %v492
  %s496 = scalar_lea.vmem %s0, 16
  %v497 = vld [vmem:[%s496] sm:$0xf]
  %v498 = vunpack.c.l.bf16 %v497
  %499 = vrot.lane.b32.xlu0 %v487, 96
  %v500 = vpop.permute.xlu0 %499
  %v502 = vsel %vm70, %v500, 0
  %504 = vmatprep.subr.bf16.mxu0 %v63
  %505 = vmatpush1.bf16.msra.mxu0 %v62
  %506 = vmatprep.subr.bf16.mxu0 %v65
  %507 = vmatpush1.bf16.msra.mxu0 %v64
  %508 = vmatprep.subr.bf16.mxu0 0
  %509 = vmatpush1.bf16.msra.mxu0 0
  %510 = vmatprep.subr.bf16.mxu0 0
  %511 = vmatpush1.bf16.msra.mxu0 0
  %512 = vmatprep.subr.bf16.mxu0 0
  %513 = vmatpush1.bf16.msra.mxu0 0
  %514 = vmatprep.subr.bf16.mxu0 0
  %515 = vmatpush1.bf16.msra.mxu0 0
  %516 = vmatprep.subr.bf16.mxu0 0
  %517 = vmatpush1.bf16.msra.mxu0 0
  %518 = vmatprep.subr.bf16.mxu0 0
  %519 = vmatpush1.bf16.msra.mxu0 0
  %520 = vmatprep.subr.bf16.mxu0 0
  %521 = vmatpush1.bf16.msra.mxu0 0
  %522 = vmatprep.subr.bf16.mxu0 0
  %523 = vmatpush1.bf16.msra.mxu0 0
  %524 = vmatprep.subr.bf16.mxu0 0
  %525 = vmatpush1.bf16.msra.mxu0 0
  %526 = vmatprep.subr.bf16.mxu0 0
  %527 = vmatpush1.bf16.msra.mxu0 0
  %528 = vmatprep.subr.bf16.mxu0 0
  %529 = vmatpush1.bf16.msra.mxu0 0
  %530 = vmatprep.subr.bf16.mxu0 0
  %531 = vmatpush1.bf16.msra.mxu0 0
  %532 = vmatprep.subr.bf16.mxu0 0
  %533 = vmatpush1.bf16.msra.mxu0 0
  %534 = vmatprep.subr.bf16.mxu0 0
  %535 = vmatpush1.bf16.msra.mxu0 0
  %536 = vmatprep.mubr.bf16.mxu0 0
  %537 = vmatmul.mubr.bf16.gmra.mrb[0].mxu0 %v502
  %v538 = vpop.f32.mrb[0].mxu0
  %v539 = vadd.f32 0.0, %v538
  %v540 = vpop.f32.mrb[0].mxu0
  %v541 = vadd.f32 0.0, %v540
  %v542 = vpop.f32.mrb[0].mxu0
  %v543 = vpop.f32.mrb[0].mxu0
  %544 = vdwg.mxu0
  %545 = vset.pattern.permute.xlu0 4
  %546 = vperm.xlu0 %545, %v115
  %v547 = vpop.permute.xlu0 %546
  %vm548 = vcmp.eq.s32.totalorder %v547, 1
  %551 = vrot.lane.b32.xlu0 %v539, 32
  %v552 = vpop.permute.xlu0 %551
  %553 = vrot.lane.b32.xlu0 %v541, 32
  %v554 = vpop.permute.xlu0 %553
  %v555 = vsel %vm70, %v552, %v554
  %v557 = vsel %vm548, %v539, %v555
  %v558 = vsel %vm548, %v37, %v133
  %v559 = vadd.f32 %v557, %v558
  %v560 = vadd.f32 %v498, %v559
  %v561 = vxor.u32 %v560, 2147483648
  %v562 = vmul.f32 %v561, 1.442695
  %v563 = vpow.pop %v562
  %v564 = vadd.f32 %v563, 1.0
  %v565 = vrcp.pop %v564
  %v566 = vmul.f32 1.0, %v565
  %568 = vrot.lane.b32.xlu0 %v559, 64
  %v569 = vpop.permute.xlu0 %568
  %v571 = vmul.f32 %v566, %v569
  %573 = vrot.lane.b32.xlu0 %v571, 64
  %v574 = vpop.permute.xlu0 %573
  %v576 = vadd.f32 %v498, %v574
  %v577 = vtanh.pop %v576
  %v578 = vsub.f32 1.0, %v566
  %580 = vrot.lane.b32.xlu0 %v577, 96
  %v581 = vpop.permute.xlu0 %580
  %v583 = vmul.f32 %v578, %v581
  %v584 = vmul.f32 %v566, %v486
  %v585 = vadd.f32 %v583, %v584
  %s586 = sadd.s32 %s45, 4
  %p587 = scmp.lt.s32.totalorder %s586, 4
  %s588 = scalar_select %p587, 1, 0
  %v589 = vstv %s588
  %vm590 = vcmp.eq.s32.totalorder %v589, 1
  %v591 = vsel %vm590, %v585, %v486
  %v592 = vpack.c.bf16 %v591, %v591
  %v594 = vunpack.c.l.b16 %v592
  %v595 = vpack.c.b16 %v594, %v594
  %596 = vrot.lane.b32.xlu0 %v595, 96
  %v597 = vpop.permute.xlu0 %596
  %s599 = scalar_lea.vmem %s5, 16
  %600 = vst.msk [vmem:[%s599] sm:$0xf] %vm179, %v597
  %s601 = scalar_lea.vmem %s0, 20
  %v602 = vld [vmem:[%s601] sm:$0xf]
  %v603 = vunpack.c.l.bf16 %v602
  %604 = vrot.lane.b32.xlu0 %v592, 96
  %v605 = vpop.permute.xlu0 %604
  %v607 = vsel %vm70, %v605, 0
  %609 = vmatprep.subr.bf16.mxu0 %v63
  %610 = vmatpush1.bf16.msra.mxu0 %v62
  %611 = vmatprep.subr.bf16.mxu0 %v65
  %612 = vmatpush1.bf16.msra.mxu0 %v64
  %613 = vmatprep.subr.bf16.mxu0 0
  %614 = vmatpush1.bf16.msra.mxu0 0
  %615 = vmatprep.subr.bf16.mxu0 0
  %616 = vmatpush1.bf16.msra.mxu0 0
  %617 = vmatprep.subr.bf16.mxu0 0
  %618 = vmatpush1.bf16.msra.mxu0 0
  %619 = vmatprep.subr.bf16.mxu0 0
  %620 = vmatpush1.bf16.msra.mxu0 0
  %621 = vmatprep.subr.bf16.mxu0 0
  %622 = vmatpush1.bf16.msra.mxu0 0
  %623 = vmatprep.subr.bf16.mxu0 0
  %624 = vmatpush1.bf16.msra.mxu0 0
  %625 = vmatprep.subr.bf16.mxu0 0
  %626 = vmatpush1.bf16.msra.mxu0 0
  %627 = vmatprep.subr.bf16.mxu0 0
  %628 = vmatpush1.bf16.msra.mxu0 0
  %629 = vmatprep.subr.bf16.mxu0 0
  %630 = vmatpush1.bf16.msra.mxu0 0
  %631 = vmatprep.subr.bf16.mxu0 0
  %632 = vmatpush1.bf16.msra.mxu0 0
  %633 = vmatprep.subr.bf16.mxu0 0
  %634 = vmatpush1.bf16.msra.mxu0 0
  %635 = vmatprep.subr.bf16.mxu0 0
  %636 = vmatpush1.bf16.msra.mxu0 0
  %637 = vmatprep.subr.bf16.mxu0 0
  %638 = vmatpush1.bf16.msra.mxu0 0
  %639 = vmatprep.subr.bf16.mxu0 0
  %640 = vmatpush1.bf16.msra.mxu0 0
  %641 = vmatprep.mubr.bf16.mxu0 0
  %642 = vmatmul.mubr.bf16.gmra.mrb[0].mxu0 %v607
  %v643 = vpop.f32.mrb[0].mxu0
  %v644 = vadd.f32 0.0, %v643
  %v645 = vpop.f32.mrb[0].mxu0
  %v646 = vadd.f32 0.0, %v645
  %v647 = vpop.f32.mrb[0].mxu0
  %v648 = vpop.f32.mrb[0].mxu0
  %649 = vdwg.mxu0
  %650 = vset.pattern.permute.xlu0 5
  %651 = vperm.xlu0 %650, %v115
  %v652 = vpop.permute.xlu0 %651
  %vm653 = vcmp.eq.s32.totalorder %v652, 1
  %656 = vrot.lane.b32.xlu0 %v644, 32
  %v657 = vpop.permute.xlu0 %656
  %658 = vrot.lane.b32.xlu0 %v646, 32
  %v659 = vpop.permute.xlu0 %658
  %v660 = vsel %vm70, %v657, %v659
  %v662 = vsel %vm653, %v644, %v660
  %v663 = vsel %vm653, %v37, %v133
  %v664 = vadd.f32 %v662, %v663
  %v665 = vadd.f32 %v603, %v664
  %v666 = vxor.u32 %v665, 2147483648
  %v667 = vmul.f32 %v666, 1.442695
  %v668 = vpow.pop %v667
  %v669 = vadd.f32 %v668, 1.0
  %v670 = vrcp.pop %v669
  %v671 = vmul.f32 1.0, %v670
  %673 = vrot.lane.b32.xlu0 %v664, 64
  %v674 = vpop.permute.xlu0 %673
  %v676 = vmul.f32 %v671, %v674
  %678 = vrot.lane.b32.xlu0 %v676, 64
  %v679 = vpop.permute.xlu0 %678
  %v681 = vadd.f32 %v603, %v679
  %v682 = vtanh.pop %v681
  %v683 = vsub.f32 1.0, %v671
  %685 = vrot.lane.b32.xlu0 %v682, 96
  %v686 = vpop.permute.xlu0 %685
  %v688 = vmul.f32 %v683, %v686
  %v689 = vmul.f32 %v671, %v591
  %v690 = vadd.f32 %v688, %v689
  %s691 = sadd.s32 %s45, 5
  %p692 = scmp.lt.s32.totalorder %s691, 4
  %s693 = scalar_select %p692, 1, 0
  %v694 = vstv %s693
  %vm695 = vcmp.eq.s32.totalorder %v694, 1
  %v696 = vsel %vm695, %v690, %v591
  %v697 = vpack.c.bf16 %v696, %v696
  %v699 = vunpack.c.l.b16 %v697
  %v700 = vpack.c.b16 %v699, %v699
  %701 = vrot.lane.b32.xlu0 %v700, 96
  %v702 = vpop.permute.xlu0 %701
  %s704 = scalar_lea.vmem %s5, 20
  %705 = vst.msk [vmem:[%s704] sm:$0xf] %vm179, %v702
  %s706 = scalar_lea.vmem %s0, 24
  %v707 = vld [vmem:[%s706] sm:$0xf]
  %v708 = vunpack.c.l.bf16 %v707
  %709 = vrot.lane.b32.xlu0 %v697, 96
  %v710 = vpop.permute.xlu0 %709
  %v712 = vsel %vm70, %v710, 0
  %714 = vmatprep.subr.bf16.mxu0 %v63
  %715 = vmatpush1.bf16.msra.mxu0 %v62
  %716 = vmatprep.subr.bf16.mxu0 %v65
  %717 = vmatpush1.bf16.msra.mxu0 %v64
  %718 = vmatprep.subr.bf16.mxu0 0
  %719 = vmatpush1.bf16.msra.mxu0 0
  %720 = vmatprep.subr.bf16.mxu0 0
  %721 = vmatpush1.bf16.msra.mxu0 0
  %722 = vmatprep.subr.bf16.mxu0 0
  %723 = vmatpush1.bf16.msra.mxu0 0
  %724 = vmatprep.subr.bf16.mxu0 0
  %725 = vmatpush1.bf16.msra.mxu0 0
  %726 = vmatprep.subr.bf16.mxu0 0
  %727 = vmatpush1.bf16.msra.mxu0 0
  %728 = vmatprep.subr.bf16.mxu0 0
  %729 = vmatpush1.bf16.msra.mxu0 0
  %730 = vmatprep.subr.bf16.mxu0 0
  %731 = vmatpush1.bf16.msra.mxu0 0
  %732 = vmatprep.subr.bf16.mxu0 0
  %733 = vmatpush1.bf16.msra.mxu0 0
  %734 = vmatprep.subr.bf16.mxu0 0
  %735 = vmatpush1.bf16.msra.mxu0 0
  %736 = vmatprep.subr.bf16.mxu0 0
  %737 = vmatpush1.bf16.msra.mxu0 0
  %738 = vmatprep.subr.bf16.mxu0 0
  %739 = vmatpush1.bf16.msra.mxu0 0
  %740 = vmatprep.subr.bf16.mxu0 0
  %741 = vmatpush1.bf16.msra.mxu0 0
  %742 = vmatprep.subr.bf16.mxu0 0
  %743 = vmatpush1.bf16.msra.mxu0 0
  %744 = vmatprep.subr.bf16.mxu0 0
  %745 = vmatpush1.bf16.msra.mxu0 0
  %746 = vmatprep.mubr.bf16.mxu0 0
  %747 = vmatmul.mubr.bf16.gmra.mrb[0].mxu0 %v712
  %v748 = vpop.f32.mrb[0].mxu0
  %v749 = vadd.f32 0.0, %v748
  %v750 = vpop.f32.mrb[0].mxu0
  %v751 = vadd.f32 0.0, %v750
  %v752 = vpop.f32.mrb[0].mxu0
  %v753 = vpop.f32.mrb[0].mxu0
  %754 = vdwg.mxu0
  %755 = vset.pattern.permute.xlu0 6
  %756 = vperm.xlu0 %755, %v115
  %v757 = vpop.permute.xlu0 %756
  %vm758 = vcmp.eq.s32.totalorder %v757, 1
  %761 = vrot.lane.b32.xlu0 %v749, 32
  %v762 = vpop.permute.xlu0 %761
  %763 = vrot.lane.b32.xlu0 %v751, 32
  %v764 = vpop.permute.xlu0 %763
  %v765 = vsel %vm70, %v762, %v764
  %v767 = vsel %vm758, %v749, %v765
  %v768 = vsel %vm758, %v37, %v133
  %v769 = vadd.f32 %v767, %v768
  %v770 = vadd.f32 %v708, %v769
  %v771 = vxor.u32 %v770, 2147483648
  %v772 = vmul.f32 %v771, 1.442695
  %v773 = vpow.pop %v772
  %v774 = vadd.f32 %v773, 1.0
  %v775 = vrcp.pop %v774
  %v776 = vmul.f32 1.0, %v775
  %778 = vrot.lane.b32.xlu0 %v769, 64
  %v779 = vpop.permute.xlu0 %778
  %v781 = vmul.f32 %v776, %v779
  %783 = vrot.lane.b32.xlu0 %v781, 64
  %v784 = vpop.permute.xlu0 %783
  %v786 = vadd.f32 %v708, %v784
  %v787 = vtanh.pop %v786
  %v788 = vsub.f32 1.0, %v776
  %790 = vrot.lane.b32.xlu0 %v787, 96
  %v791 = vpop.permute.xlu0 %790
  %v793 = vmul.f32 %v788, %v791
  %v794 = vmul.f32 %v776, %v696
  %v795 = vadd.f32 %v793, %v794
  %s796 = sadd.s32 %s45, 6
  %p797 = scmp.lt.s32.totalorder %s796, 4
  %s798 = scalar_select %p797, 1, 0
  %v799 = vstv %s798
  %vm800 = vcmp.eq.s32.totalorder %v799, 1
  %v801 = vsel %vm800, %v795, %v696
  %v802 = vpack.c.bf16 %v801, %v801
  %v804 = vunpack.c.l.b16 %v802
  %v805 = vpack.c.b16 %v804, %v804
  %806 = vrot.lane.b32.xlu0 %v805, 96
  %v807 = vpop.permute.xlu0 %806
  %s809 = scalar_lea.vmem %s5, 24
  %810 = vst.msk [vmem:[%s809] sm:$0xf] %vm179, %v807
  %s811 = scalar_lea.vmem %s0, 28
  %v812 = vld [vmem:[%s811] sm:$0xf]
  %v813 = vunpack.c.l.bf16 %v812
  %814 = vrot.lane.b32.xlu0 %v802, 96
  %v815 = vpop.permute.xlu0 %814
  %v817 = vsel %vm70, %v815, 0
  %819 = vmatprep.subr.bf16.mxu0 %v63
  %820 = vmatpush1.bf16.msra.mxu0 %v62
  %821 = vmatprep.subr.bf16.mxu0 %v65
  %822 = vmatpush1.bf16.msra.mxu0 %v64
  %823 = vmatprep.subr.bf16.mxu0 0
  %824 = vmatpush1.bf16.msra.mxu0 0
  %825 = vmatprep.subr.bf16.mxu0 0
  %826 = vmatpush1.bf16.msra.mxu0 0
  %827 = vmatprep.subr.bf16.mxu0 0
  %828 = vmatpush1.bf16.msra.mxu0 0
  %829 = vmatprep.subr.bf16.mxu0 0
  %830 = vmatpush1.bf16.msra.mxu0 0
  %831 = vmatprep.subr.bf16.mxu0 0
  %832 = vmatpush1.bf16.msra.mxu0 0
  %833 = vmatprep.subr.bf16.mxu0 0
  %834 = vmatpush1.bf16.msra.mxu0 0
  %835 = vmatprep.subr.bf16.mxu0 0
  %836 = vmatpush1.bf16.msra.mxu0 0
  %837 = vmatprep.subr.bf16.mxu0 0
  %838 = vmatpush1.bf16.msra.mxu0 0
  %839 = vmatprep.subr.bf16.mxu0 0
  %840 = vmatpush1.bf16.msra.mxu0 0
  %841 = vmatprep.subr.bf16.mxu0 0
  %842 = vmatpush1.bf16.msra.mxu0 0
  %843 = vmatprep.subr.bf16.mxu0 0
  %844 = vmatpush1.bf16.msra.mxu0 0
  %845 = vmatprep.subr.bf16.mxu0 0
  %846 = vmatpush1.bf16.msra.mxu0 0
  %847 = vmatprep.subr.bf16.mxu0 0
  %848 = vmatpush1.bf16.msra.mxu0 0
  %849 = vmatprep.subr.bf16.mxu0 0
  %850 = vmatpush1.bf16.msra.mxu0 0
  %851 = vmatprep.mubr.bf16.mxu0 0
  %852 = vmatmul.mubr.bf16.gmra.mrb[0].mxu0 %v817
  %v853 = vpop.f32.mrb[0].mxu0
  %v854 = vadd.f32 0.0, %v853
  %v855 = vpop.f32.mrb[0].mxu0
  %v856 = vadd.f32 0.0, %v855
  %v857 = vpop.f32.mrb[0].mxu0
  %v858 = vpop.f32.mrb[0].mxu0
  %859 = vdwg.mxu0
  %860 = vset.pattern.permute.xlu0 7
  %861 = vperm.xlu0 %860, %v115
  %v862 = vpop.permute.xlu0 %861
  %vm863 = vcmp.eq.s32.totalorder %v862, 1
  %866 = vrot.lane.b32.xlu0 %v854, 32
  %v867 = vpop.permute.xlu0 %866
  %868 = vrot.lane.b32.xlu0 %v856, 32
  %v869 = vpop.permute.xlu0 %868
  %v870 = vsel %vm70, %v867, %v869
  %v872 = vsel %vm863, %v854, %v870
  %v873 = vsel %vm863, %v37, %v133
  %v874 = vadd.f32 %v872, %v873
  %v875 = vadd.f32 %v813, %v874
  %v876 = vxor.u32 %v875, 2147483648
  %v877 = vmul.f32 %v876, 1.442695
  %v878 = vpow.pop %v877
  %v879 = vadd.f32 %v878, 1.0
  %v880 = vrcp.pop %v879
  %v881 = vmul.f32 1.0, %v880
  %883 = vrot.lane.b32.xlu0 %v874, 64
  %v884 = vpop.permute.xlu0 %883
  %v886 = vmul.f32 %v881, %v884
  %888 = vrot.lane.b32.xlu0 %v886, 64
  %v889 = vpop.permute.xlu0 %888
  %v891 = vadd.f32 %v813, %v889
  %v892 = vtanh.pop %v891
  %v893 = vsub.f32 1.0, %v881
  %895 = vrot.lane.b32.xlu0 %v892, 96
  %v896 = vpop.permute.xlu0 %895
  %v898 = vmul.f32 %v893, %v896
  %v899 = vmul.f32 %v881, %v801
  %v900 = vadd.f32 %v898, %v899
  %s901 = sadd.s32 %s45, 7
  %p902 = scmp.lt.s32.totalorder %s901, 4
  %s903 = scalar_select %p902, 1, 0
  %v904 = vstv %s903
  %vm905 = vcmp.eq.s32.totalorder %v904, 1
  %v906 = vsel %vm905, %v900, %v801
  %v907 = vpack.c.bf16 %v906, %v906
  %v909 = vunpack.c.l.b16 %v907
  %v910 = vpack.c.b16 %v909, %v909
  %911 = vrot.lane.b32.xlu0 %v910, 96
  %v912 = vpop.permute.xlu0 %911
  %s914 = scalar_lea.vmem %s5, 28
  %915 = vst.msk [vmem:[%s914] sm:$0xf] %vm179, %v912
  %917 = vrot.lane.b32.xlu0 %v906, 96
  %v918 = vpop.permute.xlu0 %917
  %920 = vst.msk [vmem:[#allocation2] sm:$0xff] %vm70, %v918
  // Predicated region
  $region26: #{vrnn_forward.6} parent=0 // pred_check
    _
  $region27: #{vrnn_forward.6} parent=0 // pred_check_branch
    %922 = sbr.rel (0) target = $region29
  $region28: #{vrnn_forward.6} parent=0 // pred_region
    _
  $region29: #{vrnn_forward.6} parent=0 // pred_fallthru
    _
  // Predicated region
  $region30: #{vrnn_forward.6} parent=0 // pred_check
    _
  $region31: #{vrnn_forward.6} parent=0 // pred_check_branch
    %924 = sbr.rel (0) target = $region33
  $region32: #{vrnn_forward.6} parent=0 // pred_region
    _
  $region33: #{vrnn_forward.6} parent=0 // pred_fallthru
    _

// kernel: vrnn_forward.5
$region0: #{vrnn_forward.5}
  #allocation0 [shape = 'u32[]', space=smem, size = 0x4, offset = 0x4, fixed_abs, tag = 'smem constant byte address 0x4 - core index']
  #allocation1 [shape = 'u32[144,128]{1,0:T(1,128)}', space=vmem, size = 0x12000, scoped, tag = 'internal scratch']
  #allocation2 [shape = 'f32[8,32]{1,0:T(8,128)}', space=vmem, size = 0x1000, scoped, tag = 'scratch operand']
  %s0 = inlined_call_operand.vmem [shape: bf16[8,8,96], index: 0, kind: input, shape index: {}]
  %s1 = inlined_call_operand.vmem [shape: f32[1,8,8], index: 1, kind: input, shape index: {}]
  %s2 = inlined_call_operand.vmem [shape: f32[8,32], index: 2, kind: input, shape index: {}]
  %s3 = inlined_call_operand.vmem [shape: bf16[32,192], index: 3, kind: input, shape index: {}]
  %s4 = inlined_call_operand.vmem [shape: f32[1,192], index: 4, kind: input, shape index: {}]
  %s5 = inlined_call_operand.vmem [shape: bf16[32,32], index: 5, kind: input, shape index: {}]
  %s6 = inlined_call_operand.vmem [shape: f32[1,32], index: 6, kind: input, shape index: {}]
  %s7 = inlined_call_operand.vmem [shape: bf16[16,32], index: 7, kind: input, shape index: {}]
  %s8 = inlined_call_operand.vmem [shape: f32[1,32], index: 8, kind: input, shape index: {}]
  %s9 = inlined_call_operand.vmem [shape: f32[8,16], index: 9, kind: input, shape index: {}]
  %s10 = inlined_call_operand.hbm [shape: f32[8,16], index: 10, kind: output, shape index: {0}]
  %s11 = inlined_call_operand.hbm [shape: f32[8,16], index: 11, kind: output, shape index: {1}]
  %s12 = inlined_call_operand.hbm [shape: f32[8,16], index: 12, kind: output, shape index: {2}]
  %s13 = inlined_call_operand.vmem [shape: f32[8,32], index: 13, kind: output, shape index: {3}]
  %14 = xla_tuple %s10, %s11, %s12, %s13
  %s15 = sld [smem:[#allocation0]]
  $region82: #{vrnn_forward.5} parent=0
    _
  %s17 = ssub.s32 1, %s15
  %s18 = scalar_select 0, %s17, %s15
  $region1: #{vrnn_forward.5} parent=0
    #allocation3 [shape = 'u8[4096]{0}', space=vmem, size = 0x1000, scoped, tag = 'output window, operand 0, single buffered']
    #allocation4 [shape = 's32[1]{0}', space=sflag, size = 0x4, scoped, tag = 'scoped memory for vrnn_forward.5']
    #allocation5 [shape = 'u8[4096]{0}', space=vmem, size = 0x1000, scoped, tag = 'output window, operand 1, single buffered']
    #allocation6 [shape = 's32[1]{0}', space=sflag, size = 0x4, scoped, tag = 'scoped memory for vrnn_forward.5']
    #allocation7 [shape = 'u8[4096]{0}', space=vmem, size = 0x1000, scoped, tag = 'output window, operand 2, single buffered']
    %19 = vsyncpa [#allocation4], 0
    %20 = vsyncpa [#allocation6], 0
    // Predicated region
    $region2: #{vrnn_forward.5} parent=1 // pred_check
      _
    $region3: #{vrnn_forward.5} parent=1 // pred_check_branch
      %22 = sbr.rel (0) target = $region5
    $region4: #{vrnn_forward.5} parent=1 // pred_region
      _
    $region5: #{vrnn_forward.5} parent=1 // pred_fallthru
      _
    // Predicated region
    $region6: #{vrnn_forward.5} parent=1 // pred_check
      _
    $region7: #{vrnn_forward.5} parent=1 // pred_check_branch
      %24 = sbr.rel (0) target = $region9
    $region8: #{vrnn_forward.5} parent=1 // pred_region
      _
    $region9: #{vrnn_forward.5} parent=1 // pred_fallthru
      _
    // Predicated region
    $region10: #{vrnn_forward.5} parent=1 // pred_check
      _
    $region11: #{vrnn_forward.5} parent=1 // pred_check_branch
      %26 = sbr.rel (0) target = $region13
    $region12: #{vrnn_forward.5} parent=1 // pred_region
      _
    $region13: #{vrnn_forward.5} parent=1 // pred_fallthru
      _
    // Predicated region
    $region14: #{vrnn_forward.5} parent=1 // pred_check
      _
    $region15: #{vrnn_forward.5} parent=1 // pred_check_branch
      %28 = sbr.rel (0) target = $region17
    $region16: #{vrnn_forward.5} parent=1 // pred_region
      _
    $region17: #{vrnn_forward.5} parent=1 // pred_fallthru
      _
    // Predicated region
    $region18: #{vrnn_forward.5} parent=1 // pred_check
      _
    $region19: #{vrnn_forward.5} parent=1 // pred_check_branch
      %30 = sbr.rel (0) target = $region21
    $region20: #{vrnn_forward.5} parent=1 // pred_region
      _
    $region21: #{vrnn_forward.5} parent=1 // pred_fallthru
      _
    // Predicated region
    $region22: #{vrnn_forward.5} parent=1 // pred_check
      _
    $region23: #{vrnn_forward.5} parent=1 // pred_check_branch
      %32 = sbr.rel (0) target = $region25
    $region24: #{vrnn_forward.5} parent=1 // pred_region
      _
    $region25: #{vrnn_forward.5} parent=1 // pred_fallthru
      _
    // Predicated region
    $region26: #{vrnn_forward.5} parent=1 // pred_check
      _
    $region27: #{vrnn_forward.5} parent=1 // pred_check_branch
      %34 = sbr.rel (0) target = $region29
    $region28: #{vrnn_forward.5} parent=1 // pred_region
      _
    $region29: #{vrnn_forward.5} parent=1 // pred_fallthru
      _
    // Predicated region
    $region30: #{vrnn_forward.5} parent=1 // pred_check
      _
    $region31: #{vrnn_forward.5} parent=1 // pred_check_branch
      %36 = sbr.rel (0) target = $region33
    $region32: #{vrnn_forward.5} parent=1 // pred_region
      _
    $region33: #{vrnn_forward.5} parent=1 // pred_fallthru
      _
    // Predicated region
    $region34: #{vrnn_forward.5} parent=1 // pred_check
      _
    $region35: #{vrnn_forward.5} parent=1 // pred_check_branch
      %38 = sbr.rel (0) target = $region37
    $region36: #{vrnn_forward.5} parent=1 // pred_region
      _
    $region37: #{vrnn_forward.5} parent=1 // pred_fallthru
      _
    // Predicated region
    $region38: #{vrnn_forward.5} parent=1 // pred_check
      _
    $region39: #{vrnn_forward.5} parent=1 // pred_check_branch
      %40 = sbr.rel (0) target = $region41
    $region40: #{vrnn_forward.5} parent=1 // pred_region
      _
    $region41: #{vrnn_forward.5} parent=1 // pred_fallthru
      _
    %p42 = scmp.eq.s32.totalorder 0, 0
    // Predicated region
    $region42: #{vrnn_forward.5} parent=1 // pred_check
      %p43 = pneg %p42
    $region43: #{vrnn_forward.5} parent=1 // pred_check_branch
      %45 = sbr.rel (%p43) target = $region45
    $region44: #{vrnn_forward.5} parent=1 // pred_region
      %v46 = vld [vmem:[%s2] sm:$0xff]
      %vm47 = vcmask 261120
      %48 = vst.msk [vmem:[#allocation2] sm:$0xff] %vm47, %v46
    $region45: #{vrnn_forward.5} parent=1 // pred_fallthru
      _
    %v49 = vld [vmem:[%s3] sm:$0xff]
    %v50 = vld [vmem:[%s3 + $0x8] sm:$0xff]
    %v51 = vld [vmem:[%s3 + $0x10] sm:$0xff]
    %v52 = vld [vmem:[%s3 + $0x18] sm:$0xff]
    %v53 = vld [vmem:[%s4] sm:$0x3]
    %v55 = vlaneseq
    %v56 = vshrl.u32 %v55, 7
    %v57 = vsub.s32 0, %v56
    %v58 = vrot.slane %v53, %v57
    %v60 = vlaneseq
    %v61 = vshrl.u32 %v60, 7
    %v62 = vsub.s32 1, %v61
    %v63 = vrot.slane %v53, %v62
    %v64 = vld [vmem:[%s1] sm:$0xff]
    %v65 = vld [vmem:[#allocation2] sm:$0xff]
    %s66 = smul.u32 0, 8
    %v67 = vld [vmem:[%s0] sm:$0xf]
    %v68 = vunpack.c.l.bf16 %v67
    %vm69 = vcmp.gt.f32.partialorder %v64, 0.5
    %v70 = vpack.c.bf16 %v65, %v65
    %v75 = vunpack.c.l.b16 %v49
    %v76 = vunpack.c.h.b16 %v49
    %v77 = vunpack.c.l.b16 %v50
    %v78 = vunpack.c.h.b16 %v50
    %v79 = vunpack.c.l.b16 %v51
    %v80 = vunpack.c.h.b16 %v51
    %v81 = vunpack.c.l.b16 %v52
    %v82 = vunpack.c.h.b16 %v52
    %v83 = vpack.c.b16 %v77, %v75
    %v84 = vpack.c.b16 %v78, %v76
    %v85 = vpack.c.b16 %v81, %v79
    %v86 = vpack.c.b16 %v82, %v80
    %vm91 = vcmask 261120
    %v93 = vsel %vm91, %v70, 0
    %95 = vmatprep.subr.bf16.mxu0 %v84
    %96 = vmatpush1.bf16.msra.mxu0 %v83
    %97 = vmatprep.subr.bf16.mxu0 %v86
    %98 = vmatpush1.bf16.msra.mxu0 %v85
    %99 = vmatprep.subr.bf16.mxu0 0
    %100 = vmatpush1.bf16.msra.mxu0 0
    %101 = vmatprep.subr.bf16.mxu0 0
    %102 = vmatpush1.bf16.msra.mxu0 0
    %103 = vmatprep.subr.bf16.mxu0 0
    %104 = vmatpush1.bf16.msra.mxu0 0
    %105 = vmatprep.subr.bf16.mxu0 0
    %106 = vmatpush1.bf16.msra.mxu0 0
    %107 = vmatprep.subr.bf16.mxu0 0
    %108 = vmatpush1.bf16.msra.mxu0 0
    %109 = vmatprep.subr.bf16.mxu0 0
    %110 = vmatpush1.bf16.msra.mxu0 0
    %111 = vmatprep.subr.bf16.mxu0 0
    %112 = vmatpush1.bf16.msra.mxu0 0
    %113 = vmatprep.subr.bf16.mxu0 0
    %114 = vmatpush1.bf16.msra.mxu0 0
    %115 = vmatprep.subr.bf16.mxu0 0
    %116 = vmatpush1.bf16.msra.mxu0 0
    %117 = vmatprep.subr.bf16.mxu0 0
    %118 = vmatpush1.bf16.msra.mxu0 0
    %119 = vmatprep.subr.bf16.mxu0 0
    %120 = vmatpush1.bf16.msra.mxu0 0
    %121 = vmatprep.subr.bf16.mxu0 0
    %122 = vmatpush1.bf16.msra.mxu0 0
    %123 = vmatprep.subr.bf16.mxu0 0
    %124 = vmatpush1.bf16.msra.mxu0 0
    %125 = vmatprep.subr.bf16.mxu0 0
    %126 = vmatpush1.bf16.msra.mxu0 0
    %127 = vmatprep.mubr.bf16.mxu0 0
    %128 = vmatmul.mubr.bf16.gmra.mrb[0].mxu0 %v93
    %v129 = vpop.f32.mrb[0].mxu0
    %v130 = vadd.f32 0.0, %v129
    %v131 = vpop.f32.mrb[0].mxu0
    %v132 = vadd.f32 0.0, %v131
    %v133 = vpop.f32.mrb[0].mxu0
    %v134 = vpop.f32.mrb[0].mxu0
    %135 = vdwg.mxu0
    %v136 = vsel %vm69, 1, 0
    %137 = vset.pattern.permute.xlu0 0
    %138 = vperm.xlu0 %137, %v136
    %v139 = vpop.permute.xlu0 %138
    %vm140 = vcmp.eq.s32.totalorder %v139, 1
    %143 = vrot.lane.b32.xlu0 %v130, 32
    %v144 = vpop.permute.xlu0 %143
    %145 = vrot.lane.b32.xlu0 %v132, 32
    %v146 = vpop.permute.xlu0 %145
    %v147 = vsel %vm91, %v144, %v146
    %v149 = vsel %vm140, %v130, %v147
    %150 = vrot.lane.b32.xlu0 %v58, 32
    %v151 = vpop.permute.xlu0 %150
    %152 = vrot.lane.b32.xlu0 %v63, 32
    %v153 = vpop.permute.xlu0 %152
    %v154 = vsel %vm91, %v151, %v153
    %v156 = vsel %vm140, %v58, %v154
    %v157 = vadd.f32 %v149, %v156
    %v158 = vadd.f32 %v68, %v157
    %v159 = vxor.u32 %v158, 2147483648
    %v160 = vmul.f32 %v159, 1.442695
    %v161 = vpow.pop %v160
    %v162 = vadd.f32 %v161, 1.0
    %v163 = vrcp.pop %v162
    %v164 = vmul.f32 1.0, %v163
    %166 = vrot.lane.b32.xlu0 %v157, 64
    %v167 = vpop.permute.xlu0 %166
    %v169 = vmul.f32 %v164, %v167
    %171 = vrot.lane.b32.xlu0 %v169, 64
    %v172 = vpop.permute.xlu0 %171
    %v174 = vadd.f32 %v68, %v172
    %v175 = vtanh.pop %v174
    %v176 = vsub.f32 1.0, %v164
    %178 = vrot.lane.b32.xlu0 %v175, 96
    %v179 = vpop.permute.xlu0 %178
    %v181 = vmul.f32 %v176, %v179
    %183 = vrot.lane.b32.xlu0 %v65, 32
    %v184 = vpop.permute.xlu0 %183
    %v186 = vmul.f32 %v164, %v184
    %v187 = vadd.f32 %v181, %v186
    %p188 = scmp.lt.s32.totalorder %s66, 4
    %s189 = scalar_select %p188, 1, 0
    %v190 = vstv %s189
    %vm191 = vcmp.eq.s32.totalorder %v190, 1
    %v192 = vsel %vm191, %v187, %v184
    %s193 = scalar_lea.vmem %s0, 4
    %v194 = vld [vmem:[%s193] sm:$0xf]
    %v195 = vunpack.c.l.bf16 %v194
    %v196 = vpack.c.bf16 %v192, %v192
    %198 = vrot.lane.b32.xlu0 %v196, 96
    %v199 = vpop.permute.xlu0 %198
    %v201 = vsel %vm91, %v199, 0
    %203 = vmatprep.subr.bf16.mxu0 %v84
    %204 = vmatpush1.bf16.msra.mxu0 %v83
    %205 = vmatprep.subr.bf16.mxu0 %v86
    %206 = vmatpush1.bf16.msra.mxu0 %v85
    %207 = vmatprep.subr.bf16.mxu0 0
    %208 = vmatpush1.bf16.msra.mxu0 0
    %209 = vmatprep.subr.bf16.mxu0 0
    %210 = vmatpush1.bf16.msra.mxu0 0
    %211 = vmatprep.subr.bf16.mxu0 0
    %212 = vmatpush1.bf16.msra.mxu0 0
    %213 = vmatprep.subr.bf16.mxu0 0
    %214 = vmatpush1.bf16.msra.mxu0 0
    %215 = vmatprep.subr.bf16.mxu0 0
    %216 = vmatpush1.bf16.msra.mxu0 0
    %217 = vmatprep.subr.bf16.mxu0 0
    %218 = vmatpush1.bf16.msra.mxu0 0
    %219 = vmatprep.subr.bf16.mxu0 0
    %220 = vmatpush1.bf16.msra.mxu0 0
    %221 = vmatprep.subr.bf16.mxu0 0
    %222 = vmatpush1.bf16.msra.mxu0 0
    %223 = vmatprep.subr.bf16.mxu0 0
    %224 = vmatpush1.bf16.msra.mxu0 0
    %225 = vmatprep.subr.bf16.mxu0 0
    %226 = vmatpush1.bf16.msra.mxu0 0
    %227 = vmatprep.subr.bf16.mxu0 0
    %228 = vmatpush1.bf16.msra.mxu0 0
    %229 = vmatprep.subr.bf16.mxu0 0
    %230 = vmatpush1.bf16.msra.mxu0 0
    %231 = vmatprep.subr.bf16.mxu0 0
    %232 = vmatpush1.bf16.msra.mxu0 0
    %233 = vmatprep.subr.bf16.mxu0 0
    %234 = vmatpush1.bf16.msra.mxu0 0
    %235 = vmatprep.mubr.bf16.mxu0 0
    %236 = vmatmul.mubr.bf16.gmra.mrb[0].mxu0 %v201
    %v237 = vpop.f32.mrb[0].mxu0
    %v238 = vadd.f32 0.0, %v237
    %v239 = vpop.f32.mrb[0].mxu0
    %v240 = vadd.f32 0.0, %v239
    %v241 = vpop.f32.mrb[0].mxu0
    %v242 = vpop.f32.mrb[0].mxu0
    %243 = vdwg.mxu0
    %244 = vset.pattern.permute.xlu0 1
    %245 = vperm.xlu0 %244, %v136
    %v246 = vpop.permute.xlu0 %245
    %vm247 = vcmp.eq.s32.totalorder %v246, 1
    %250 = vrot.lane.b32.xlu0 %v238, 32
    %v251 = vpop.permute.xlu0 %250
    %252 = vrot.lane.b32.xlu0 %v240, 32
    %v253 = vpop.permute.xlu0 %252
    %v254 = vsel %vm91, %v251, %v253
    %v256 = vsel %vm247, %v238, %v254
    %v257 = vsel %vm247, %v58, %v154
    %v258 = vadd.f32 %v256, %v257
    %v259 = vadd.f32 %v195, %v258
    %v260 = vxor.u32 %v259, 2147483648
    %v261 = vmul.f32 %v260, 1.442695
    %v262 = vpow.pop %v261
    %v263 = vadd.f32 %v262, 1.0
    %v264 = vrcp.pop %v263
    %v265 = vmul.f32 1.0, %v264
    %267 = vrot.lane.b32.xlu0 %v258, 64
    %v268 = vpop.permute.xlu0 %267
    %v270 = vmul.f32 %v265, %v268
    %272 = vrot.lane.b32.xlu0 %v270, 64
    %v273 = vpop.permute.xlu0 %272
    %v275 = vadd.f32 %v195, %v273
    %v276 = vtanh.pop %v275
    %v277 = vsub.f32 1.0, %v265
    %279 = vrot.lane.b32.xlu0 %v276, 96
    %v280 = vpop.permute.xlu0 %279
    %v282 = vmul.f32 %v277, %v280
    %v283 = vmul.f32 %v265, %v192
    %v284 = vadd.f32 %v282, %v283
    %s285 = sadd.s32 %s66, 1
    %p286 = scmp.lt.s32.totalorder %s285, 4
    %s287 = scalar_select %p286, 1, 0
    %v288 = vstv %s287
    %vm289 = vcmp.eq.s32.totalorder %v288, 1
    %v290 = vsel %vm289, %v284, %v192
    %s291 = scalar_lea.vmem %s0, 8
    %v292 = vld [vmem:[%s291] sm:$0xf]
    %v293 = vunpack.c.l.bf16 %v292
    %v294 = vpack.c.bf16 %v290, %v290
    %296 = vrot.lane.b32.xlu0 %v294, 96
    %v297 = vpop.permute.xlu0 %296
    %v299 = vsel %vm91, %v297, 0
    %301 = vmatprep.subr.bf16.mxu0 %v84
    %302 = vmatpush1.bf16.msra.mxu0 %v83
    %303 = vmatprep.subr.bf16.mxu0 %v86
    %304 = vmatpush1.bf16.msra.mxu0 %v85
    %305 = vmatprep.subr.bf16.mxu0 0
    %306 = vmatpush1.bf16.msra.mxu0 0
    %307 = vmatprep.subr.bf16.mxu0 0
    %308 = vmatpush1.bf16.msra.mxu0 0
    %309 = vmatprep.subr.bf16.mxu0 0
    %310 = vmatpush1.bf16.msra.mxu0 0
    %311 = vmatprep.subr.bf16.mxu0 0
    %312 = vmatpush1.bf16.msra.mxu0 0
    %313 = vmatprep.subr.bf16.mxu0 0
    %314 = vmatpush1.bf16.msra.mxu0 0
    %315 = vmatprep.subr.bf16.mxu0 0
    %316 = vmatpush1.bf16.msra.mxu0 0
    %317 = vmatprep.subr.bf16.mxu0 0
    %318 = vmatpush1.bf16.msra.mxu0 0
    %319 = vmatprep.subr.bf16.mxu0 0
    %320 = vmatpush1.bf16.msra.mxu0 0
    %321 = vmatprep.subr.bf16.mxu0 0
    %322 = vmatpush1.bf16.msra.mxu0 0
    %323 = vmatprep.subr.bf16.mxu0 0
    %324 = vmatpush1.bf16.msra.mxu0 0
    %325 = vmatprep.subr.bf16.mxu0 0
    %326 = vmatpush1.bf16.msra.mxu0 0
    %327 = vmatprep.subr.bf16.mxu0 0
    %328 = vmatpush1.bf16.msra.mxu0 0
    %329 = vmatprep.subr.bf16.mxu0 0
    %330 = vmatpush1.bf16.msra.mxu0 0
    %331 = vmatprep.subr.bf16.mxu0 0
    %332 = vmatpush1.bf16.msra.mxu0 0
    %333 = vmatprep.mubr.bf16.mxu0 0
    %334 = vmatmul.mubr.bf16.gmra.mrb[0].mxu0 %v299
    %v335 = vpop.f32.mrb[0].mxu0
    %v336 = vadd.f32 0.0, %v335
    %v337 = vpop.f32.mrb[0].mxu0
    %v338 = vadd.f32 0.0, %v337
    %v339 = vpop.f32.mrb[0].mxu0
    %v340 = vpop.f32.mrb[0].mxu0
    %341 = vdwg.mxu0
    %342 = vset.pattern.permute.xlu0 2
    %343 = vperm.xlu0 %342, %v136
    %v344 = vpop.permute.xlu0 %343
    %vm345 = vcmp.eq.s32.totalorder %v344, 1
    %348 = vrot.lane.b32.xlu0 %v336, 32
    %v349 = vpop.permute.xlu0 %348
    %350 = vrot.lane.b32.xlu0 %v338, 32
    %v351 = vpop.permute.xlu0 %350
    %v352 = vsel %vm91, %v349, %v351
    %v354 = vsel %vm345, %v336, %v352
    %v355 = vsel %vm345, %v58, %v154
    %v356 = vadd.f32 %v354, %v355
    %v357 = vadd.f32 %v293, %v356
    %v358 = vxor.u32 %v357, 2147483648
    %v359 = vmul.f32 %v358, 1.442695
    %v360 = vpow.pop %v359
    %v361 = vadd.f32 %v360, 1.0
    %v362 = vrcp.pop %v361
    %v363 = vmul.f32 1.0, %v362
    %365 = vrot.lane.b32.xlu0 %v356, 64
    %v366 = vpop.permute.xlu0 %365
    %v368 = vmul.f32 %v363, %v366
    %370 = vrot.lane.b32.xlu0 %v368, 64
    %v371 = vpop.permute.xlu0 %370
    %v373 = vadd.f32 %v293, %v371
    %v374 = vtanh.pop %v373
    %v375 = vsub.f32 1.0, %v363
    %377 = vrot.lane.b32.xlu0 %v374, 96
    %v378 = vpop.permute.xlu0 %377
    %v380 = vmul.f32 %v375, %v378
    %v381 = vmul.f32 %v363, %v290
    %v382 = vadd.f32 %v380, %v381
    %s383 = sadd.s32 %s66, 2
    %p384 = scmp.lt.s32.totalorder %s383, 4
    %s385 = scalar_select %p384, 1, 0
    %v386 = vstv %s385
    %vm387 = vcmp.eq.s32.totalorder %v386, 1
    %v388 = vsel %vm387, %v382, %v290
    %s389 = scalar_lea.vmem %s0, 12
    %v390 = vld [vmem:[%s389] sm:$0xf]
    %v391 = vunpack.c.l.bf16 %v390
    %v392 = vpack.c.bf16 %v388, %v388
    %394 = vrot.lane.b32.xlu0 %v392, 96
    %v395 = vpop.permute.xlu0 %394
    %v397 = vsel %vm91, %v395, 0
    %399 = vmatprep.subr.bf16.mxu0 %v84
    %400 = vmatpush1.bf16.msra.mxu0 %v83
    %401 = vmatprep.subr.bf16.mxu0 %v86
    %402 = vmatpush1.bf16.msra.mxu0 %v85
    %403 = vmatprep.subr.bf16.mxu0 0
    %404 = vmatpush1.bf16.msra.mxu0 0
    %405 = vmatprep.subr.bf16.mxu0 0
    %406 = vmatpush1.bf16.msra.mxu0 0
    %407 = vmatprep.subr.bf16.mxu0 0
    %408 = vmatpush1.bf16.msra.mxu0 0
    %409 = vmatprep.subr.bf16.mxu0 0
    %410 = vmatpush1.bf16.msra.mxu0 0
    %411 = vmatprep.subr.bf16.mxu0 0
    %412 = vmatpush1.bf16.msra.mxu0 0
    %413 = vmatprep.subr.bf16.mxu0 0
    %414 = vmatpush1.bf16.msra.mxu0 0
    %415 = vmatprep.subr.bf16.mxu0 0
    %416 = vmatpush1.bf16.msra.mxu0 0
    %417 = vmatprep.subr.bf16.mxu0 0
    %418 = vmatpush1.bf16.msra.mxu0 0
    %419 = vmatprep.subr.bf16.mxu0 0
    %420 = vmatpush1.bf16.msra.mxu0 0
    %421 = vmatprep.subr.bf16.mxu0 0
    %422 = vmatpush1.bf16.msra.mxu0 0
    %423 = vmatprep.subr.bf16.mxu0 0
    %424 = vmatpush1.bf16.msra.mxu0 0
    %425 = vmatprep.subr.bf16.mxu0 0
    %426 = vmatpush1.bf16.msra.mxu0 0
    %427 = vmatprep.subr.bf16.mxu0 0
    %428 = vmatpush1.bf16.msra.mxu0 0
    %429 = vmatprep.subr.bf16.mxu0 0
    %430 = vmatpush1.bf16.msra.mxu0 0
    %431 = vmatprep.mubr.bf16.mxu0 0
    %432 = vmatmul.mubr.bf16.gmra.mrb[0].mxu0 %v397
    %v433 = vpop.f32.mrb[0].mxu0
    %v434 = vadd.f32 0.0, %v433
    %v435 = vpop.f32.mrb[0].mxu0
    %v436 = vadd.f32 0.0, %v435
    %v437 = vpop.f32.mrb[0].mxu0
    %v438 = vpop.f32.mrb[0].mxu0
    %439 = vdwg.mxu0
    %440 = vset.pattern.permute.xlu0 3
    %441 = vperm.xlu0 %440, %v136
    %v442 = vpop.permute.xlu0 %441
    %vm443 = vcmp.eq.s32.totalorder %v442, 1
    %446 = vrot.lane.b32.xlu0 %v434, 32
    %v447 = vpop.permute.xlu0 %446
    %448 = vrot.lane.b32.xlu0 %v436, 32
    %v449 = vpop.permute.xlu0 %448
    %v450 = vsel %vm91, %v447, %v449
    %v452 = vsel %vm443, %v434, %v450
    %v453 = vsel %vm443, %v58, %v154
    %v454 = vadd.f32 %v452, %v453
    %v455 = vadd.f32 %v391, %v454
    %v456 = vxor.u32 %v455, 2147483648
    %v457 = vmul.f32 %v456, 1.442695
    %v458 = vpow.pop %v457
    %v459 = vadd.f32 %v458, 1.0
    %v460 = vrcp.pop %v459
    %v461 = vmul.f32 1.0, %v460
    %463 = vrot.lane.b32.xlu0 %v454, 64
    %v464 = vpop.permute.xlu0 %463
    %v466 = vmul.f32 %v461, %v464
    %468 = vrot.lane.b32.xlu0 %v466, 64
    %v469 = vpop.permute.xlu0 %468
    %v471 = vadd.f32 %v391, %v469
    %v472 = vtanh.pop %v471
    %v473 = vsub.f32 1.0, %v461
    %475 = vrot.lane.b32.xlu0 %v472, 96
    %v476 = vpop.permute.xlu0 %475
    %v478 = vmul.f32 %v473, %v476
    %v479 = vmul.f32 %v461, %v388
    %v480 = vadd.f32 %v478, %v479
    %s481 = sadd.s32 %s66, 3
    %p482 = scmp.lt.s32.totalorder %s481, 4
    %s483 = scalar_select %p482, 1, 0
    %v484 = vstv %s483
    %vm485 = vcmp.eq.s32.totalorder %v484, 1
    %v486 = vsel %vm485, %v480, %v388
    %s487 = scalar_lea.vmem %s0, 16
    %v488 = vld [vmem:[%s487] sm:$0xf]
    %v489 = vunpack.c.l.bf16 %v488
    %v490 = vpack.c.bf16 %v486, %v486
    %492 = vrot.lane.b32.xlu0 %v490, 96
    %v493 = vpop.permute.xlu0 %492
    %v495 = vsel %vm91, %v493, 0
    %497 = vmatprep.subr.bf16.mxu0 %v84
    %498 = vmatpush1.bf16.msra.mxu0 %v83
    %499 = vmatprep.subr.bf16.mxu0 %v86
    %500 = vmatpush1.bf16.msra.mxu0 %v85
    %501 = vmatprep.subr.bf16.mxu0 0
    %502 = vmatpush1.bf16.msra.mxu0 0
    %503 = vmatprep.subr.bf16.mxu0 0
    %504 = vmatpush1.bf16.msra.mxu0 0
    %505 = vmatprep.subr.bf16.mxu0 0
    %506 = vmatpush1.bf16.msra.mxu0 0
    %507 = vmatprep.subr.bf16.mxu0 0
    %508 = vmatpush1.bf16.msra.mxu0 0
    %509 = vmatprep.subr.bf16.mxu0 0
    %510 = vmatpush1.bf16.msra.mxu0 0
    %511 = vmatprep.subr.bf16.mxu0 0
    %512 = vmatpush1.bf16.msra.mxu0 0
    %513 = vmatprep.subr.bf16.mxu0 0
    %514 = vmatpush1.bf16.msra.mxu0 0
    %515 = vmatprep.subr.bf16.mxu0 0
    %516 = vmatpush1.bf16.msra.mxu0 0
    %517 = vmatprep.subr.bf16.mxu0 0
    %518 = vmatpush1.bf16.msra.mxu0 0
    %519 = vmatprep.subr.bf16.mxu0 0
    %520 = vmatpush1.bf16.msra.mxu0 0
    %521 = vmatprep.subr.bf16.mxu0 0
    %522 = vmatpush1.bf16.msra.mxu0 0
    %523 = vmatprep.subr.bf16.mxu0 0
    %524 = vmatpush1.bf16.msra.mxu0 0
    %525 = vmatprep.subr.bf16.mxu0 0
    %526 = vmatpush1.bf16.msra.mxu0 0
    %527 = vmatprep.subr.bf16.mxu0 0
    %528 = vmatpush1.bf16.msra.mxu0 0
    %529 = vmatprep.mubr.bf16.mxu0 0
    %530 = vmatmul.mubr.bf16.gmra.mrb[0].mxu0 %v495
    %v531 = vpop.f32.mrb[0].mxu0
    %v532 = vadd.f32 0.0, %v531
    %v533 = vpop.f32.mrb[0].mxu0
    %v534 = vadd.f32 0.0, %v533
    %v535 = vpop.f32.mrb[0].mxu0
    %v536 = vpop.f32.mrb[0].mxu0
    %537 = vdwg.mxu0
    %538 = vset.pattern.permute.xlu0 4
    %539 = vperm.xlu0 %538, %v136
    %v540 = vpop.permute.xlu0 %539
    %vm541 = vcmp.eq.s32.totalorder %v540, 1
    %544 = vrot.lane.b32.xlu0 %v532, 32
    %v545 = vpop.permute.xlu0 %544
    %546 = vrot.lane.b32.xlu0 %v534, 32
    %v547 = vpop.permute.xlu0 %546
    %v548 = vsel %vm91, %v545, %v547
    %v550 = vsel %vm541, %v532, %v548
    %v551 = vsel %vm541, %v58, %v154
    %v552 = vadd.f32 %v550, %v551
    %v553 = vadd.f32 %v489, %v552
    %v554 = vxor.u32 %v553, 2147483648
    %v555 = vmul.f32 %v554, 1.442695
    %v556 = vpow.pop %v555
    %v557 = vadd.f32 %v556, 1.0
    %v558 = vrcp.pop %v557
    %v559 = vmul.f32 1.0, %v558
    %561 = vrot.lane.b32.xlu0 %v552, 64
    %v562 = vpop.permute.xlu0 %561
    %v564 = vmul.f32 %v559, %v562
    %566 = vrot.lane.b32.xlu0 %v564, 64
    %v567 = vpop.permute.xlu0 %566
    %v569 = vadd.f32 %v489, %v567
    %v570 = vtanh.pop %v569
    %v571 = vsub.f32 1.0, %v559
    %573 = vrot.lane.b32.xlu0 %v570, 96
    %v574 = vpop.permute.xlu0 %573
    %v576 = vmul.f32 %v571, %v574
    %v577 = vmul.f32 %v559, %v486
    %v578 = vadd.f32 %v576, %v577
    %s579 = sadd.s32 %s66, 4
    %p580 = scmp.lt.s32.totalorder %s579, 4
    %s581 = scalar_select %p580, 1, 0
    %v582 = vstv %s581
    %vm583 = vcmp.eq.s32.totalorder %v582, 1
    %v584 = vsel %vm583, %v578, %v486
    %s585 = scalar_lea.vmem %s0, 20
    %v586 = vld [vmem:[%s585] sm:$0xf]
    %v587 = vunpack.c.l.bf16 %v586
    %v588 = vpack.c.bf16 %v584, %v584
    %590 = vrot.lane.b32.xlu0 %v588, 96
    %v591 = vpop.permute.xlu0 %590
    %v593 = vsel %vm91, %v591, 0
    %595 = vmatprep.subr.bf16.mxu0 %v84
    %596 = vmatpush1.bf16.msra.mxu0 %v83
    %597 = vmatprep.subr.bf16.mxu0 %v86
    %598 = vmatpush1.bf16.msra.mxu0 %v85
    %599 = vmatprep.subr.bf16.mxu0 0
    %600 = vmatpush1.bf16.msra.mxu0 0
    %601 = vmatprep.subr.bf16.mxu0 0
    %602 = vmatpush1.bf16.msra.mxu0 0
    %603 = vmatprep.subr.bf16.mxu0 0
    %604 = vmatpush1.bf16.msra.mxu0 0
    %605 = vmatprep.subr.bf16.mxu0 0
    %606 = vmatpush1.bf16.msra.mxu0 0
    %607 = vmatprep.subr.bf16.mxu0 0
    %608 = vmatpush1.bf16.msra.mxu0 0
    %609 = vmatprep.subr.bf16.mxu0 0
    %610 = vmatpush1.bf16.msra.mxu0 0
    %611 = vmatprep.subr.bf16.mxu0 0
    %612 = vmatpush1.bf16.msra.mxu0 0
    %613 = vmatprep.subr.bf16.mxu0 0
    %614 = vmatpush1.bf16.msra.mxu0 0
    %615 = vmatprep.subr.bf16.mxu0 0
    %616 = vmatpush1.bf16.msra.mxu0 0
    %617 = vmatprep.subr.bf16.mxu0 0
    %618 = vmatpush1.bf16.msra.mxu0 0
    %619 = vmatprep.subr.bf16.mxu0 0
    %620 = vmatpush1.bf16.msra.mxu0 0
    %621 = vmatprep.subr.bf16.mxu0 0
    %622 = vmatpush1.bf16.msra.mxu0 0
    %623 = vmatprep.subr.bf16.mxu0 0
    %624 = vmatpush1.bf16.msra.mxu0 0
    %625 = vmatprep.subr.bf16.mxu0 0
    %626 = vmatpush1.bf16.msra.mxu0 0
    %627 = vmatprep.mubr.bf16.mxu0 0
    %628 = vmatmul.mubr.bf16.gmra.mrb[0].mxu0 %v593
    %v629 = vpop.f32.mrb[0].mxu0
    %v630 = vadd.f32 0.0, %v629
    %v631 = vpop.f32.mrb[0].mxu0
    %v632 = vadd.f32 0.0, %v631
    %v633 = vpop.f32.mrb[0].mxu0
    %v634 = vpop.f32.mrb[0].mxu0
    %635 = vdwg.mxu0
    %636 = vset.pattern.permute.xlu0 5
    %637 = vperm.xlu0 %636, %v136
    %v638 = vpop.permute.xlu0 %637
    %vm639 = vcmp.eq.s32.totalorder %v638, 1
    %642 = vrot.lane.b32.xlu0 %v630, 32
    %v643 = vpop.permute.xlu0 %642
    %644 = vrot.lane.b32.xlu0 %v632, 32
    %v645 = vpop.permute.xlu0 %644
    %v646 = vsel %vm91, %v643, %v645
    %v648 = vsel %vm639, %v630, %v646
    %v649 = vsel %vm639, %v58, %v154
    %v650 = vadd.f32 %v648, %v649
    %v651 = vadd.f32 %v587, %v650
    %v652 = vxor.u32 %v651, 2147483648
    %v653 = vmul.f32 %v652, 1.442695
    %v654 = vpow.pop %v653
    %v655 = vadd.f32 %v654, 1.0
    %v656 = vrcp.pop %v655
    %v657 = vmul.f32 1.0, %v656
    %659 = vrot.lane.b32.xlu0 %v650, 64
    %v660 = vpop.permute.xlu0 %659
    %v662 = vmul.f32 %v657, %v660
    %664 = vrot.lane.b32.xlu0 %v662, 64
    %v665 = vpop.permute.xlu0 %664
    %v667 = vadd.f32 %v587, %v665
    %v668 = vtanh.pop %v667
    %v669 = vsub.f32 1.0, %v657
    %671 = vrot.lane.b32.xlu0 %v668, 96
    %v672 = vpop.permute.xlu0 %671
    %v674 = vmul.f32 %v669, %v672
    %v675 = vmul.f32 %v657, %v584
    %v676 = vadd.f32 %v674, %v675
    %s677 = sadd.s32 %s66, 5
    %p678 = scmp.lt.s32.totalorder %s677, 4
    %s679 = scalar_select %p678, 1, 0
    %v680 = vstv %s679
    %vm681 = vcmp.eq.s32.totalorder %v680, 1
    %v682 = vsel %vm681, %v676, %v584
    %s683 = scalar_lea.vmem %s0, 24
    %v684 = vld [vmem:[%s683] sm:$0xf]
    %v685 = vunpack.c.l.bf16 %v684
    %v686 = vpack.c.bf16 %v682, %v682
    %688 = vrot.lane.b32.xlu0 %v686, 96
    %v689 = vpop.permute.xlu0 %688
    %v691 = vsel %vm91, %v689, 0
    %693 = vmatprep.subr.bf16.mxu0 %v84
    %694 = vmatpush1.bf16.msra.mxu0 %v83
    %695 = vmatprep.subr.bf16.mxu0 %v86
    %696 = vmatpush1.bf16.msra.mxu0 %v85
    %697 = vmatprep.subr.bf16.mxu0 0
    %698 = vmatpush1.bf16.msra.mxu0 0
    %699 = vmatprep.subr.bf16.mxu0 0
    %700 = vmatpush1.bf16.msra.mxu0 0
    %701 = vmatprep.subr.bf16.mxu0 0
    %702 = vmatpush1.bf16.msra.mxu0 0
    %703 = vmatprep.subr.bf16.mxu0 0
    %704 = vmatpush1.bf16.msra.mxu0 0
    %705 = vmatprep.subr.bf16.mxu0 0
    %706 = vmatpush1.bf16.msra.mxu0 0
    %707 = vmatprep.subr.bf16.mxu0 0
    %708 = vmatpush1.bf16.msra.mxu0 0
    %709 = vmatprep.subr.bf16.mxu0 0
    %710 = vmatpush1.bf16.msra.mxu0 0
    %711 = vmatprep.subr.bf16.mxu0 0
    %712 = vmatpush1.bf16.msra.mxu0 0
    %713 = vmatprep.subr.bf16.mxu0 0
    %714 = vmatpush1.bf16.msra.mxu0 0
    %715 = vmatprep.subr.bf16.mxu0 0
    %716 = vmatpush1.bf16.msra.mxu0 0
    %717 = vmatprep.subr.bf16.mxu0 0
    %718 = vmatpush1.bf16.msra.mxu0 0
    %719 = vmatprep.subr.bf16.mxu0 0
    %720 = vmatpush1.bf16.msra.mxu0 0
    %721 = vmatprep.subr.bf16.mxu0 0
    %722 = vmatpush1.bf16.msra.mxu0 0
    %723 = vmatprep.subr.bf16.mxu0 0
    %724 = vmatpush1.bf16.msra.mxu0 0
    %725 = vmatprep.mubr.bf16.mxu0 0
    %726 = vmatmul.mubr.bf16.gmra.mrb[0].mxu0 %v691
    %v727 = vpop.f32.mrb[0].mxu0
    %v728 = vadd.f32 0.0, %v727
    %v729 = vpop.f32.mrb[0].mxu0
    %v730 = vadd.f32 0.0, %v729
    %v731 = vpop.f32.mrb[0].mxu0
    %v732 = vpop.f32.mrb[0].mxu0
    %733 = vdwg.mxu0
    %734 = vset.pattern.permute.xlu0 6
    %735 = vperm.xlu0 %734, %v136
    %v736 = vpop.permute.xlu0 %735
    %vm737 = vcmp.eq.s32.totalorder %v736, 1
    %740 = vrot.lane.b32.xlu0 %v728, 32
    %v741 = vpop.permute.xlu0 %740
    %742 = vrot.lane.b32.xlu0 %v730, 32
    %v743 = vpop.permute.xlu0 %742
    %v744 = vsel %vm91, %v741, %v743
    %v746 = vsel %vm737, %v728, %v744
    %v747 = vsel %vm737, %v58, %v154
    %v748 = vadd.f32 %v746, %v747
    %v749 = vadd.f32 %v685, %v748
    %v750 = vxor.u32 %v749, 2147483648
    %v751 = vmul.f32 %v750, 1.442695
    %v752 = vpow.pop %v751
    %v753 = vadd.f32 %v752, 1.0
    %v754 = vrcp.pop %v753
    %v755 = vmul.f32 1.0, %v754
    %757 = vrot.lane.b32.xlu0 %v748, 64
    %v758 = vpop.permute.xlu0 %757
    %v760 = vmul.f32 %v755, %v758
    %762 = vrot.lane.b32.xlu0 %v760, 64
    %v763 = vpop.permute.xlu0 %762
    %v765 = vadd.f32 %v685, %v763
    %v766 = vtanh.pop %v765
    %v767 = vsub.f32 1.0, %v755
    %769 = vrot.lane.b32.xlu0 %v766, 96
    %v770 = vpop.permute.xlu0 %769
    %v772 = vmul.f32 %v767, %v770
    %v773 = vmul.f32 %v755, %v682
    %v774 = vadd.f32 %v772, %v773
    %s775 = sadd.s32 %s66, 6
    %p776 = scmp.lt.s32.totalorder %s775, 4
    %s777 = scalar_select %p776, 1, 0
    %v778 = vstv %s777
    %vm779 = vcmp.eq.s32.totalorder %v778, 1
    %v780 = vsel %vm779, %v774, %v682
    %s781 = scalar_lea.vmem %s0, 28
    %v782 = vld [vmem:[%s781] sm:$0xf]
    %v783 = vunpack.c.l.bf16 %v782
    %v784 = vpack.c.bf16 %v780, %v780
    %786 = vrot.lane.b32.xlu0 %v784, 96
    %v787 = vpop.permute.xlu0 %786
    %v789 = vsel %vm91, %v787, 0
    %791 = vmatprep.subr.bf16.mxu0 %v84
    %792 = vmatpush1.bf16.msra.mxu0 %v83
    %793 = vmatprep.subr.bf16.mxu0 %v86
    %794 = vmatpush1.bf16.msra.mxu0 %v85
    %795 = vmatprep.subr.bf16.mxu0 0
    %796 = vmatpush1.bf16.msra.mxu0 0
    %797 = vmatprep.subr.bf16.mxu0 0
    %798 = vmatpush1.bf16.msra.mxu0 0
    %799 = vmatprep.subr.bf16.mxu0 0
    %800 = vmatpush1.bf16.msra.mxu0 0
    %801 = vmatprep.subr.bf16.mxu0 0
    %802 = vmatpush1.bf16.msra.mxu0 0
    %803 = vmatprep.subr.bf16.mxu0 0
    %804 = vmatpush1.bf16.msra.mxu0 0
    %805 = vmatprep.subr.bf16.mxu0 0
    %806 = vmatpush1.bf16.msra.mxu0 0
    %807 = vmatprep.subr.bf16.mxu0 0
    %808 = vmatpush1.bf16.msra.mxu0 0
    %809 = vmatprep.subr.bf16.mxu0 0
    %810 = vmatpush1.bf16.msra.mxu0 0
    %811 = vmatprep.subr.bf16.mxu0 0
    %812 = vmatpush1.bf16.msra.mxu0 0
    %813 = vmatprep.subr.bf16.mxu0 0
    %814 = vmatpush1.bf16.msra.mxu0 0
    %815 = vmatprep.subr.bf16.mxu0 0
    %816 = vmatpush1.bf16.msra.mxu0 0
    %817 = vmatprep.subr.bf16.mxu0 0
    %818 = vmatpush1.bf16.msra.mxu0 0
    %819 = vmatprep.subr.bf16.mxu0 0
    %820 = vmatpush1.bf16.msra.mxu0 0
    %821 = vmatprep.subr.bf16.mxu0 0
    %822 = vmatpush1.bf16.msra.mxu0 0
    %823 = vmatprep.mubr.bf16.mxu0 0
    %824 = vmatmul.mubr.bf16.gmra.mrb[0].mxu0 %v789
    %v825 = vpop.f32.mrb[0].mxu0
    %v826 = vadd.f32 0.0, %v825
    %v827 = vpop.f32.mrb[0].mxu0
    %v828 = vadd.f32 0.0, %v827
    %v829 = vpop.f32.mrb[0].mxu0
    %v830 = vpop.f32.mrb[0].mxu0
    %831 = vdwg.mxu0
    %832 = vset.pattern.permute.xlu0 7
    %833 = vperm.xlu0 %832, %v136
    %v834 = vpop.permute.xlu0 %833
    %vm835 = vcmp.eq.s32.totalorder %v834, 1
    %838 = vrot.lane.b32.xlu0 %v826, 32
    %v839 = vpop.permute.xlu0 %838
    %840 = vrot.lane.b32.xlu0 %v828, 32
    %v841 = vpop.permute.xlu0 %840
    %v842 = vsel %vm91, %v839, %v841
    %v844 = vsel %vm835, %v826, %v842
    %v845 = vsel %vm835, %v58, %v154
    %v846 = vadd.f32 %v844, %v845
    %v847 = vadd.f32 %v783, %v846
    %v848 = vxor.u32 %v847, 2147483648
    %v849 = vmul.f32 %v848, 1.442695
    %v850 = vpow.pop %v849
    %v851 = vadd.f32 %v850, 1.0
    %v852 = vrcp.pop %v851
    %v853 = vmul.f32 1.0, %v852
    %855 = vrot.lane.b32.xlu0 %v846, 64
    %v856 = vpop.permute.xlu0 %855
    %v858 = vmul.f32 %v853, %v856
    %860 = vrot.lane.b32.xlu0 %v858, 64
    %v861 = vpop.permute.xlu0 %860
    %v863 = vadd.f32 %v783, %v861
    %v864 = vtanh.pop %v863
    %v865 = vsub.f32 1.0, %v853
    %867 = vrot.lane.b32.xlu0 %v864, 96
    %v868 = vpop.permute.xlu0 %867
    %v870 = vmul.f32 %v865, %v868
    %v871 = vmul.f32 %v853, %v780
    %v872 = vadd.f32 %v870, %v871
    %s873 = sadd.s32 %s66, 7
    %p874 = scmp.lt.s32.totalorder %s873, 4
    %s875 = scalar_select %p874, 1, 0
    %v876 = vstv %s875
    %vm877 = vcmp.eq.s32.totalorder %v876, 1
    %v878 = vsel %vm877, %v872, %v780
    %880 = vrot.lane.b32.xlu0 %v878, 96
    %v881 = vpop.permute.xlu0 %880
    %883 = vst.msk [vmem:[#allocation2] sm:$0xff] %vm91, %v881
    // Predicated region
    $region46: #{vrnn_forward.5} parent=1 // pred_check
      %p884 = pneg %p42
    $region47: #{vrnn_forward.5} parent=1 // pred_check_branch
      %886 = sbr.rel (%p884) target = $region49
    $region48: #{vrnn_forward.5} parent=1 // pred_region
      %v887 = vpack.c.bf16 %v878, %v878
      %v888 = vld [vmem:[%s5] sm:$0xf]
      %v889 = vld [vmem:[%s5 + $0x4] sm:$0xf]
      %v890 = vld [vmem:[%s5 + $0x8] sm:$0xf]
      %v891 = vld [vmem:[%s5 + $0xc] sm:$0xf]
      %v892 = vld [vmem:[%s6] sm:$0x1]
      %v894 = vlaneseq
      %v895 = vshrl.u32 %v894, 7
      %v896 = vsub.s32 0, %v895
      %v897 = vrot.slane %v892, %v896
      %900 = vrot.lane.b32.xlu0 %v887, 96
      %v901 = vpop.permute.xlu0 %900
      %v906 = vunpack.c.l.b16 %v888
      %v907 = vunpack.c.l.b16 %v889
      %v908 = vunpack.c.l.b16 %v890
      %v909 = vunpack.c.l.b16 %v891
      %v910 = vpack.c.b16 %v907, %v906
      %v911 = vpack.c.b16 %v909, %v908
      %v915 = vsel %vm91, %v901, 0
      %917 = vmatprep.subr.bf16.mxu0 0
      %918 = vmatpush1.bf16.msra.mxu0 %v910
      %919 = vmatprep.subr.bf16.mxu0 0
      %920 = vmatpush1.bf16.msra.mxu0 %v911
      %921 = vmatprep.subr.bf16.mxu0 0
      %922 = vmatpush1.bf16.msra.mxu0 0
      %923 = vmatprep.subr.bf16.mxu0 0
      %924 = vmatpush1.bf16.msra.mxu0 0
      %925 = vmatprep.subr.bf16.mxu0 0
      %926 = vmatpush1.bf16.msra.mxu0 0
      %927 = vmatprep.subr.bf16.mxu0 0
      %928 = vmatpush1.bf16.msra.mxu0 0
      %929 = vmatprep.subr.bf16.mxu0 0
      %930 = vmatpush1.bf16.msra.mxu0 0
      %931 = vmatprep.subr.bf16.mxu0 0
      %932 = vmatpush1.bf16.msra.mxu0 0
      %933 = vmatprep.subr.bf16.mxu0 0
      %934 = vmatpush1.bf16.msra.mxu0 0
      %935 = vmatprep.subr.bf16.mxu0 0
      %936 = vmatpush1.bf16.msra.mxu0 0
      %937 = vmatprep.subr.bf16.mxu0 0
      %938 = vmatpush1.bf16.msra.mxu0 0
      %939 = vmatprep.subr.bf16.mxu0 0
      %940 = vmatpush1.bf16.msra.mxu0 0
      %941 = vmatprep.subr.bf16.mxu0 0
      %942 = vmatpush1.bf16.msra.mxu0 0
      %943 = vmatprep.subr.bf16.mxu0 0
      %944 = vmatpush1.bf16.msra.mxu0 0
      %945 = vmatprep.subr.bf16.mxu0 0
      %946 = vmatpush1.bf16.msra.mxu0 0
      %947 = vmatprep.subr.bf16.mxu0 0
      %948 = vmatpush1.bf16.msra.mxu0 0
      %949 = vmatprep.mubr.bf16.mxu0 0
      %950 = vmatmul.mubr.bf16.gmra.mrb[0].mxu0 %v915
      %v951 = vpop.f32.mrb[0].mxu0
      %v952 = vadd.f32 %v897, %v951
      %v953 = vpop.f32.mrb[0].mxu0
      %v954 = vpop.f32.mrb[0].mxu0
      %v955 = vpop.f32.mrb[0].mxu0
      %956 = vdwg.mxu0
      %v957 = vmul.f32 %v952, 0.5
      %v958 = vmul.f32 %v957, 1.442695
      %v959 = vpow.pop %v958
      %v960 = vld [vmem:[%s9] sm:$0xff]
      %962 = vrot.lane.b32.xlu0 %v959, 112
      %v963 = vpop.permute.xlu0 %962
      %v965 = vmul.f32 %v960, %v963
      %v966 = vadd.f32 %v965, %v952
      %v967 = vpack.c.bf16 %v966, %v966
      %v968 = vld [vmem:[%s7] sm:$0xf]
      %v969 = vld [vmem:[%s7 + $0x4] sm:$0xf]
      %v970 = vld [vmem:[%s8] sm:$0x1]
      %v972 = vlaneseq
      %v973 = vshrl.u32 %v972, 7
      %v974 = vsub.s32 0, %v973
      %v975 = vrot.slane %v970, %v974
      %v979 = vunpack.c.l.b16 %v968
      %v980 = vunpack.c.l.b16 %v969
      %v981 = vpack.c.b16 %v980, %v979
      %vm983 = vcmask 130048
      %v985 = vsel %vm983, %v967, 0
      %987 = vmatprep.subr.bf16.mxu0 0
      %988 = vmatpush1.bf16.msra.mxu0 %v981
      %989 = vmatprep.subr.bf16.mxu0 0
      %990 = vmatpush1.bf16.msra.mxu0 0
      %991 = vmatprep.subr.bf16.mxu0 0
      %992 = vmatpush1.bf16.msra.mxu0 0
      %993 = vmatprep.subr.bf16.mxu0 0
      %994 = vmatpush1.bf16.msra.mxu0 0
      %995 = vmatprep.subr.bf16.mxu0 0
      %996 = vmatpush1.bf16.msra.mxu0 0
      %997 = vmatprep.subr.bf16.mxu0 0
      %998 = vmatpush1.bf16.msra.mxu0 0
      %999 = vmatprep.subr.bf16.mxu0 0
      %1000 = vmatpush1.bf16.msra.mxu0 0
      %1001 = vmatprep.subr.bf16.mxu0 0
      %1002 = vmatpush1.bf16.msra.mxu0 0
      %1003 = vmatprep.subr.bf16.mxu0 0
      %1004 = vmatpush1.bf16.msra.mxu0 0
      %1005 = vmatprep.subr.bf16.mxu0 0
      %1006 = vmatpush1.bf16.msra.mxu0 0
      %1007 = vmatprep.subr.bf16.mxu0 0
      %1008 = vmatpush1.bf16.msra.mxu0 0
      %1009 = vmatprep.subr.bf16.mxu0 0
      %1010 = vmatpush1.bf16.msra.mxu0 0
      %1011 = vmatprep.subr.bf16.mxu0 0
      %1012 = vmatpush1.bf16.msra.mxu0 0
      %1013 = vmatprep.subr.bf16.mxu0 0
      %1014 = vmatpush1.bf16.msra.mxu0 0
      %1015 = vmatprep.subr.bf16.mxu0 0
      %1016 = vmatpush1.bf16.msra.mxu0 0
      %1017 = vmatprep.subr.bf16.mxu0 0
      %1018 = vmatpush1.bf16.msra.mxu0 0
      %1019 = vmatprep.mubr.bf16.mxu0 0
      %1020 = vmatmul.mubr.bf16.gmra.mrb[0].mxu0 %v985
      %v1021 = vpop.f32.mrb[0].mxu0
      %v1022 = vadd.f32 %v975, %v1021
      %v1023 = vpop.f32.mrb[0].mxu0
      %v1024 = vpop.f32.mrb[0].mxu0
      %v1025 = vpop.f32.mrb[0].mxu0
      %1026 = vdwg.mxu0
      %1027 = vst.msk [vmem:[#allocation3] sm:$0xff] %vm983, %v952
      %1029 = vrot.lane.b32.xlu0 %v952, 112
      %v1030 = vpop.permute.xlu0 %1029
      %1032 = vst.msk [vmem:[#allocation5] sm:$0xff] %vm983, %v1030
      %1033 = vst.msk [vmem:[#allocation7] sm:$0xff] %vm983, %v966
      %1034 = vst.msk [vmem:[%s13] sm:$0xff] %vm91, %v1022
    $region49: #{vrnn_forward.5} parent=1 // pred_fallthru
      _
    // Predicated region
    $region50: #{vrnn_forward.5} parent=1 // pred_check
      _
    $region51: #{vrnn_forward.5} parent=1 // pred_check_branch
      %1036 = sbr.rel (0) target = $region53
    $region52: #{vrnn_forward.5} parent=1 // pred_region
      %s1038 = ssub.s32 128, 128
      %1039 = vsyncadd [#allocation4], %s1038
      %s1041 = sshll.u32 [#allocation3], 4
      %s1042 = int_to_ptr.vmem [resolvable:$true] %s1041
      %1044 = dma.vmem_to_hbm [thread:$0]  %s1042, 128, %s10, [#allocation4]
    $region53: #{vrnn_forward.5} parent=1 // pred_fallthru
      _
    // Predicated region
    $region54: #{vrnn_forward.5} parent=1 // pred_check
      _
    $region55: #{vrnn_forward.5} parent=1 // pred_check_branch
      %1046 = sbr.rel (0) target = $region57
    $region56: #{vrnn_forward.5} parent=1 // pred_region
      %s1048 = ssub.s32 128, 128
      %1049 = vsyncadd [#allocation6], %s1048
      %s1051 = sshll.u32 [#allocation5], 4
      %s1052 = int_to_ptr.vmem [resolvable:$true] %s1051
      %1054 = dma.vmem_to_hbm [thread:$0]  %s1052, 128, %s11, [#allocation6]
    $region57: #{vrnn_forward.5} parent=1 // pred_fallthru
      _
    // Predicated region
    $region58: #{vrnn_forward.5} parent=1 // pred_check
      _
    $region59: #{vrnn_forward.5} parent=1 // pred_check_branch
      %1056 = sbr.rel (0) target = $region61
    $region60: #{vrnn_forward.5} parent=1 // pred_region
      %s1058 = ssub.s32 128, 128
      %1059 = vsyncadd [#allocation6], %s1058
      %s1061 = sshll.u32 [#allocation7], 4
      %s1062 = int_to_ptr.vmem [resolvable:$true] %s1061
      %1064 = dma.vmem_to_hbm [thread:$0]  %s1062, 128, %s12, [#allocation6]
    $region61: #{vrnn_forward.5} parent=1 // pred_fallthru
      _
    // Predicated region
    $region62: #{vrnn_forward.5} parent=1 // pred_check
      _
    $region63: #{vrnn_forward.5} parent=1 // pred_check_branch
      %1066 = sbr.rel (0) target = $region65
    $region64: #{vrnn_forward.5} parent=1 // pred_region
      _
    $region65: #{vrnn_forward.5} parent=1 // pred_fallthru
      _
    // Predicated region
    $region66: #{vrnn_forward.5} parent=1 // pred_check
      _
    $region67: #{vrnn_forward.5} parent=1 // pred_check_branch
      %1068 = sbr.rel (0) target = $region69
    $region68: #{vrnn_forward.5} parent=1 // pred_region
      %1069 = dma.done [#allocation4], 128
    $region69: #{vrnn_forward.5} parent=1 // pred_fallthru
      _
    // Predicated region
    $region70: #{vrnn_forward.5} parent=1 // pred_check
      _
    $region71: #{vrnn_forward.5} parent=1 // pred_check_branch
      %1071 = sbr.rel (0) target = $region73
    $region72: #{vrnn_forward.5} parent=1 // pred_region
      %1072 = dma.done [#allocation6], 128
    $region73: #{vrnn_forward.5} parent=1 // pred_fallthru
      _
    // Predicated region
    $region74: #{vrnn_forward.5} parent=1 // pred_check
      _
    $region75: #{vrnn_forward.5} parent=1 // pred_check_branch
      %1074 = sbr.rel (0) target = $region77
    $region76: #{vrnn_forward.5} parent=1 // pred_region
      %1075 = dma.done [#allocation6], 128
    $region77: #{vrnn_forward.5} parent=1 // pred_fallthru
      _
    // Predicated region
    $region78: #{vrnn_forward.5} parent=1 // pred_check
      _
    $region79: #{vrnn_forward.5} parent=1 // pred_check_branch
      %1077 = sbr.rel (0) target = $region81
    $region80: #{vrnn_forward.5} parent=1 // pred_region
      _
    $region81: #{vrnn_forward.5} parent=1 // pred_fallthru
      _
    %1078 = vsyncpa [#allocation4], 1
    %1079 = vsyncpa [#allocation6], 1

</llo_original>
